<compile_context>
chip_gen: v7x
topology: tpu7x:2x2x1
jax: 0.10.0
libtpu: 0.0.40
codegen_flags: <defaults>
</compile_context>

<pallas_src>
import functools

import jax
import jax.numpy as jnp
from jax import lax
from jax.experimental import pallas as pl
from jax.experimental.pallas import tpu as pltpu


# ----------------------------- model config ---------------------------------
T = 16             # num tokens (2 query tiles -> exercises the parallel grid)
H = 128            # hidden_size (lane-dense outputs)
NH = 4             # num attention heads
NKV = 2            # num key/value heads
G = NH // NKV      # GQA group size
D = 32             # head_dim
I = 256            # intermediate_size
EPS = 1e-6         # rms_norm_eps
ROPE_THETA = 1e6   # rope_theta
TQ = 8             # query-token tile (grid parallel axis)

QS = NH * D        # q_size  = 128
KS = NKV * D       # kv_size = 64


# ----------------------------- in-kernel helpers -----------------------------
def _rms_norm(x, w, eps):
    # x: (..., d), w broadcastable to x; reduction kept in f32.
    var = jnp.mean(jnp.square(x), axis=-1, keepdims=True)
    return x * lax.rsqrt(var + eps) * w


def _rotate_half(x):
    d2 = x.shape[-1] // 2
    return jnp.concatenate([x[..., d2:], x[..., :d2]], axis=-1)


# ----------------------------- fused layer kernel ----------------------------
def _qwen3_layer_kernel(*refs, has_residual, num_heads, num_kv_heads,
                        head_dim, inter, eps, tq):
    if has_residual:
        (x_ref, res_ref, ln1_ref, wq_ref, wkv_ref, qn_ref, kn_ref,
         cos_ref, sin_ref, wo_ref, ln2_ref, wgu_ref, wdn_ref,
         out_ref, res_out_ref) = refs
    else:
        (x_ref, ln1_ref, wq_ref, wkv_ref, qn_ref, kn_ref,
         cos_ref, sin_ref, wo_ref, ln2_ref, wgu_ref, wdn_ref,
         out_ref, res_out_ref) = refs
        res_ref = None

    group = num_heads // num_kv_heads
    kv_size = num_kv_heads * head_dim
    t_total = x_ref.shape[0]
    row0 = pl.multiple_of(pl.program_id(0) * tq, tq)

    ln1 = ln1_ref[...]                                          # (1, H) f32

    # ---- residual add + input RMSNorm ---------------------------------------
    # Full sequence feeds K/V (causal attention); the query tile's rows feed Q
    # and the rest of the layer.
    x_full = x_ref[...]
    h1_full = x_full + res_ref[...] if has_residual else x_full
    hn1_full_b = _rms_norm(h1_full, ln1, eps).astype(jnp.bfloat16)

    x_tile = x_ref[pl.ds(row0, tq), :]
    h1_tile = (x_tile + res_ref[pl.ds(row0, tq), :]) if has_residual else x_tile
    hn1_tile_b = _rms_norm(h1_tile, ln1, eps).astype(jnp.bfloat16)

    # ---- QKV projections (bf16 operands, f32 accumulation) ------------------
    q = jnp.dot(hn1_tile_b, wq_ref[...],
                preferred_element_type=jnp.float32)             # (tq, QS)
    kv = jnp.dot(hn1_full_b, wkv_ref[...],
                 preferred_element_type=jnp.float32)            # (T, 2*KS)

    qn = qn_ref[...].reshape(1, 1, head_dim)   # already includes D**-0.5
    kn = kn_ref[...].reshape(1, 1, head_dim)
    cos_f = cos_ref[...][:, None, :]                            # (T, 1, D)
    sin_f = sin_ref[...][:, None, :]
    cos_q = cos_ref[pl.ds(row0, tq), :][:, None, :]             # (tq, 1, D)
    sin_q = sin_ref[pl.ds(row0, tq), :][:, None, :]

    # ---- per-head Q/K RMSNorm + RoPE (batched over heads, no loops) ---------
    qh = q.reshape(tq, num_heads, head_dim)
    qh = _rms_norm(qh, qn, eps)
    qh = qh * cos_q + _rotate_half(qh) * sin_q

    kh = kv[:, :kv_size].reshape(t_total, num_kv_heads, head_dim)
    vh = kv[:, kv_size:].reshape(t_total, num_kv_heads, head_dim)
    kh = _rms_norm(kh, kn, eps)
    kh = kh * cos_f + _rotate_half(kh) * sin_f

    # GQA: fold the group dim into the query-token dim; K/V stay NKV-sized.
    qg = jnp.transpose(qh, (1, 0, 2)).reshape(num_kv_heads, group * tq,
                                              head_dim)         # (NKV, G*tq, D)
    kg = jnp.transpose(kh, (1, 0, 2))                           # (NKV, T, D)
    vg = jnp.transpose(vh, (1, 0, 2))                           # (NKV, T, D)

    # ---- causal attention (scores / softmax in f32) -------------------------
    s = jnp.einsum('kmd,ksd->kms', qg.astype(jnp.bfloat16),
                   kg.astype(jnp.bfloat16),
                   preferred_element_type=jnp.float32)          # (NKV, G*tq, T)
    m_idx = lax.broadcasted_iota(jnp.int32, (group * tq, t_total), 0)
    s_idx = lax.broadcasted_iota(jnp.int32, (group * tq, t_total), 1)
    causal = (s_idx <= row0 + (m_idx % tq))[None, :, :]
    # Finite mask value is safe: max-subtraction drives masked exps to 0 and
    # causal rows are never fully masked.
    s = jnp.where(causal, s, -1e30)
    mx = jnp.max(s, axis=-1, keepdims=True)
    e = jnp.exp(s - mx)
    p = e / jnp.sum(e, axis=-1, keepdims=True)  # exact recip for validation;
                                                # pl.reciprocal(approx) in prod

    o = jnp.einsum('kms,ksd->kmd', p.astype(jnp.bfloat16),
                   vg.astype(jnp.bfloat16),
                   preferred_element_type=jnp.float32)          # (NKV, G*tq, D)
    o = jnp.transpose(o.reshape(num_heads, tq, head_dim), (1, 0, 2))
    o_flat = o.reshape(tq, num_heads * head_dim)                # (tq, NH*D)

    attn = jnp.dot(o_flat.astype(jnp.bfloat16), wo_ref[...],
                   preferred_element_type=jnp.float32)          # (tq, H)

    # ---- post_attention add + RMSNorm ---------------------------------------
    h2 = attn + h1_tile
    res_out_ref[...] = h2.astype(res_out_ref.dtype)
    hn2_b = _rms_norm(h2, ln2_ref[...], eps).astype(jnp.bfloat16)

    # ---- SwiGLU MLP ----------------------------------------------------------
    gu = jnp.dot(hn2_b, wgu_ref[...],
                 preferred_element_type=jnp.float32)            # (tq, 2*I)
    gate = gu[:, :inter]
    up = gu[:, inter:]
    act = gate * jax.nn.sigmoid(gate) * up                      # SiluAndMul (f32)
    out_ref[...] = jnp.dot(act.astype(jnp.bfloat16), wdn_ref[...],
                           preferred_element_type=jnp.float32
                           ).astype(out_ref.dtype)


# ----------------------------- host-side glue ---------------------------------
def rope_cos_sin(positions, head_dim, theta):
    """Full-width rotate-half tables: cos duplicated, sin signed. (T, D)."""
    inv_freq = 1.0 / (theta ** (jnp.arange(0, head_dim, 2, dtype=jnp.float32)
                                / head_dim))
    freqs = positions.astype(jnp.float32)[:, None] * inv_freq[None, :]
    cos = jnp.cos(freqs)
    sin = jnp.sin(freqs)
    return (jnp.concatenate([cos, cos], axis=-1),
            jnp.concatenate([-sin, sin], axis=-1))


def prepare_params(raw):
    """One-time weight prep: bf16 matmul weights, pre-scaled/reshaped norms."""
    return {
        "input_ln_w": raw["input_ln_w"].reshape(1, H).astype(jnp.float32),
        "post_ln_w": raw["post_ln_w"].reshape(1, H).astype(jnp.float32),
        # fold the attention scale into q_norm weight at weight-prep time
        "q_norm_w": (raw["q_norm_w"] * (D ** -0.5)).reshape(1, D).astype(jnp.float32),
        "k_norm_w": raw["k_norm_w"].reshape(1, D).astype(jnp.float32),
        "wq": raw["wqkv"][:, :QS].astype(jnp.bfloat16),
        "wkv": raw["wqkv"][:, QS:].astype(jnp.bfloat16),
        "wo": raw["wo"].astype(jnp.bfloat16),
        "w_gate_up": raw["w_gate_up"].astype(jnp.bfloat16),
        "w_down": raw["w_down"].astype(jnp.bfloat16),
    }


def _full_spec(shape):
    return pl.BlockSpec(shape, lambda i: (0,) * len(shape))


def qwen3_decoder_layer(hidden_states, residual, kparams, rope_tables):
    """Returns (hidden_states, residual) exactly like the PyTorch module."""
    t, h = hidden_states.shape
    assert t % TQ == 0
    cos, sin = rope_tables
    has_residual = residual is not None

    inputs = [hidden_states]
    in_specs = [_full_spec((t, h))]
    if has_residual:
        inputs.append(residual)
        in_specs.append(_full_spec((t, h)))

    weights = [
        kparams["input_ln_w"], kparams["wq"], kparams["wkv"],
        kparams["q_norm_w"], kparams["k_norm_w"], cos, sin,
        kparams["wo"], kparams["post_ln_w"],
        kparams["w_gate_up"], kparams["w_down"],
    ]
    inputs += weights
    in_specs += [_full_spec(w.shape) for w in weights]

    kernel = functools.partial(
        _qwen3_layer_kernel, has_residual=has_residual, num_heads=NH,
        num_kv_heads=NKV, head_dim=D, inter=I, eps=EPS, tq=TQ)

    flops = (2 * t * h * (QS + 2 * KS) + 4 * NH * t * t * D
             + 2 * t * QS * h + 2 * t * h * 2 * I + 2 * t * I * h)
    bytes_accessed = int(sum(x.size * x.dtype.itemsize for x in inputs)
                         + 2 * t * h * 4)
    cost = pl.CostEstimate(flops=int(flops),
                           transcendentals=int(NH * t * t + t * I),
                           bytes_accessed=bytes_accessed)

    out, res_out = pl.pallas_call(
        kernel,
        grid=(t // TQ,),
        out_shape=(jax.ShapeDtypeStruct((t, h), hidden_states.dtype),
                   jax.ShapeDtypeStruct((t, h), hidden_states.dtype)),
        in_specs=in_specs,
        out_specs=(pl.BlockSpec((TQ, h), lambda i: (i, 0)),
                   pl.BlockSpec((TQ, h), lambda i: (i, 0))),
        compiler_params=pltpu.CompilerParams(
            dimension_semantics=("parallel",)),
        cost_estimate=cost,
    )(*inputs)
    return out, res_out


# ----------------------------- pure-JAX reference -----------------------------
def _ref_rms_norm(x, w, eps=EPS):
    var = jnp.mean(x * x, axis=-1, keepdims=True)
    return x * lax.rsqrt(var + eps) * w


def ref_decoder_layer(positions, hidden, residual, raw):
    if residual is None:
        residual_out = hidden
        hx = _ref_rms_norm(hidden, raw["input_ln_w"])
    else:
        residual_out = hidden + residual
        hx = _ref_rms_norm(residual_out, raw["input_ln_w"])

    t = hidden.shape[0]
    qkv = hx @ raw["wqkv"]
    q = qkv[:, :QS].reshape(t, NH, D)
    k = qkv[:, QS:QS + KS].reshape(t, NKV, D)
    v = qkv[:, QS + KS:].reshape(t, NKV, D)
    q = _ref_rms_norm(q, raw["q_norm_w"])
    k = _ref_rms_norm(k, raw["k_norm_w"])

    inv_freq = 1.0 / (ROPE_THETA ** (jnp.arange(0, D, 2, dtype=jnp.float32) / D))
    freqs = positions.astype(jnp.float32)[:, None] * inv_freq[None, :]
    cos, sin = jnp.cos(freqs)[:, None, :], jnp.sin(freqs)[:, None, :]

    def rope(x):
        x1, x2 = x[..., :D // 2], x[..., D // 2:]
        return jnp.concatenate([x1 * cos - x2 * sin, x2 * cos + x1 * sin], -1)

    q, k = rope(q), rope(k)
    k = jnp.repeat(k, G, axis=1)                               # (t, NH, D)
    v = jnp.repeat(v, G, axis=1)

    s = jnp.einsum('tnd,snd->nts', q, k) * (D ** -0.5)
    mask = jnp.tril(jnp.ones((t, t), bool))[None]
    s = jnp.where(mask, s, -jnp.inf)
    p = jax.nn.softmax(s, axis=-1)
    o = jnp.einsum('nts,snd->tnd', p, v).reshape(t, NH * D)
    attn = o @ raw["wo"]

    residual2 = attn + residual_out
    h2 = _ref_rms_norm(residual2, raw["post_ln_w"])
    gu = h2 @ raw["w_gate_up"]
    gate, up = gu[:, :I], gu[:, I:]
    out = (gate * jax.nn.sigmoid(gate) * up) @ raw["w_down"]
    return out, residual2


# ----------------------------- params & demo ----------------------------------
def init_raw_params(key):
    ks = jax.random.split(key, 4)
    scale = 0.02
    return {
        "input_ln_w": jnp.ones((H,), jnp.float32),
        "post_ln_w": jnp.ones((H,), jnp.float32),
        "q_norm_w": jnp.ones((D,), jnp.float32),
        "k_norm_w": jnp.ones((D,), jnp.float32),
        # pre-transposed [in, out] linear weights (== PyTorch x @ W.T)
        "wqkv": scale * jax.random.normal(ks[0], (H, QS + 2 * KS), jnp.float32),
        "wo": scale * jax.random.normal(ks[1], (NH * D, H), jnp.float32),
        "w_gate_up": scale * jax.random.normal(ks[2], (H, 2 * I), jnp.float32),
        "w_down": scale * jax.random.normal(ks[3], (I, H), jnp.float32),
    }


if __name__ == "__main__":
    key = jax.random.PRNGKey(0)
    pkey, xkey = jax.random.split(key)
    raw_params = init_raw_params(pkey)
    kparams = prepare_params(raw_params)

    positions = jnp.arange(T, dtype=jnp.int32)
    hidden_states = jax.random.normal(xkey, (T, H), jnp.float32)

    # rotary tables built once per forward, shared across layer calls
    rope_tables = rope_cos_sin(positions, D, ROPE_THETA)

    # layer 0: residual is None
    out, residual = qwen3_decoder_layer(hidden_states, None, kparams, rope_tables)
    jax.block_until_ready(out)
    jax.block_until_ready(residual)

    # subsequent layer: with residual
    out2, residual2 = qwen3_decoder_layer(out, residual, kparams, rope_tables)
    jax.block_until_ready(out2)
    jax.block_until_ready(residual2)

    # correctness vs. pure-JAX f32 reference (kernel uses bf16 MXU operands
    # with f32 accumulation -> loosen tolerances accordingly)
    ref_out, ref_res = ref_decoder_layer(positions, hidden_states, None, raw_params)
    ref_out2, ref_res2 = ref_decoder_layer(positions, out, residual, raw_params)

    assert out.shape == (T, H) and residual.shape == (T, H)
    assert bool(jnp.all(jnp.isfinite(out))) and bool(jnp.all(jnp.isfinite(out2)))
    assert jnp.allclose(out, ref_out, atol=5e-3, rtol=5e-2)
    assert jnp.allclose(residual, ref_res, atol=5e-3, rtol=5e-2)
    assert jnp.allclose(out2, ref_out2, atol=5e-3, rtol=5e-2)
    assert jnp.allclose(residual2, ref_res2, atol=5e-3, rtol=5e-2)

    print("KERNEL_OK")
</pallas_src>

<mosaic_0001>
module attributes {stable_mosaic.version = 11 : i64} {
  func.func @_qwen3_layer_kernel(%arg0: i32, %arg1: memref<16x128xf32, #tpu.memory_space<vmem>>, %arg2: memref<1x128xf32, #tpu.memory_space<vmem>>, %arg3: memref<128x128xbf16, #tpu.memory_space<vmem>>, %arg4: memref<128x128xbf16, #tpu.memory_space<vmem>>, %arg5: memref<1x32xf32, #tpu.memory_space<vmem>>, %arg6: memref<1x32xf32, #tpu.memory_space<vmem>>, %arg7: memref<16x32xf32, #tpu.memory_space<vmem>>, %arg8: memref<16x32xf32, #tpu.memory_space<vmem>>, %arg9: memref<128x128xbf16, #tpu.memory_space<vmem>>, %arg10: memref<1x128xf32, #tpu.memory_space<vmem>>, %arg11: memref<128x512xbf16, #tpu.memory_space<vmem>>, %arg12: memref<256x128xbf16, #tpu.memory_space<vmem>>, %arg13: memref<8x128xf32, #tpu.memory_space<vmem>>, %arg14: memref<8x128xf32, #tpu.memory_space<vmem>>) attributes {dimension_semantics = [#tpu.dimension_semantics<parallel>], iteration_bounds = array<i64: 2>, scalar_prefetch = 0 : i64, scratch_operands = 0 : i64, tpu.core_type = #tpu.core_type<tc>, window_params = [{pipeline_mode = #tpu.pipeline_mode<synchronous>, transform_indices = @transform_0, window_bounds = array<i64: 16, 128>}, {pipeline_mode = #tpu.pipeline_mode<synchronous>, transform_indices = @transform_1, window_bounds = array<i64: 1, 128>}, {pipeline_mode = #tpu.pipeline_mode<synchronous>, transform_indices = @transform_2, window_bounds = array<i64: 128, 128>}, {pipeline_mode = #tpu.pipeline_mode<synchronous>, transform_indices = @transform_3, window_bounds = array<i64: 128, 128>}, {pipeline_mode = #tpu.pipeline_mode<synchronous>, transform_indices = @transform_4, window_bounds = array<i64: 1, 32>}, {pipeline_mode = #tpu.pipeline_mode<synchronous>, transform_indices = @transform_5, window_bounds = array<i64: 1, 32>}, {pipeline_mode = #tpu.pipeline_mode<synchronous>, transform_indices = @transform_6, window_bounds = array<i64: 16, 32>}, {pipeline_mode = #tpu.pipeline_mode<synchronous>, transform_indices = @transform_7, window_bounds = array<i64: 16, 32>}, {pipeline_mode = #tpu.pipeline_mode<synchronous>, transform_indices = @transform_8, window_bounds = array<i64: 128, 128>}, {pipeline_mode = #tpu.pipeline_mode<synchronous>, transform_indices = @transform_9, window_bounds = array<i64: 1, 128>}, {pipeline_mode = #tpu.pipeline_mode<synchronous>, transform_indices = @transform_10, window_bounds = array<i64: 128, 512>}, {pipeline_mode = #tpu.pipeline_mode<synchronous>, transform_indices = @transform_11, window_bounds = array<i64: 256, 128>}, {transform_indices = @transform_12, window_bounds = array<i64: 8, 128>}, {transform_indices = @transform_13, window_bounds = array<i64: 8, 128>}]} {
    %c8_i32 = arith.constant 8 : i32
    %0 = arith.muli %arg0, %c8_i32 : i32
    %1 = tpu.assume_multiple %0, 8 : i32
    %c0 = arith.constant 0 : index
    %c0_0 = arith.constant 0 : index
    %2 = vector.load %arg2[%c0, %c0_0] : memref<1x128xf32, #tpu.memory_space<vmem>>, vector<1x128xf32>
    %c0_1 = arith.constant 0 : index
    %c0_2 = arith.constant 0 : index
    %3 = vector.load %arg1[%c0_1, %c0_2] : memref<16x128xf32, #tpu.memory_space<vmem>>, vector<16x128xf32>
    %4 = arith.mulf %3, %3 : vector<16x128xf32>
    %cst = arith.constant dense<0.000000e+00> : vector<16xf32>
    %5 = vector.multi_reduction <add>, %4, %cst [1] : vector<16x128xf32> to vector<16xf32>
    %6 = vector.shape_cast %5 : vector<16xf32> to vector<16x1xf32>
    %cst_3 = arith.constant 1.280000e+02 : f32
    %7 = vector.broadcast %cst_3 : f32 to vector<16x1xf32>
    %8 = arith.divf %6, %7 : vector<16x1xf32>
    %cst_4 = arith.constant 9.99999997E-7 : f32
    %9 = vector.broadcast %cst_4 : f32 to vector<16x1xf32>
    %10 = arith.addf %8, %9 : vector<16x1xf32>
    %11 = math.rsqrt %10 : vector<16x1xf32>
    %12 = vector.broadcast %11 : vector<16x1xf32> to vector<16x128xf32>
    %13 = arith.mulf %3, %12 : vector<16x128xf32>
    %14 = vector.broadcast %2 : vector<1x128xf32> to vector<16x128xf32>
    %15 = arith.mulf %13, %14 : vector<16x128xf32>
    %16 = arith.truncf %15 : vector<16x128xf32> to vector<16x128xbf16>
    %17 = arith.index_cast %1 : i32 to index
    %c0_5 = arith.constant 0 : index
    %18 = vector.load %arg1[%17, %c0_5] : memref<16x128xf32, #tpu.memory_space<vmem>>, vector<8x128xf32>
    %19 = arith.mulf %18, %18 : vector<8x128xf32>
    %cst_6 = arith.constant dense<0.000000e+00> : vector<8xf32>
    %20 = vector.multi_reduction <add>, %19, %cst_6 [1] : vector<8x128xf32> to vector<8xf32>
    %21 = vector.shape_cast %20 : vector<8xf32> to vector<8x1xf32>
    %cst_7 = arith.constant 1.280000e+02 : f32
    %22 = vector.broadcast %cst_7 : f32 to vector<8x1xf32>
    %23 = arith.divf %21, %22 : vector<8x1xf32>
    %cst_8 = arith.constant 9.99999997E-7 : f32
    %24 = vector.broadcast %cst_8 : f32 to vector<8x1xf32>
    %25 = arith.addf %23, %24 : vector<8x1xf32>
    %26 = math.rsqrt %25 : vector<8x1xf32>
    %27 = vector.broadcast %26 : vector<8x1xf32> to vector<8x128xf32>
    %28 = arith.mulf %18, %27 : vector<8x128xf32>
    %29 = vector.broadcast %2 : vector<1x128xf32> to vector<8x128xf32>
    %30 = arith.mulf %28, %29 : vector<8x128xf32>
    %31 = arith.truncf %30 : vector<8x128xf32> to vector<8x128xbf16>
    %c0_9 = arith.constant 0 : index
    %c0_10 = arith.constant 0 : index
    %32 = vector.load %arg3[%c0_9, %c0_10] : memref<128x128xbf16, #tpu.memory_space<vmem>>, vector<128x128xbf16>
    %cst_11 = arith.constant dense<0.000000e+00> : vector<8x128xf32>
    %33 = tpu.matmul %31, %32, %cst_11 {dimension_numbers = #tpu.dot_dimension_numbers<[1], [0], [0], [1], [0, 0, 1, 1], [], []>} : vector<8x128xbf16>, vector<128x128xbf16>, vector<8x128xf32> -> vector<8x128xf32>
    %c0_12 = arith.constant 0 : index
    %c0_13 = arith.constant 0 : index
    %34 = vector.load %arg4[%c0_12, %c0_13] : memref<128x128xbf16, #tpu.memory_space<vmem>>, vector<128x128xbf16>
    %cst_14 = arith.constant dense<0.000000e+00> : vector<16x128xf32>
    %35 = tpu.matmul %16, %34, %cst_14 {dimension_numbers = #tpu.dot_dimension_numbers<[1], [0], [0], [1], [0, 0, 1, 1], [], []>} : vector<16x128xbf16>, vector<128x128xbf16>, vector<16x128xf32> -> vector<16x128xf32>
    %c0_15 = arith.constant 0 : index
    %c0_16 = arith.constant 0 : index
    %36 = vector.load %arg5[%c0_15, %c0_16] : memref<1x32xf32, #tpu.memory_space<vmem>>, vector<1x32xf32>
    %37 = vector.shape_cast %36 : vector<1x32xf32> to vector<1x1x32xf32>
    %c0_17 = arith.constant 0 : index
    %c0_18 = arith.constant 0 : index
    %38 = vector.load %arg6[%c0_17, %c0_18] : memref<1x32xf32, #tpu.memory_space<vmem>>, vector<1x32xf32>
    %39 = vector.shape_cast %38 : vector<1x32xf32> to vector<1x1x32xf32>
    %c0_19 = arith.constant 0 : index
    %c0_20 = arith.constant 0 : index
    %40 = vector.load %arg7[%c0_19, %c0_20] : memref<16x32xf32, #tpu.memory_space<vmem>>, vector<16x32xf32>
    %41 = vector.shape_cast %40 : vector<16x32xf32> to vector<16x1x32xf32>
    %c0_21 = arith.constant 0 : index
    %c0_22 = arith.constant 0 : index
    %42 = vector.load %arg8[%c0_21, %c0_22] : memref<16x32xf32, #tpu.memory_space<vmem>>, vector<16x32xf32>
    %43 = vector.shape_cast %42 : vector<16x32xf32> to vector<16x1x32xf32>
    %44 = arith.index_cast %1 : i32 to index
    %c0_23 = arith.constant 0 : index
    %45 = vector.load %arg7[%44, %c0_23] : memref<16x32xf32, #tpu.memory_space<vmem>>, vector<8x32xf32>
    %46 = vector.shape_cast %45 : vector<8x32xf32> to vector<8x1x32xf32>
    %47 = arith.index_cast %1 : i32 to index
    %c0_24 = arith.constant 0 : index
    %48 = vector.load %arg8[%47, %c0_24] : memref<16x32xf32, #tpu.memory_space<vmem>>, vector<8x32xf32>
    %49 = vector.shape_cast %48 : vector<8x32xf32> to vector<8x1x32xf32>
    %50 = vector.shape_cast %33 : vector<8x128xf32> to vector<8x4x32xf32>
    %51 = arith.mulf %50, %50 : vector<8x4x32xf32>
    %cst_25 = arith.constant dense<0.000000e+00> : vector<8x4xf32>
    %52 = vector.multi_reduction <add>, %51, %cst_25 [2] : vector<8x4x32xf32> to vector<8x4xf32>
    %53 = vector.shape_cast %52 : vector<8x4xf32> to vector<8x4x1xf32>
    %cst_26 = arith.constant 3.200000e+01 : f32
    %54 = vector.broadcast %cst_26 : f32 to vector<8x4x1xf32>
    %55 = arith.divf %53, %54 : vector<8x4x1xf32>
    %cst_27 = arith.constant 9.99999997E-7 : f32
    %56 = vector.broadcast %cst_27 : f32 to vector<8x4x1xf32>
    %57 = arith.addf %55, %56 : vector<8x4x1xf32>
    %58 = math.rsqrt %57 : vector<8x4x1xf32>
    %59 = vector.broadcast %58 : vector<8x4x1xf32> to vector<8x4x32xf32>
    %60 = arith.mulf %50, %59 : vector<8x4x32xf32>
    %61 = vector.broadcast %37 : vector<1x1x32xf32> to vector<8x4x32xf32>
    %62 = arith.mulf %60, %61 : vector<8x4x32xf32>
    %63 = vector.broadcast %46 : vector<8x1x32xf32> to vector<8x4x32xf32>
    %64 = arith.mulf %62, %63 : vector<8x4x32xf32>
    %65 = vector.extract_strided_slice %62 {offsets = [0, 0, 16], sizes = [8, 4, 16], strides = [1, 1, 1]} : vector<8x4x32xf32> to vector<8x4x16xf32>
    %66 = vector.extract_strided_slice %62 {offsets = [0, 0, 0], sizes = [8, 4, 16], strides = [1, 1, 1]} : vector<8x4x32xf32> to vector<8x4x16xf32>
    %67 = tpu.concatenate %65, %66 in 2 : vector<8x4x16xf32>, vector<8x4x16xf32> -> vector<8x4x32xf32>
    %68 = vector.broadcast %49 : vector<8x1x32xf32> to vector<8x4x32xf32>
    %69 = arith.mulf %67, %68 : vector<8x4x32xf32>
    %70 = arith.addf %64, %69 : vector<8x4x32xf32>
    %71 = vector.extract_strided_slice %35 {offsets = [0, 0], sizes = [16, 64], strides = [1, 1]} : vector<16x128xf32> to vector<16x64xf32>
    %72 = vector.shape_cast %71 : vector<16x64xf32> to vector<16x2x32xf32>
    %73 = vector.extract_strided_slice %35 {offsets = [0, 64], sizes = [16, 64], strides = [1, 1]} : vector<16x128xf32> to vector<16x64xf32>
    %74 = vector.shape_cast %73 : vector<16x64xf32> to vector<16x2x32xf32>
    %75 = arith.mulf %72, %72 : vector<16x2x32xf32>
    %cst_28 = arith.constant dense<0.000000e+00> : vector<16x2xf32>
    %76 = vector.multi_reduction <add>, %75, %cst_28 [2] : vector<16x2x32xf32> to vector<16x2xf32>
    %77 = vector.shape_cast %76 : vector<16x2xf32> to vector<16x2x1xf32>
    %cst_29 = arith.constant 3.200000e+01 : f32
    %78 = vector.broadcast %cst_29 : f32 to vector<16x2x1xf32>
    %79 = arith.divf %77, %78 : vector<16x2x1xf32>
    %cst_30 = arith.constant 9.99999997E-7 : f32
    %80 = vector.broadcast %cst_30 : f32 to vector<16x2x1xf32>
    %81 = arith.addf %79, %80 : vector<16x2x1xf32>
    %82 = math.rsqrt %81 : vector<16x2x1xf32>
    %83 = vector.broadcast %82 : vector<16x2x1xf32> to vector<16x2x32xf32>
    %84 = arith.mulf %72, %83 : vector<16x2x32xf32>
    %85 = vector.broadcast %39 : vector<1x1x32xf32> to vector<16x2x32xf32>
    %86 = arith.mulf %84, %85 : vector<16x2x32xf32>
    %87 = vector.broadcast %41 : vector<16x1x32xf32> to vector<16x2x32xf32>
    %88 = arith.mulf %86, %87 : vector<16x2x32xf32>
    %89 = vector.extract_strided_slice %86 {offsets = [0, 0, 16], sizes = [16, 2, 16], strides = [1, 1, 1]} : vector<16x2x32xf32> to vector<16x2x16xf32>
    %90 = vector.extract_strided_slice %86 {offsets = [0, 0, 0], sizes = [16, 2, 16], strides = [1, 1, 1]} : vector<16x2x32xf32> to vector<16x2x16xf32>
    %91 = tpu.concatenate %89, %90 in 2 : vector<16x2x16xf32>, vector<16x2x16xf32> -> vector<16x2x32xf32>
    %92 = vector.broadcast %43 : vector<16x1x32xf32> to vector<16x2x32xf32>
    %93 = arith.mulf %91, %92 : vector<16x2x32xf32>
    %94 = arith.addf %88, %93 : vector<16x2x32xf32>
    %95 = tpu.transpose %70, [1, 0, 2] : vector<8x4x32xf32> -> vector<4x8x32xf32>
    %96 = vector.shape_cast %95 : vector<4x8x32xf32> to vector<2x16x32xf32>
    %97 = tpu.transpose %94, [1, 0, 2] : vector<16x2x32xf32> -> vector<2x16x32xf32>
    %98 = tpu.transpose %74, [1, 0, 2] : vector<16x2x32xf32> -> vector<2x16x32xf32>
    %99 = arith.truncf %96 : vector<2x16x32xf32> to vector<2x16x32xbf16>
    %100 = arith.truncf %97 : vector<2x16x32xf32> to vector<2x16x32xbf16>
    "tpu.trace_start"() <{level = 10 : i32, message = "kmd,ksd->kms"}> : () -> ()
    %cst_31 = arith.constant dense<0.000000e+00> : vector<2x16x16xf32>
    %101 = tpu.matmul %99, %100, %cst_31 {dimension_numbers = #tpu.dot_dimension_numbers<[2], [2], [1], [1], [0, 0, 0, 1, 1, 1], [0], [0]>} : vector<2x16x32xbf16>, vector<2x16x32xbf16>, vector<2x16x16xf32> -> vector<2x16x16xf32>
    "tpu.trace_stop"() : () -> ()
    %102 = tpu.iota {dimensions = array<i32: 0>} : vector<16x16xi32>
    %103 = tpu.iota {dimensions = array<i32: 1>} : vector<16x16xi32>
    %c8_i32_32 = arith.constant 8 : i32
    %c0_i32 = arith.constant 0 : i32
    %104 = arith.cmpi eq, %c8_i32_32, %c0_i32 : i32
    %c1_i32 = arith.constant 1 : i32
    %105 = arith.select %104, %c1_i32, %c8_i32_32 : i32
    %106 = vector.broadcast %105 : i32 to vector<16x16xi32>
    %107 = arith.remsi %102, %106 : vector<16x16xi32>
    %c0_i32_33 = arith.constant 0 : i32
    %108 = vector.broadcast %c0_i32_33 : i32 to vector<16x16xi32>
    %109 = arith.cmpi ne, %107, %108 : vector<16x16xi32>
    %c0_i32_34 = arith.constant 0 : i32
    %110 = vector.broadcast %c0_i32_34 : i32 to vector<16x16xi32>
    %111 = arith.cmpi slt, %107, %110 : vector<16x16xi32>
    %c0_i32_35 = arith.constant 0 : i32
    %112 = arith.cmpi slt, %105, %c0_i32_35 : i32
    %113 = vector.broadcast %112 : i1 to vector<16x16xi1>
    %114 = vector.broadcast %113 : vector<16x16xi1> to vector<16x16xi1>
    %115 = arith.xori %111, %114 : vector<16x16xi1>
    %116 = arith.andi %115, %109 : vector<16x16xi1>
    %117 = vector.broadcast %105 : i32 to vector<16x16xi32>
    %118 = arith.addi %107, %117 : vector<16x16xi32>
    %119 = arith.select %116, %118, %107 : vector<16x16xi1>, vector<16x16xi32>
    %120 = vector.broadcast %1 : i32 to vector<16x16xi32>
    %121 = arith.addi %120, %119 : vector<16x16xi32>
    %122 = arith.cmpi sle, %103, %121 : vector<16x16xi32>
    %123 = vector.shape_cast %122 : vector<16x16xi1> to vector<1x16x16xi1>
    %cst_36 = arith.constant -1.000000e+30 : f32
    %124 = vector.shape_cast %123 : vector<1x16x16xi1> to vector<1x16x16xi1>
    %125 = vector.broadcast %124 : vector<1x16x16xi1> to vector<2x16x16xi1>
    %126 = vector.broadcast %cst_36 : f32 to vector<2x16x16xf32>
    %127 = arith.select %125, %101, %126 : vector<2x16x16xi1>, vector<2x16x16xf32>
    %cst_37 = arith.constant dense<0xFF800000> : vector<2x16xf32>
    %128 = vector.multi_reduction <maximumf>, %127, %cst_37 [2] : vector<2x16x16xf32> to vector<2x16xf32>
    %129 = vector.shape_cast %128 : vector<2x16xf32> to vector<2x16x1xf32>
    %130 = vector.broadcast %129 : vector<2x16x1xf32> to vector<2x16x16xf32>
    %131 = arith.subf %127, %130 : vector<2x16x16xf32>
    %132 = math.exp %131 : vector<2x16x16xf32>
    %cst_38 = arith.constant dense<0.000000e+00> : vector<2x16xf32>
    %133 = vector.multi_reduction <add>, %132, %cst_38 [2] : vector<2x16x16xf32> to vector<2x16xf32>
    %134 = vector.shape_cast %133 : vector<2x16xf32> to vector<2x16x1xf32>
    %135 = vector.broadcast %134 : vector<2x16x1xf32> to vector<2x16x16xf32>
    %136 = arith.divf %132, %135 : vector<2x16x16xf32>
    %137 = arith.truncf %136 : vector<2x16x16xf32> to vector<2x16x16xbf16>
    %138 = arith.truncf %98 : vector<2x16x32xf32> to vector<2x16x32xbf16>
    "tpu.trace_start"() <{level = 10 : i32, message = "kms,ksd->kmd"}> : () -> ()
    %cst_39 = arith.constant dense<0.000000e+00> : vector<2x16x32xf32>
    %139 = tpu.matmul %137, %138, %cst_39 {dimension_numbers = #tpu.dot_dimension_numbers<[2], [1], [1], [2], [0, 0, 0, 1, 1, 2], [0], [0]>} : vector<2x16x16xbf16>, vector<2x16x32xbf16>, vector<2x16x32xf32> -> vector<2x16x32xf32>
    "tpu.trace_stop"() : () -> ()
    %140 = vector.shape_cast %139 : vector<2x16x32xf32> to vector<4x8x32xf32>
    %141 = tpu.transpose %140, [1, 0, 2] : vector<4x8x32xf32> -> vector<8x4x32xf32>
    %142 = vector.shape_cast %141 : vector<8x4x32xf32> to vector<8x128xf32>
    %143 = arith.truncf %142 : vector<8x128xf32> to vector<8x128xbf16>
    %c0_40 = arith.constant 0 : index
    %c0_41 = arith.constant 0 : index
    %144 = vector.load %arg9[%c0_40, %c0_41] : memref<128x128xbf16, #tpu.memory_space<vmem>>, vector<128x128xbf16>
    %cst_42 = arith.constant dense<0.000000e+00> : vector<8x128xf32>
    %145 = tpu.matmul %143, %144, %cst_42 {dimension_numbers = #tpu.dot_dimension_numbers<[1], [0], [0], [1], [0, 0, 1, 1], [], []>} : vector<8x128xbf16>, vector<128x128xbf16>, vector<8x128xf32> -> vector<8x128xf32>
    %146 = arith.addf %145, %18 : vector<8x128xf32>
    %c0_43 = arith.constant 0 : index
    %c0_44 = arith.constant 0 : index
    %147 = vector.load %arg14[%c0_43, %c0_44] : memref<8x128xf32, #tpu.memory_space<vmem>>, vector<8x128xf32>
    tpu.vector_store %arg14[%c0_43, %c0_44], %146 {strides = array<i32>} : memref<8x128xf32, #tpu.memory_space<vmem>>, vector<8x128xf32>,
    %c0_45 = arith.constant 0 : index
    %c0_46 = arith.constant 0 : index
    %148 = vector.load %arg10[%c0_45, %c0_46] : memref<1x128xf32, #tpu.memory_space<vmem>>, vector<1x128xf32>
    %149 = arith.mulf %146, %146 : vector<8x128xf32>
    %cst_47 = arith.constant dense<0.000000e+00> : vector<8xf32>
    %150 = vector.multi_reduction <add>, %149, %cst_47 [1] : vector<8x128xf32> to vector<8xf32>
    %151 = vector.shape_cast %150 : vector<8xf32> to vector<8x1xf32>
    %cst_48 = arith.constant 1.280000e+02 : f32
    %152 = vector.broadcast %cst_48 : f32 to vector<8x1xf32>
    %153 = arith.divf %151, %152 : vector<8x1xf32>
    %cst_49 = arith.constant 9.99999997E-7 : f32
    %154 = vector.broadcast %cst_49 : f32 to vector<8x1xf32>
    %155 = arith.addf %153, %154 : vector<8x1xf32>
    %156 = math.rsqrt %155 : vector<8x1xf32>
    %157 = vector.broadcast %156 : vector<8x1xf32> to vector<8x128xf32>
    %158 = arith.mulf %146, %157 : vector<8x128xf32>
    %159 = vector.broadcast %148 : vector<1x128xf32> to vector<8x128xf32>
    %160 = arith.mulf %158, %159 : vector<8x128xf32>
    %161 = arith.truncf %160 : vector<8x128xf32> to vector<8x128xbf16>
    %c0_50 = arith.constant 0 : index
    %c0_51 = arith.constant 0 : index
    %162 = vector.load %arg11[%c0_50, %c0_51] : memref<128x512xbf16, #tpu.memory_space<vmem>>, vector<128x512xbf16>
    %cst_52 = arith.constant dense<0.000000e+00> : vector<8x512xf32>
    %163 = tpu.matmul %161, %162, %cst_52 {dimension_numbers = #tpu.dot_dimension_numbers<[1], [0], [0], [1], [0, 0, 1, 1], [], []>} : vector<8x128xbf16>, vector<128x512xbf16>, vector<8x512xf32> -> vector<8x512xf32>
    %164 = vector.extract_strided_slice %163 {offsets = [0, 0], sizes = [8, 256], strides = [1, 1]} : vector<8x512xf32> to vector<8x256xf32>
    %165 = vector.extract_strided_slice %163 {offsets = [0, 256], sizes = [8, 256], strides = [1, 1]} : vector<8x512xf32> to vector<8x256xf32>
    %166 = arith.negf %164 : vector<8x256xf32>
    %167 = math.exp %166 : vector<8x256xf32>
    %cst_53 = arith.constant 1.000000e+00 : f32
    %168 = vector.broadcast %cst_53 : f32 to vector<8x256xf32>
    %169 = arith.addf %168, %167 : vector<8x256xf32>
    %170 = arith.divf %168, %169 : vector<8x256xf32>
    %171 = arith.mulf %164, %170 : vector<8x256xf32>
    %172 = arith.mulf %171, %165 : vector<8x256xf32>
    %173 = arith.truncf %172 : vector<8x256xf32> to vector<8x256xbf16>
    %c0_54 = arith.constant 0 : index
    %c0_55 = arith.constant 0 : index
    %174 = vector.load %arg12[%c0_54, %c0_55] : memref<256x128xbf16, #tpu.memory_space<vmem>>, vector<256x128xbf16>
    %cst_56 = arith.constant dense<0.000000e+00> : vector<8x128xf32>
    %175 = tpu.matmul %173, %174, %cst_56 {dimension_numbers = #tpu.dot_dimension_numbers<[1], [0], [0], [1], [0, 0, 1, 1], [], []>} : vector<8x256xbf16>, vector<256x128xbf16>, vector<8x128xf32> -> vector<8x128xf32>
    %c0_57 = arith.constant 0 : index
    %c0_58 = arith.constant 0 : index
    %176 = vector.load %arg13[%c0_57, %c0_58] : memref<8x128xf32, #tpu.memory_space<vmem>>, vector<8x128xf32>
    tpu.vector_store %arg13[%c0_57, %c0_58], %175 {strides = array<i32>} : memref<8x128xf32, #tpu.memory_space<vmem>>, vector<8x128xf32>,
    return
  }
  func.func @transform_0(%arg0: i32) -> (i32, i32) {
    %c0_i32 = arith.constant 0 : i32
    %c0_i32_0 = arith.constant 0 : i32
    %c0_i32_1 = arith.constant 0 : i32
    return %c0_i32, %c0_i32_0 : i32, i32
  }
  func.func @transform_1(%arg0: i32) -> (i32, i32) {
    %c0_i32 = arith.constant 0 : i32
    %c0_i32_0 = arith.constant 0 : i32
    %c0_i32_1 = arith.constant 0 : i32
    return %c0_i32, %c0_i32_0 : i32, i32
  }
  func.func @transform_2(%arg0: i32) -> (i32, i32) {
    %c0_i32 = arith.constant 0 : i32
    %c0_i32_0 = arith.constant 0 : i32
    %c0_i32_1 = arith.constant 0 : i32
    return %c0_i32, %c0_i32_0 : i32, i32
  }
  func.func @transform_3(%arg0: i32) -> (i32, i32) {
    %c0_i32 = arith.constant 0 : i32
    %c0_i32_0 = arith.constant 0 : i32
    %c0_i32_1 = arith.constant 0 : i32
    return %c0_i32, %c0_i32_0 : i32, i32
  }
  func.func @transform_4(%arg0: i32) -> (i32, i32) {
    %c0_i32 = arith.constant 0 : i32
    %c0_i32_0 = arith.constant 0 : i32
    %c0_i32_1 = arith.constant 0 : i32
    return %c0_i32, %c0_i32_0 : i32, i32
  }
  func.func @transform_5(%arg0: i32) -> (i32, i32) {
    %c0_i32 = arith.constant 0 : i32
    %c0_i32_0 = arith.constant 0 : i32
    %c0_i32_1 = arith.constant 0 : i32
    return %c0_i32, %c0_i32_0 : i32, i32
  }
  func.func @transform_6(%arg0: i32) -> (i32, i32) {
    %c0_i32 = arith.constant 0 : i32
    %c0_i32_0 = arith.constant 0 : i32
    %c0_i32_1 = arith.constant 0 : i32
    return %c0_i32, %c0_i32_0 : i32, i32
  }
  func.func @transform_7(%arg0: i32) -> (i32, i32) {
    %c0_i32 = arith.constant 0 : i32
    %c0_i32_0 = arith.constant 0 : i32
    %c0_i32_1 = arith.constant 0 : i32
    return %c0_i32, %c0_i32_0 : i32, i32
  }
  func.func @transform_8(%arg0: i32) -> (i32, i32) {
    %c0_i32 = arith.constant 0 : i32
    %c0_i32_0 = arith.constant 0 : i32
    %c0_i32_1 = arith.constant 0 : i32
    return %c0_i32, %c0_i32_0 : i32, i32
  }
  func.func @transform_9(%arg0: i32) -> (i32, i32) {
    %c0_i32 = arith.constant 0 : i32
    %c0_i32_0 = arith.constant 0 : i32
    %c0_i32_1 = arith.constant 0 : i32
    return %c0_i32, %c0_i32_0 : i32, i32
  }
  func.func @transform_10(%arg0: i32) -> (i32, i32) {
    %c0_i32 = arith.constant 0 : i32
    %c0_i32_0 = arith.constant 0 : i32
    %c0_i32_1 = arith.constant 0 : i32
    return %c0_i32, %c0_i32_0 : i32, i32
  }
  func.func @transform_11(%arg0: i32) -> (i32, i32) {
    %c0_i32 = arith.constant 0 : i32
    %c0_i32_0 = arith.constant 0 : i32
    %c0_i32_1 = arith.constant 0 : i32
    return %c0_i32, %c0_i32_0 : i32, i32
  }
  func.func @transform_12(%arg0: i32) -> (i32, i32) {
    %c0_i32 = arith.constant 0 : i32
    %c0_i32_0 = arith.constant 0 : i32
    return %arg0, %c0_i32 : i32, i32
  }
  func.func @transform_13(%arg0: i32) -> (i32, i32) {
    %c0_i32 = arith.constant 0 : i32
    %c0_i32_0 = arith.constant 0 : i32
    return %arg0, %c0_i32 : i32, i32
  }
}

</mosaic_0001>

<llo_original>
// kernel: tpu_custom_call.1
$region0: #{tpu_custom_call.1}
  #allocation0 [shape = 'u32[]', space=smem, size = 0x4, offset = 0x4, fixed_abs, tag = 'smem constant byte address 0x4 - core index']
  #allocation1 [shape = 'u32[144,128]{1,0:T(1,128)}', space=vmem, size = 0x12000, scoped, tag = 'internal scratch']
  %s0 = inlined_call_operand.hbm [shape: f32[16,128], index: 0, kind: input, shape index: {}]
  %s1 = inlined_call_operand.vmem [shape: f32[1,128], index: 1, kind: input, shape index: {}]
  %s2 = inlined_call_operand.hbm [shape: bf16[128,128], index: 2, kind: input, shape index: {}]
  %s3 = inlined_call_operand.hbm [shape: bf16[128,128], index: 3, kind: input, shape index: {}]
  %s4 = inlined_call_operand.vmem [shape: f32[1,32], index: 4, kind: input, shape index: {}]
  %s5 = inlined_call_operand.vmem [shape: f32[1,32], index: 5, kind: input, shape index: {}]
  %s6 = inlined_call_operand.vmem [shape: f32[16,32], index: 6, kind: input, shape index: {}]
  %s7 = inlined_call_operand.hbm [shape: f32[16,32], index: 7, kind: input, shape index: {}]
  %s8 = inlined_call_operand.hbm [shape: bf16[128,128], index: 8, kind: input, shape index: {}]
  %s9 = inlined_call_operand.vmem [shape: f32[1,128], index: 9, kind: input, shape index: {}]
  %s10 = inlined_call_operand.hbm [shape: bf16[128,512], index: 10, kind: input, shape index: {}]
  %s11 = inlined_call_operand.hbm [shape: bf16[256,128], index: 11, kind: input, shape index: {}]
  %s12 = inlined_call_operand.hbm [shape: f32[16,128], index: 12, kind: output, shape index: {0}]
  %s13 = inlined_call_operand.hbm [shape: f32[16,128], index: 13, kind: output, shape index: {1}]
  %14 = xla_tuple %s12, %s13
  %s15 = sld [smem:[#allocation0]]
  $region117: #{tpu_custom_call.1} parent=0
    _
  %s17 = ssub.s32 1, %s15
  %s18 = scalar_select 0, %s17, %s15
  $region1: #{tpu_custom_call.1} parent=0
    #allocation2 [shape = 'u8[8192]{0}', space=vmem, size = 0x2000, scoped, tag = 'input window, operand 0, single buffered']
    #allocation3 [shape = 's32[2]{0}', space=sflag, size = 0x8, scoped, tag = 'scoped memory for tpu_custom_call.1']
    #allocation4 [shape = 's32[2]{0}', space=sflag, size = 0x8, scoped, tag = 'scoped memory for tpu_custom_call.1']
    #allocation5 [shape = 'u8[32768]{0}', space=vmem, size = 0x8000, scoped, tag = 'input window, operand 2, single buffered']
    #allocation6 [shape = 's32[1]{0}', space=sflag, size = 0x4, scoped, tag = 'scoped memory for tpu_custom_call.1']
    #allocation7 [shape = 'u8[32768]{0}', space=vmem, size = 0x8000, scoped, tag = 'input window, operand 3, single buffered']
    #allocation8 [shape = 'u8[8192]{0}', space=vmem, size = 0x2000, scoped, tag = 'input window, operand 7, single buffered']
    #allocation9 [shape = 's32[1]{0}', space=sflag, size = 0x4, scoped, tag = 'scoped memory for tpu_custom_call.1']
    #allocation10 [shape = 'u8[32768]{0}', space=vmem, size = 0x8000, scoped, tag = 'input window, operand 8, single buffered']
    #allocation11 [shape = 'u8[131072]{0}', space=vmem, size = 0x20000, scoped, tag = 'input window, operand 10, single buffered']
    #allocation12 [shape = 's32[1]{0}', space=sflag, size = 0x4, scoped, tag = 'scoped memory for tpu_custom_call.1']
    #allocation13 [shape = 'u8[65536]{0}', space=vmem, size = 0x10000, scoped, tag = 'input window, operand 11, single buffered']
    #allocation14 [shape = 'u8[8192]{0}', space=vmem, size = 0x2000, scoped, tag = 'output window, operand 0']
    #allocation15 [shape = 'u8[8192]{0}', space=vmem, size = 0x2000, scoped, tag = 'output window, operand 1']
    #allocation16 [shape = 's32[2]{0}', space=sflag, size = 0x8, scoped, tag = 'scoped memory for tpu_custom_call.1']
    %19 = vsyncpa [#allocation3], 0
    %20 = vsyncpa [#allocation6], 0
    %21 = vsyncpa [#allocation9], 0
    %22 = vsyncpa [#allocation12], 0
    %23 = vsyncpa [#allocation4], 0
    %s24 = scalar_lea.sflag [#allocation4], 1
    %25 = vsyncpa %s24, 0
    %26 = vsyncpa [#allocation16], 0
    %s27 = scalar_lea.sflag [#allocation16], 1
    %28 = vsyncpa %s27, 0
    loop: start=0, step=1, limit=4
    $region2: #{tpu_custom_call.1} parent=1 // loop_pre_header
      _
    $region3: #{tpu_custom_call.1} parent=1 // loop_header
      %s30 = sphi 0, %s34
      %p31 = scmp.ge.s32.totalorder %s30, 4
      %s38 = sphi 0, %s38
      %s40 = sphi 0, %s38
      %s41 = sphi 0, %s40
      %s55 = sphi 0, %s41
      %s59 = sphi 0, %s59
      %s61 = sphi 0, %s59
      %s62 = sphi 0, %s61
      %s76 = sphi 0, %s62
      %s80 = sphi 0, %s80
      %s82 = sphi 0, %s80
      %s83 = sphi 0, %s82
      %s97 = sphi 0, %s83
      %s101 = sphi 0, %s101
      %s103 = sphi 0, %s101
      %s104 = sphi 0, %s103
      %s118 = sphi 0, %s104
      %s122 = sphi 0, %s122
      %s124 = sphi 0, %s122
      %s125 = sphi 0, %s124
      %s139 = sphi 0, %s125
      %s143 = sphi 0, %s143
      %s145 = sphi 0, %s143
      %s146 = sphi 0, %s145
      %s160 = sphi 0, %s146
      %s164 = sphi 0, %s164
      %s166 = sphi 0, %s164
      %s167 = sphi 0, %s166
      %s181 = sphi 0, %s167
      %s185 = sphi 0, %s185
      %s187 = sphi 0, %s185
      %s188 = sphi 0, %s187
      %s202 = sphi 0, %s188
      %s206 = sphi 0, %s206
      %s208 = sphi 0, %s206
      %s209 = sphi 0, %s208
      %s223 = sphi 0, %s209
      %s227 = sphi 0, %s227
      %s229 = sphi 0, %s227
      %s230 = sphi 0, %s229
      %s244 = sphi 0, %s230
      %s248 = sphi 0, %s248
      %s250 = sphi 0, %s248
      %s251 = sphi 0, %s250
      %s265 = sphi 0, %s251
      %s269 = sphi 0, %s269
      %s271 = sphi 0, %s269
      %s272 = sphi 0, %s271
      %s286 = sphi 0, %s272
      %s292 = sphi 0, %s294
      %s295 = sphi 0, %s292
      %s296 = sphi 0, %s295
      %s312 = sphi 0, %s296
      %s318 = sphi 0, %s320
      %s321 = sphi 0, %s318
      %s322 = sphi 0, %s321
      %s338 = sphi 0, %s322
    $region4: #{tpu_custom_call.1} parent=1 // loop_header_branch
      %33 = sbr.rel (%p31) target = $region8
    $region5: #{tpu_custom_call.1} parent=1 // loop_body
      %s35 = ssub.s32 %s30, 1
      %s36 = ssub.s32 %s30, 2
      %s37 = sadd.s32 %s30, 1
      %s39 = sadd.s32 %s38, 1
      %p42 = scmp.eq.s32.totalorder %s30, 1
      %p43 = scmp.ne.s32.totalorder %s38, %s40
      %p44 = scmp.eq.s32.totalorder %s30, 0
      %p45 = por %p43, %p44
      %p46 = scmp.ne.s32.totalorder %s38, %s40
      %p47 = scmp.eq.s32.totalorder %s35, 1
      %p48 = por %p46, %p47
      %p49 = scmp.ne.s32.totalorder %s40, %s41
      %p50 = scmp.eq.s32.totalorder %s35, 0
      %p51 = por %p49, %p50
      %p52 = scmp.ne.s32.totalorder %s40, %s41
      %p53 = scmp.eq.s32.totalorder %s36, 1
      %p54 = por %p52, %p53
      %p56 = scmp.ne.s32.totalorder %s41, %s55
      %p57 = scmp.eq.s32.totalorder %s36, 0
      %p58 = por %p56, %p57
      %s60 = sadd.s32 %s59, 1
      %p63 = scmp.eq.s32.totalorder %s30, 1
      %p64 = scmp.ne.s32.totalorder %s59, %s61
      %p65 = scmp.eq.s32.totalorder %s30, 0
      %p66 = por %p64, %p65
      %p67 = scmp.ne.s32.totalorder %s59, %s61
      %p68 = scmp.eq.s32.totalorder %s35, 1
      %p69 = por %p67, %p68
      %p70 = scmp.ne.s32.totalorder %s61, %s62
      %p71 = scmp.eq.s32.totalorder %s35, 0
      %p72 = por %p70, %p71
      %p73 = scmp.ne.s32.totalorder %s61, %s62
      %p74 = scmp.eq.s32.totalorder %s36, 1
      %p75 = por %p73, %p74
      %p77 = scmp.ne.s32.totalorder %s62, %s76
      %p78 = scmp.eq.s32.totalorder %s36, 0
      %p79 = por %p77, %p78
      %s81 = sadd.s32 %s80, 1
      %p84 = scmp.eq.s32.totalorder %s30, 1
      %p85 = scmp.ne.s32.totalorder %s80, %s82
      %p86 = scmp.eq.s32.totalorder %s30, 0
      %p87 = por %p85, %p86
      %p88 = scmp.ne.s32.totalorder %s80, %s82
      %p89 = scmp.eq.s32.totalorder %s35, 1
      %p90 = por %p88, %p89
      %p91 = scmp.ne.s32.totalorder %s82, %s83
      %p92 = scmp.eq.s32.totalorder %s35, 0
      %p93 = por %p91, %p92
      %p94 = scmp.ne.s32.totalorder %s82, %s83
      %p95 = scmp.eq.s32.totalorder %s36, 1
      %p96 = por %p94, %p95
      %p98 = scmp.ne.s32.totalorder %s83, %s97
      %p99 = scmp.eq.s32.totalorder %s36, 0
      %p100 = por %p98, %p99
      %s102 = sadd.s32 %s101, 1
      %p105 = scmp.eq.s32.totalorder %s30, 1
      %p106 = scmp.ne.s32.totalorder %s101, %s103
      %p107 = scmp.eq.s32.totalorder %s30, 0
      %p108 = por %p106, %p107
      %p109 = scmp.ne.s32.totalorder %s101, %s103
      %p110 = scmp.eq.s32.totalorder %s35, 1
      %p111 = por %p109, %p110
      %p112 = scmp.ne.s32.totalorder %s103, %s104
      %p113 = scmp.eq.s32.totalorder %s35, 0
      %p114 = por %p112, %p113
      %p115 = scmp.ne.s32.totalorder %s103, %s104
      %p116 = scmp.eq.s32.totalorder %s36, 1
      %p117 = por %p115, %p116
      %p119 = scmp.ne.s32.totalorder %s104, %s118
      %p120 = scmp.eq.s32.totalorder %s36, 0
      %p121 = por %p119, %p120
      %s123 = sadd.s32 %s122, 1
      %p126 = scmp.eq.s32.totalorder %s30, 1
      %p127 = scmp.ne.s32.totalorder %s122, %s124
      %p128 = scmp.eq.s32.totalorder %s30, 0
      %p129 = por %p127, %p128
      %p130 = scmp.ne.s32.totalorder %s122, %s124
      %p131 = scmp.eq.s32.totalorder %s35, 1
      %p132 = por %p130, %p131
      %p133 = scmp.ne.s32.totalorder %s124, %s125
      %p134 = scmp.eq.s32.totalorder %s35, 0
      %p135 = por %p133, %p134
      %p136 = scmp.ne.s32.totalorder %s124, %s125
      %p137 = scmp.eq.s32.totalorder %s36, 1
      %p138 = por %p136, %p137
      %p140 = scmp.ne.s32.totalorder %s125, %s139
      %p141 = scmp.eq.s32.totalorder %s36, 0
      %p142 = por %p140, %p141
      %s144 = sadd.s32 %s143, 1
      %p147 = scmp.eq.s32.totalorder %s30, 1
      %p148 = scmp.ne.s32.totalorder %s143, %s145
      %p149 = scmp.eq.s32.totalorder %s30, 0
      %p150 = por %p148, %p149
      %p151 = scmp.ne.s32.totalorder %s143, %s145
      %p152 = scmp.eq.s32.totalorder %s35, 1
      %p153 = por %p151, %p152
      %p154 = scmp.ne.s32.totalorder %s145, %s146
      %p155 = scmp.eq.s32.totalorder %s35, 0
      %p156 = por %p154, %p155
      %p157 = scmp.ne.s32.totalorder %s145, %s146
      %p158 = scmp.eq.s32.totalorder %s36, 1
      %p159 = por %p157, %p158
      %p161 = scmp.ne.s32.totalorder %s146, %s160
      %p162 = scmp.eq.s32.totalorder %s36, 0
      %p163 = por %p161, %p162
      %s165 = sadd.s32 %s164, 1
      %p168 = scmp.eq.s32.totalorder %s30, 1
      %p169 = scmp.ne.s32.totalorder %s164, %s166
      %p170 = scmp.eq.s32.totalorder %s30, 0
      %p171 = por %p169, %p170
      %p172 = scmp.ne.s32.totalorder %s164, %s166
      %p173 = scmp.eq.s32.totalorder %s35, 1
      %p174 = por %p172, %p173
      %p175 = scmp.ne.s32.totalorder %s166, %s167
      %p176 = scmp.eq.s32.totalorder %s35, 0
      %p177 = por %p175, %p176
      %p178 = scmp.ne.s32.totalorder %s166, %s167
      %p179 = scmp.eq.s32.totalorder %s36, 1
      %p180 = por %p178, %p179
      %p182 = scmp.ne.s32.totalorder %s167, %s181
      %p183 = scmp.eq.s32.totalorder %s36, 0
      %p184 = por %p182, %p183
      %s186 = sadd.s32 %s185, 1
      %p189 = scmp.eq.s32.totalorder %s30, 1
      %p190 = scmp.ne.s32.totalorder %s185, %s187
      %p191 = scmp.eq.s32.totalorder %s30, 0
      %p192 = por %p190, %p191
      %p193 = scmp.ne.s32.totalorder %s185, %s187
      %p194 = scmp.eq.s32.totalorder %s35, 1
      %p195 = por %p193, %p194
      %p196 = scmp.ne.s32.totalorder %s187, %s188
      %p197 = scmp.eq.s32.totalorder %s35, 0
      %p198 = por %p196, %p197
      %p199 = scmp.ne.s32.totalorder %s187, %s188
      %p200 = scmp.eq.s32.totalorder %s36, 1
      %p201 = por %p199, %p200
      %p203 = scmp.ne.s32.totalorder %s188, %s202
      %p204 = scmp.eq.s32.totalorder %s36, 0
      %p205 = por %p203, %p204
      %s207 = sadd.s32 %s206, 1
      %p210 = scmp.eq.s32.totalorder %s30, 1
      %p211 = scmp.ne.s32.totalorder %s206, %s208
      %p212 = scmp.eq.s32.totalorder %s30, 0
      %p213 = por %p211, %p212
      %p214 = scmp.ne.s32.totalorder %s206, %s208
      %p215 = scmp.eq.s32.totalorder %s35, 1
      %p216 = por %p214, %p215
      %p217 = scmp.ne.s32.totalorder %s208, %s209
      %p218 = scmp.eq.s32.totalorder %s35, 0
      %p219 = por %p217, %p218
      %p220 = scmp.ne.s32.totalorder %s208, %s209
      %p221 = scmp.eq.s32.totalorder %s36, 1
      %p222 = por %p220, %p221
      %p224 = scmp.ne.s32.totalorder %s209, %s223
      %p225 = scmp.eq.s32.totalorder %s36, 0
      %p226 = por %p224, %p225
      %s228 = sadd.s32 %s227, 1
      %p231 = scmp.eq.s32.totalorder %s30, 1
      %p232 = scmp.ne.s32.totalorder %s227, %s229
      %p233 = scmp.eq.s32.totalorder %s30, 0
      %p234 = por %p232, %p233
      %p235 = scmp.ne.s32.totalorder %s227, %s229
      %p236 = scmp.eq.s32.totalorder %s35, 1
      %p237 = por %p235, %p236
      %p238 = scmp.ne.s32.totalorder %s229, %s230
      %p239 = scmp.eq.s32.totalorder %s35, 0
      %p240 = por %p238, %p239
      %p241 = scmp.ne.s32.totalorder %s229, %s230
      %p242 = scmp.eq.s32.totalorder %s36, 1
      %p243 = por %p241, %p242
      %p245 = scmp.ne.s32.totalorder %s230, %s244
      %p246 = scmp.eq.s32.totalorder %s36, 0
      %p247 = por %p245, %p246
      %s249 = sadd.s32 %s248, 1
      %p252 = scmp.eq.s32.totalorder %s30, 1
      %p253 = scmp.ne.s32.totalorder %s248, %s250
      %p254 = scmp.eq.s32.totalorder %s30, 0
      %p255 = por %p253, %p254
      %p256 = scmp.ne.s32.totalorder %s248, %s250
      %p257 = scmp.eq.s32.totalorder %s35, 1
      %p258 = por %p256, %p257
      %p259 = scmp.ne.s32.totalorder %s250, %s251
      %p260 = scmp.eq.s32.totalorder %s35, 0
      %p261 = por %p259, %p260
      %p262 = scmp.ne.s32.totalorder %s250, %s251
      %p263 = scmp.eq.s32.totalorder %s36, 1
      %p264 = por %p262, %p263
      %p266 = scmp.ne.s32.totalorder %s251, %s265
      %p267 = scmp.eq.s32.totalorder %s36, 0
      %p268 = por %p266, %p267
      %s270 = sadd.s32 %s269, 1
      %p273 = scmp.eq.s32.totalorder %s30, 1
      %p274 = scmp.ne.s32.totalorder %s269, %s271
      %p275 = scmp.eq.s32.totalorder %s30, 0
      %p276 = por %p274, %p275
      %p277 = scmp.ne.s32.totalorder %s269, %s271
      %p278 = scmp.eq.s32.totalorder %s35, 1
      %p279 = por %p277, %p278
      %p280 = scmp.ne.s32.totalorder %s271, %s272
      %p281 = scmp.eq.s32.totalorder %s35, 0
      %p282 = por %p280, %p281
      %p283 = scmp.ne.s32.totalorder %s271, %s272
      %p284 = scmp.eq.s32.totalorder %s36, 1
      %p285 = por %p283, %p284
      %p287 = scmp.ne.s32.totalorder %s272, %s286
      %p288 = scmp.eq.s32.totalorder %s36, 0
      %p289 = por %p287, %p288
      %s290 = ssub.s32 %s30, %s37
      %p291 = scmp.eq.s32.totalorder %s290, 0
      %s293 = sadd.s32 %s292, 1
      %s294 = scalar_select %p291, %s292, %s293
      %p297 = pneg %p291
      %p298 = scmp.eq.s32.totalorder %s30, 1
      %p299 = por %p297, %p298
      %p300 = scmp.ne.s32.totalorder %s292, %s295
      %p301 = scmp.eq.s32.totalorder %s30, 0
      %p302 = por %p300, %p301
      %p303 = scmp.ne.s32.totalorder %s292, %s295
      %p304 = scmp.eq.s32.totalorder %s35, 1
      %p305 = por %p303, %p304
      %p306 = scmp.ne.s32.totalorder %s295, %s296
      %p307 = scmp.eq.s32.totalorder %s35, 0
      %p308 = por %p306, %p307
      %p309 = scmp.ne.s32.totalorder %s295, %s296
      %p310 = scmp.eq.s32.totalorder %s36, 1
      %p311 = por %p309, %p310
      %p313 = scmp.ne.s32.totalorder %s296, %s312
      %p314 = scmp.eq.s32.totalorder %s36, 0
      %p315 = por %p313, %p314
      %s316 = ssub.s32 %s30, %s37
      %p317 = scmp.eq.s32.totalorder %s316, 0
      %s319 = sadd.s32 %s318, 1
      %s320 = scalar_select %p317, %s318, %s319
      %p323 = pneg %p317
      %p324 = scmp.eq.s32.totalorder %s30, 1
      %p325 = por %p323, %p324
      %p326 = scmp.ne.s32.totalorder %s318, %s321
      %p327 = scmp.eq.s32.totalorder %s30, 0
      %p328 = por %p326, %p327
      %p329 = scmp.ne.s32.totalorder %s318, %s321
      %p330 = scmp.eq.s32.totalorder %s35, 1
      %p331 = por %p329, %p330
      %p332 = scmp.ne.s32.totalorder %s321, %s322
      %p333 = scmp.eq.s32.totalorder %s35, 0
      %p334 = por %p332, %p333
      %p335 = scmp.ne.s32.totalorder %s321, %s322
      %p336 = scmp.eq.s32.totalorder %s36, 1
      %p337 = por %p335, %p336
      %p339 = scmp.ne.s32.totalorder %s322, %s338
      %p340 = scmp.eq.s32.totalorder %s36, 0
      %p341 = por %p339, %p340
      %p342 = scmp.le.s32.totalorder 1, %s30
      %p343 = scmp.lt.s32.totalorder %s30, 3
      %p344 = pnand %p342, %p343
      %p345 = pneg %p344
      // Predicated region
      $region9: #{tpu_custom_call.1} parent=5 // pred_check
        _
      $region10: #{tpu_custom_call.1} parent=5 // pred_check_branch
        %347 = sbr.rel (%p344) target = $region12
      $region11: #{tpu_custom_call.1} parent=5 // pred_region
        %s348 = ssub.s32 %s30, 1
        // Predicated region
        $region13: #{tpu_custom_call.1} parent=11 // pred_check
          %p349 = pneg %p51
        $region14: #{tpu_custom_call.1} parent=11 // pred_check_branch
          %351 = sbr.rel (%p349) target = $region16
        $region15: #{tpu_custom_call.1} parent=11 // pred_region
          %s353 = ssub.s32 256, 256
          %354 = vsyncadd [#allocation3], %s353
          %s355 = sshll.u32 [#allocation2], 4
          %s356 = int_to_ptr.vmem [resolvable:$true] %s355
          %361 = dma.hbm_to_vmem [thread:$0]  %s0, 256, %s356, [#allocation3], 128, 128, 8
        $region16: #{tpu_custom_call.1} parent=11 // pred_fallthru
          _
        // Predicated region
        $region17: #{tpu_custom_call.1} parent=11 // pred_check
          %p362 = pneg %p72
        $region18: #{tpu_custom_call.1} parent=11 // pred_check_branch
          %364 = sbr.rel (%p362) target = $region20
        $region19: #{tpu_custom_call.1} parent=11 // pred_region
          _
        $region20: #{tpu_custom_call.1} parent=11 // pred_fallthru
          _
        // Predicated region
        $region21: #{tpu_custom_call.1} parent=11 // pred_check
          %p365 = pneg %p93
        $region22: #{tpu_custom_call.1} parent=11 // pred_check_branch
          %367 = sbr.rel (%p365) target = $region24
        $region23: #{tpu_custom_call.1} parent=11 // pred_region
          %s369 = ssub.s32 1024, 1024
          %370 = vsyncadd [#allocation6], %s369
          %s371 = sshll.u32 [#allocation5], 4
          %s372 = int_to_ptr.vmem [resolvable:$true] %s371
          %377 = dma.hbm_to_vmem [thread:$0]  %s2, 1024, %s372, [#allocation6], 64, 64, 4
        $region24: #{tpu_custom_call.1} parent=11 // pred_fallthru
          _
        // Predicated region
        $region25: #{tpu_custom_call.1} parent=11 // pred_check
          %p378 = pneg %p114
        $region26: #{tpu_custom_call.1} parent=11 // pred_check_branch
          %380 = sbr.rel (%p378) target = $region28
        $region27: #{tpu_custom_call.1} parent=11 // pred_region
          %s382 = ssub.s32 1024, 1024
          %383 = vsyncadd [#allocation6], %s382
          %s384 = sshll.u32 [#allocation7], 4
          %s385 = int_to_ptr.vmem [resolvable:$true] %s384
          %390 = dma.hbm_to_vmem [thread:$0]  %s3, 1024, %s385, [#allocation6], 64, 64, 4
        $region28: #{tpu_custom_call.1} parent=11 // pred_fallthru
          _
        // Predicated region
        $region29: #{tpu_custom_call.1} parent=11 // pred_check
          %p391 = pneg %p135
        $region30: #{tpu_custom_call.1} parent=11 // pred_check_branch
          %393 = sbr.rel (%p391) target = $region32
        $region31: #{tpu_custom_call.1} parent=11 // pred_region
          _
        $region32: #{tpu_custom_call.1} parent=11 // pred_fallthru
          _
        // Predicated region
        $region33: #{tpu_custom_call.1} parent=11 // pred_check
          %p394 = pneg %p156
        $region34: #{tpu_custom_call.1} parent=11 // pred_check_branch
          %396 = sbr.rel (%p394) target = $region36
        $region35: #{tpu_custom_call.1} parent=11 // pred_region
          _
        $region36: #{tpu_custom_call.1} parent=11 // pred_fallthru
          _
        // Predicated region
        $region37: #{tpu_custom_call.1} parent=11 // pred_check
          %p397 = pneg %p177
        $region38: #{tpu_custom_call.1} parent=11 // pred_check_branch
          %399 = sbr.rel (%p397) target = $region40
        $region39: #{tpu_custom_call.1} parent=11 // pred_region
          _
        $region40: #{tpu_custom_call.1} parent=11 // pred_fallthru
          _
        // Predicated region
        $region41: #{tpu_custom_call.1} parent=11 // pred_check
          %p400 = pneg %p198
        $region42: #{tpu_custom_call.1} parent=11 // pred_check_branch
          %402 = sbr.rel (%p400) target = $region44
        $region43: #{tpu_custom_call.1} parent=11 // pred_region
          %s404 = ssub.s32 256, 256
          %405 = vsyncadd [#allocation9], %s404
          %s406 = sshll.u32 [#allocation8], 4
          %s407 = int_to_ptr.vmem [resolvable:$true] %s406
          %412 = dma.hbm_to_vmem [thread:$0]  %s7, 256, %s407, [#allocation9], 128, 128, 8
        $region44: #{tpu_custom_call.1} parent=11 // pred_fallthru
          _
        // Predicated region
        $region45: #{tpu_custom_call.1} parent=11 // pred_check
          %p413 = pneg %p219
        $region46: #{tpu_custom_call.1} parent=11 // pred_check_branch
          %415 = sbr.rel (%p413) target = $region48
        $region47: #{tpu_custom_call.1} parent=11 // pred_region
          %s417 = ssub.s32 1024, 1024
          %418 = vsyncadd [#allocation9], %s417
          %s419 = sshll.u32 [#allocation10], 4
          %s420 = int_to_ptr.vmem [resolvable:$true] %s419
          %425 = dma.hbm_to_vmem [thread:$0]  %s8, 1024, %s420, [#allocation9], 64, 64, 4
        $region48: #{tpu_custom_call.1} parent=11 // pred_fallthru
          _
        // Predicated region
        $region49: #{tpu_custom_call.1} parent=11 // pred_check
          %p426 = pneg %p240
        $region50: #{tpu_custom_call.1} parent=11 // pred_check_branch
          %428 = sbr.rel (%p426) target = $region52
        $region51: #{tpu_custom_call.1} parent=11 // pred_region
          _
        $region52: #{tpu_custom_call.1} parent=11 // pred_fallthru
          _
        // Predicated region
        $region53: #{tpu_custom_call.1} parent=11 // pred_check
          %p429 = pneg %p261
        $region54: #{tpu_custom_call.1} parent=11 // pred_check_branch
          %431 = sbr.rel (%p429) target = $region56
        $region55: #{tpu_custom_call.1} parent=11 // pred_region
          %s433 = ssub.s32 4096, 4096
          %434 = vsyncadd [#allocation12], %s433
          %s435 = sshll.u32 [#allocation11], 4
          %s436 = int_to_ptr.vmem [resolvable:$true] %s435
          %441 = dma.hbm_to_vmem [thread:$0]  %s10, 4096, %s436, [#allocation12], 256, 256, 16
        $region56: #{tpu_custom_call.1} parent=11 // pred_fallthru
          _
        // Predicated region
        $region57: #{tpu_custom_call.1} parent=11 // pred_check
          %p442 = pneg %p282
        $region58: #{tpu_custom_call.1} parent=11 // pred_check_branch
          %444 = sbr.rel (%p442) target = $region60
        $region59: #{tpu_custom_call.1} parent=11 // pred_region
          %s446 = ssub.s32 2048, 2048
          %447 = vsyncadd [#allocation12], %s446
          %s448 = sshll.u32 [#allocation13], 4
          %s449 = int_to_ptr.vmem [resolvable:$true] %s448
          %454 = dma.hbm_to_vmem [thread:$0]  %s11, 2048, %s449, [#allocation12], 64, 64, 4
        $region60: #{tpu_custom_call.1} parent=11 // pred_fallthru
          _
      $region12: #{tpu_custom_call.1} parent=5 // pred_fallthru
        _
      %p455 = scmp.lt.s32.totalorder %s30, 2
      // Predicated region
      $region61: #{tpu_custom_call.1} parent=5 // pred_check
        %p456 = pneg %p455
      $region62: #{tpu_custom_call.1} parent=5 // pred_check_branch
        %458 = sbr.rel (%p456) target = $region64
      $region63: #{tpu_custom_call.1} parent=5 // pred_region
        _
      $region64: #{tpu_custom_call.1} parent=5 // pred_fallthru
        _
      %p459 = scmp.le.s32.totalorder 1, %s30
      %p460 = scmp.lt.s32.totalorder %s30, 3
      %p461 = pnand %p459, %p460
      %p462 = pneg %p461
      // Predicated region
      $region65: #{tpu_custom_call.1} parent=5 // pred_check
        _
      $region66: #{tpu_custom_call.1} parent=5 // pred_check_branch
        %464 = sbr.rel (%p461) target = $region68
      $region67: #{tpu_custom_call.1} parent=5 // pred_region
        %s465 = ssub.s32 %s30, 1
        // Predicated region
        $region69: #{tpu_custom_call.1} parent=67 // pred_check
          %p466 = pneg %p51
        $region70: #{tpu_custom_call.1} parent=67 // pred_check_branch
          %468 = sbr.rel (%p466) target = $region72
        $region71: #{tpu_custom_call.1} parent=67 // pred_region
          %469 = dma.done [#allocation3], 256
        $region72: #{tpu_custom_call.1} parent=67 // pred_fallthru
          _
        // Predicated region
        $region73: #{tpu_custom_call.1} parent=67 // pred_check
          %p470 = pneg %p93
        $region74: #{tpu_custom_call.1} parent=67 // pred_check_branch
          %472 = sbr.rel (%p470) target = $region76
        $region75: #{tpu_custom_call.1} parent=67 // pred_region
          %473 = dma.done [#allocation6], 1024
        $region76: #{tpu_custom_call.1} parent=67 // pred_fallthru
          _
        // Predicated region
        $region77: #{tpu_custom_call.1} parent=67 // pred_check
          %p474 = pneg %p114
        $region78: #{tpu_custom_call.1} parent=67 // pred_check_branch
          %476 = sbr.rel (%p474) target = $region80
        $region79: #{tpu_custom_call.1} parent=67 // pred_region
          %477 = dma.done [#allocation6], 1024
        $region80: #{tpu_custom_call.1} parent=67 // pred_fallthru
          _
        // Predicated region
        $region81: #{tpu_custom_call.1} parent=67 // pred_check
          %p478 = pneg %p198
        $region82: #{tpu_custom_call.1} parent=67 // pred_check_branch
          %480 = sbr.rel (%p478) target = $region84
        $region83: #{tpu_custom_call.1} parent=67 // pred_region
          %481 = dma.done [#allocation9], 256
        $region84: #{tpu_custom_call.1} parent=67 // pred_fallthru
          _
        // Predicated region
        $region85: #{tpu_custom_call.1} parent=67 // pred_check
          %p482 = pneg %p219
        $region86: #{tpu_custom_call.1} parent=67 // pred_check_branch
          %484 = sbr.rel (%p482) target = $region88
        $region87: #{tpu_custom_call.1} parent=67 // pred_region
          %485 = dma.done [#allocation9], 1024
        $region88: #{tpu_custom_call.1} parent=67 // pred_fallthru
          _
        // Predicated region
        $region89: #{tpu_custom_call.1} parent=67 // pred_check
          %p486 = pneg %p261
        $region90: #{tpu_custom_call.1} parent=67 // pred_check_branch
          %488 = sbr.rel (%p486) target = $region92
        $region91: #{tpu_custom_call.1} parent=67 // pred_region
          %489 = dma.done [#allocation12], 4096
        $region92: #{tpu_custom_call.1} parent=67 // pred_fallthru
          _
        // Predicated region
        $region93: #{tpu_custom_call.1} parent=67 // pred_check
          %p490 = pneg %p282
        $region94: #{tpu_custom_call.1} parent=67 // pred_check_branch
          %492 = sbr.rel (%p490) target = $region96
        $region95: #{tpu_custom_call.1} parent=67 // pred_region
          %493 = dma.done [#allocation12], 2048
        $region96: #{tpu_custom_call.1} parent=67 // pred_fallthru
          _
        %p494 = pneg %p51
        %p495 = pneg %p48
        %p496 = pneg %p72
        %p497 = pneg %p69
        %p498 = pneg %p93
        %p499 = pneg %p90
        %p500 = pneg %p114
        %p501 = pneg %p111
        %p502 = pneg %p135
        %p503 = pneg %p132
        %p504 = pneg %p156
        %p505 = pneg %p153
        %p506 = pneg %p177
        %p507 = pneg %p174
        %p508 = pneg %p198
        %p509 = pneg %p195
        %p510 = pneg %p219
        %p511 = pneg %p216
        %p512 = pneg %p240
        %p513 = pneg %p237
        %p514 = pneg %p261
        %p515 = pneg %p258
        %p516 = pneg %p282
        %p517 = pneg %p279
        %p518 = pneg %p308
        %p519 = pneg %p305
        %s520 = sand.u32 %s295, 1
        %s521 = scalar_lea.sflag [#allocation4], %s520
        %s522 = sand.u32 %s295, 1
        %s523 = smul.addr %s522, 8
        %s524 = scalar_lea.vmem [#allocation14], %s523
        %p525 = pneg %p334
        %p526 = pneg %p331
        %s527 = sand.u32 %s321, 1
        %s528 = scalar_lea.sflag [#allocation16], %s527
        %s529 = sand.u32 %s321, 1
        %s530 = smul.addr %s529, 8
        %s531 = scalar_lea.vmem [#allocation15], %s530
        %s533 = smul.u32 %s35, 8
        %v534 = vld [vmem:[%s1] sm:$0x1]
        %v535 = vld [vmem:[#allocation2] sm:$0xff]
        %v536 = vld [vmem:[#allocation2 + $0x8] sm:$0xff]
        %v537 = vmul.f32 %v535, %v535
        %v538 = vmul.f32 %v536, %v536
        %539 = vadd.xlane.f32.xlu0 %v537
        %v540 = vpop.xlane.xlu0 %539
        %541 = vadd.xlane.f32.xlu0 %v538
        %v542 = vpop.xlane.xlu0 %541
        %v543 = vrcp.pop 128.0
        %v544 = vmul.f32 %v540, %v543
        %v545 = vmul.f32 %v542, %v543
        %v546 = vadd.f32 %v544, 1e-06
        %v547 = vadd.f32 %v545, 1e-06
        %v548 = vrsqrt.pop %v546
        %v549 = vrsqrt.pop %v547
        %v550 = vmul.f32 %v535, %v548
        %v551 = vmul.f32 %v536, %v549
        %v553 = vlaneseq
        %v554 = vshrl.u32 %v553, 7
        %v555 = vsub.s32 0, %v554
        %v556 = vrot.slane %v534, %v555
        %v558 = vmul.f32 %v550, %v556
        %v559 = vmul.f32 %v551, %v556
        %v560 = vpack.c.bf16 %v559, %v558
        %s561 = scalar_lea.vmem [#allocation2], %s533
        %v562 = vld [vmem:[%s561] sm:$0xff]
        %v563 = vmul.f32 %v562, %v562
        %564 = vadd.xlane.f32.xlu0 %v563
        %v565 = vpop.xlane.xlu0 %564
        %v566 = vmul.f32 %v565, %v543
        %v567 = vadd.f32 %v566, 1e-06
        %v568 = vrsqrt.pop %v567
        %v569 = vmul.f32 %v562, %v568
        %v570 = vmul.f32 %v569, %v556
        %v571 = vpack.c.bf16 %v570, %v570
        %v572 = vld [vmem:[#allocation5] sm:$0xf]
        %v573 = vld [vmem:[#allocation5 + $0x4] sm:$0xf]
        %v574 = vld [vmem:[#allocation5 + $0x8] sm:$0xf]
        %v575 = vld [vmem:[#allocation5 + $0xc] sm:$0xf]
        %v576 = vld [vmem:[#allocation5 + $0x10] sm:$0xf]
        %v577 = vld [vmem:[#allocation5 + $0x14] sm:$0xf]
        %v578 = vld [vmem:[#allocation5 + $0x18] sm:$0xf]
        %v579 = vld [vmem:[#allocation5 + $0x1c] sm:$0xf]
        %v580 = vld [vmem:[#allocation5 + $0x20] sm:$0xf]
        %v581 = vld [vmem:[#allocation5 + $0x24] sm:$0xf]
        %v582 = vld [vmem:[#allocation5 + $0x28] sm:$0xf]
        %v583 = vld [vmem:[#allocation5 + $0x2c] sm:$0xf]
        %v584 = vld [vmem:[#allocation5 + $0x30] sm:$0xf]
        %v585 = vld [vmem:[#allocation5 + $0x34] sm:$0xf]
        %v586 = vld [vmem:[#allocation5 + $0x38] sm:$0xf]
        %v587 = vld [vmem:[#allocation5 + $0x3c] sm:$0xf]
        %v604 = vunpack.c.l.b16 %v572
        %v605 = vunpack.c.l.b16 %v573
        %v606 = vunpack.c.l.b16 %v574
        %v607 = vunpack.c.l.b16 %v575
        %v608 = vunpack.c.l.b16 %v576
        %v609 = vunpack.c.l.b16 %v577
        %v610 = vunpack.c.l.b16 %v578
        %v611 = vunpack.c.l.b16 %v579
        %v612 = vunpack.c.l.b16 %v580
        %v613 = vunpack.c.l.b16 %v581
        %v614 = vunpack.c.l.b16 %v582
        %v615 = vunpack.c.l.b16 %v583
        %v616 = vunpack.c.l.b16 %v584
        %v617 = vunpack.c.l.b16 %v585
        %v618 = vunpack.c.l.b16 %v586
        %v619 = vunpack.c.l.b16 %v587
        %v620 = vpack.c.b16 %v605, %v604
        %v621 = vpack.c.b16 %v607, %v606
        %v622 = vpack.c.b16 %v609, %v608
        %v623 = vpack.c.b16 %v611, %v610
        %v624 = vpack.c.b16 %v613, %v612
        %v625 = vpack.c.b16 %v615, %v614
        %v626 = vpack.c.b16 %v617, %v616
        %v627 = vpack.c.b16 %v619, %v618
        %636 = vmatprep.subr.bf16.mxu0 0
        %637 = vmatpush1.bf16.msra.mxu0 %v620
        %638 = vmatprep.subr.bf16.mxu0 0
        %639 = vmatpush1.bf16.msra.mxu0 %v621
        %640 = vmatprep.subr.bf16.mxu0 0
        %641 = vmatpush1.bf16.msra.mxu0 %v622
        %642 = vmatprep.subr.bf16.mxu0 0
        %643 = vmatpush1.bf16.msra.mxu0 %v623
        %644 = vmatprep.subr.bf16.mxu0 0
        %645 = vmatpush1.bf16.msra.mxu0 %v624
        %646 = vmatprep.subr.bf16.mxu0 0
        %647 = vmatpush1.bf16.msra.mxu0 %v625
        %648 = vmatprep.subr.bf16.mxu0 0
        %649 = vmatpush1.bf16.msra.mxu0 %v626
        %650 = vmatprep.subr.bf16.mxu0 0
        %651 = vmatpush1.bf16.msra.mxu0 %v627
        %652 = vmatprep.subr.bf16.mxu0 0
        %653 = vmatpush1.bf16.msra.mxu0 0
        %654 = vmatprep.subr.bf16.mxu0 0
        %655 = vmatpush1.bf16.msra.mxu0 0
        %656 = vmatprep.subr.bf16.mxu0 0
        %657 = vmatpush1.bf16.msra.mxu0 0
        %658 = vmatprep.subr.bf16.mxu0 0
        %659 = vmatpush1.bf16.msra.mxu0 0
        %660 = vmatprep.subr.bf16.mxu0 0
        %661 = vmatpush1.bf16.msra.mxu0 0
        %662 = vmatprep.subr.bf16.mxu0 0
        %663 = vmatpush1.bf16.msra.mxu0 0
        %664 = vmatprep.subr.bf16.mxu0 0
        %665 = vmatpush1.bf16.msra.mxu0 0
        %666 = vmatprep.subr.bf16.mxu0 0
        %667 = vmatpush1.bf16.msra.mxu0 0
        %668 = vmatprep.mubr.bf16.mxu0 0
        %669 = vmatmul.mubr.bf16.gmra.mrb[0].mxu0 %v571
        %v670 = vpop.f32.mrb[0].mxu0
        %v671 = vadd.f32 0.0, %v670
        %v672 = vpop.f32.mrb[0].mxu0
        %v673 = vpop.f32.mrb[0].mxu0
        %v674 = vpop.f32.mrb[0].mxu0
        %675 = vdwg.mxu0
        %v676 = vld [vmem:[#allocation7] sm:$0xf]
        %v677 = vld [vmem:[#allocation7 + $0x4] sm:$0xf]
        %v678 = vld [vmem:[#allocation7 + $0x8] sm:$0xf]
        %v679 = vld [vmem:[#allocation7 + $0xc] sm:$0xf]
        %v680 = vld [vmem:[#allocation7 + $0x10] sm:$0xf]
        %v681 = vld [vmem:[#allocation7 + $0x14] sm:$0xf]
        %v682 = vld [vmem:[#allocation7 + $0x18] sm:$0xf]
        %v683 = vld [vmem:[#allocation7 + $0x1c] sm:$0xf]
        %v684 = vld [vmem:[#allocation7 + $0x20] sm:$0xf]
        %v685 = vld [vmem:[#allocation7 + $0x24] sm:$0xf]
        %v686 = vld [vmem:[#allocation7 + $0x28] sm:$0xf]
        %v687 = vld [vmem:[#allocation7 + $0x2c] sm:$0xf]
        %v688 = vld [vmem:[#allocation7 + $0x30] sm:$0xf]
        %v689 = vld [vmem:[#allocation7 + $0x34] sm:$0xf]
        %v690 = vld [vmem:[#allocation7 + $0x38] sm:$0xf]
        %v691 = vld [vmem:[#allocation7 + $0x3c] sm:$0xf]
        %v708 = vunpack.c.l.b16 %v676
        %v709 = vunpack.c.l.b16 %v677
        %v710 = vunpack.c.l.b16 %v678
        %v711 = vunpack.c.l.b16 %v679
        %v712 = vunpack.c.l.b16 %v680
        %v713 = vunpack.c.l.b16 %v681
        %v714 = vunpack.c.l.b16 %v682
        %v715 = vunpack.c.l.b16 %v683
        %v716 = vunpack.c.l.b16 %v684
        %v717 = vunpack.c.l.b16 %v685
        %v718 = vunpack.c.l.b16 %v686
        %v719 = vunpack.c.l.b16 %v687
        %v720 = vunpack.c.l.b16 %v688
        %v721 = vunpack.c.l.b16 %v689
        %v722 = vunpack.c.l.b16 %v690
        %v723 = vunpack.c.l.b16 %v691
        %v724 = vpack.c.b16 %v709, %v708
        %v725 = vpack.c.b16 %v711, %v710
        %v726 = vpack.c.b16 %v713, %v712
        %v727 = vpack.c.b16 %v715, %v714
        %v728 = vpack.c.b16 %v717, %v716
        %v729 = vpack.c.b16 %v719, %v718
        %v730 = vpack.c.b16 %v721, %v720
        %v731 = vpack.c.b16 %v723, %v722
        %740 = vmatprep.subr.bf16.mxu0 0
        %741 = vmatpush1.bf16.msra.mxu0 %v724
        %742 = vmatprep.subr.bf16.mxu0 0
        %743 = vmatpush1.bf16.msra.mxu0 %v725
        %744 = vmatprep.subr.bf16.mxu0 0
        %745 = vmatpush1.bf16.msra.mxu0 %v726
        %746 = vmatprep.subr.bf16.mxu0 0
        %747 = vmatpush1.bf16.msra.mxu0 %v727
        %748 = vmatprep.subr.bf16.mxu0 0
        %749 = vmatpush1.bf16.msra.mxu0 %v728
        %750 = vmatprep.subr.bf16.mxu0 0
        %751 = vmatpush1.bf16.msra.mxu0 %v729
        %752 = vmatprep.subr.bf16.mxu0 0
        %753 = vmatpush1.bf16.msra.mxu0 %v730
        %754 = vmatprep.subr.bf16.mxu0 0
        %755 = vmatpush1.bf16.msra.mxu0 %v731
        %756 = vmatprep.subr.bf16.mxu0 0
        %757 = vmatpush1.bf16.msra.mxu0 0
        %758 = vmatprep.subr.bf16.mxu0 0
        %759 = vmatpush1.bf16.msra.mxu0 0
        %760 = vmatprep.subr.bf16.mxu0 0
        %761 = vmatpush1.bf16.msra.mxu0 0
        %762 = vmatprep.subr.bf16.mxu0 0
        %763 = vmatpush1.bf16.msra.mxu0 0
        %764 = vmatprep.subr.bf16.mxu0 0
        %765 = vmatpush1.bf16.msra.mxu0 0
        %766 = vmatprep.subr.bf16.mxu0 0
        %767 = vmatpush1.bf16.msra.mxu0 0
        %768 = vmatprep.subr.bf16.mxu0 0
        %769 = vmatpush1.bf16.msra.mxu0 0
        %770 = vmatprep.subr.bf16.mxu0 0
        %771 = vmatpush1.bf16.msra.mxu0 0
        %772 = vmatprep.mubr.bf16.mxu0 0
        %773 = vmatmul.mubr.bf16.gmra.mrb[0].mxu0 %v560
        %v774 = vpop.f32.mrb[0].mxu0
        %v775 = vadd.f32 0.0, %v774
        %v776 = vpop.f32.mrb[0].mxu0
        %v777 = vpop.f32.mrb[0].mxu0
        %v778 = vadd.f32 0.0, %v777
        %v779 = vpop.f32.mrb[0].mxu0
        %780 = vdwg.mxu0
        %v781 = vld [vmem:[%s4] sm:$0x1]
        %v782 = vld [vmem:[%s5] sm:$0x1]
        %v783 = vld [vmem:[%s6] sm:$0xff]
        %v784 = vld [vmem:[%s6 + $0x8] sm:$0xff]
        %v787 = vcombine.high %v783, %v783
        %v789 = vunpack.c.l.s4 1966171168
        %v790 = vunpack.c.0.s8 %v789
        %v791 = vlaneseq
        %v792 = vshrl.u32 %v791, 7
        %v793 = vsub.s32 %v790, %v792
        %v794 = vrot.slane %v783, %v793
        %v796 = vunpack.c.l.s4 1966171168
        %v797 = vunpack.c.0.s8 %v796
        %v798 = vlaneseq
        %v799 = vshrl.u32 %v798, 7
        %v800 = vsub.s32 %v797, %v799
        %v801 = vrot.slane %v787, %v800
        %v802 = vcombine.high %v794, %v794
        %v803 = vcombine.high %v801, %v801
        %v805 = vunpack.c.l.s4 1966171168
        %v806 = vunpack.c.0.s8 %v805
        %v807 = vlaneseq
        %v808 = vshrl.u32 %v807, 7
        %v809 = vsub.s32 %v806, %v808
        %v810 = vrot.slane %v794, %v809
        %v812 = vunpack.c.l.s4 1966171168
        %v813 = vunpack.c.0.s8 %v812
        %v814 = vlaneseq
        %v815 = vshrl.u32 %v814, 7
        %v816 = vsub.s32 %v813, %v815
        %v817 = vrot.slane %v801, %v816
        %v819 = vunpack.c.l.s4 1966171168
        %v820 = vunpack.c.0.s8 %v819
        %v821 = vlaneseq
        %v822 = vshrl.u32 %v821, 7
        %v823 = vsub.s32 %v820, %v822
        %v824 = vrot.slane %v802, %v823
        %v826 = vunpack.c.l.s4 1966171168
        %v827 = vunpack.c.0.s8 %v826
        %v828 = vlaneseq
        %v829 = vshrl.u32 %v828, 7
        %v830 = vsub.s32 %v827, %v829
        %v831 = vrot.slane %v803, %v830
        %v832 = vcombine.high %v810, %v810
        %v833 = vcombine.high %v817, %v817
        %v834 = vcombine.high %v824, %v824
        %v835 = vcombine.high %v831, %v831
        %v836 = vcombine.high %v784, %v784
        %v838 = vunpack.c.l.s4 1966171168
        %v839 = vunpack.c.0.s8 %v838
        %v840 = vlaneseq
        %v841 = vshrl.u32 %v840, 7
        %v842 = vsub.s32 %v839, %v841
        %v843 = vrot.slane %v784, %v842
        %v845 = vunpack.c.l.s4 1966171168
        %v846 = vunpack.c.0.s8 %v845
        %v847 = vlaneseq
        %v848 = vshrl.u32 %v847, 7
        %v849 = vsub.s32 %v846, %v848
        %v850 = vrot.slane %v836, %v849
        %v851 = vcombine.high %v843, %v843
        %v852 = vcombine.high %v850, %v850
        %v854 = vunpack.c.l.s4 1966171168
        %v855 = vunpack.c.0.s8 %v854
        %v856 = vlaneseq
        %v857 = vshrl.u32 %v856, 7
        %v858 = vsub.s32 %v855, %v857
        %v859 = vrot.slane %v843, %v858
        %v861 = vunpack.c.l.s4 1966171168
        %v862 = vunpack.c.0.s8 %v861
        %v863 = vlaneseq
        %v864 = vshrl.u32 %v863, 7
        %v865 = vsub.s32 %v862, %v864
        %v866 = vrot.slane %v850, %v865
        %v868 = vunpack.c.l.s4 1966171168
        %v869 = vunpack.c.0.s8 %v868
        %v870 = vlaneseq
        %v871 = vshrl.u32 %v870, 7
        %v872 = vsub.s32 %v869, %v871
        %v873 = vrot.slane %v851, %v872
        %v875 = vunpack.c.l.s4 1966171168
        %v876 = vunpack.c.0.s8 %v875
        %v877 = vlaneseq
        %v878 = vshrl.u32 %v877, 7
        %v879 = vsub.s32 %v876, %v878
        %v880 = vrot.slane %v852, %v879
        %v881 = vcombine.high %v859, %v859
        %v882 = vcombine.high %v866, %v866
        %v883 = vcombine.high %v873, %v873
        %v884 = vcombine.high %v880, %v880
        %v885 = vld [vmem:[#allocation8] sm:$0xff]
        %v886 = vld [vmem:[#allocation8 + $0x8] sm:$0xff]
        %v889 = vcombine.high %v885, %v885
        %v891 = vunpack.c.l.s4 1966171168
        %v892 = vunpack.c.0.s8 %v891
        %v893 = vlaneseq
        %v894 = vshrl.u32 %v893, 7
        %v895 = vsub.s32 %v892, %v894
        %v896 = vrot.slane %v885, %v895
        %v898 = vunpack.c.l.s4 1966171168
        %v899 = vunpack.c.0.s8 %v898
        %v900 = vlaneseq
        %v901 = vshrl.u32 %v900, 7
        %v902 = vsub.s32 %v899, %v901
        %v903 = vrot.slane %v889, %v902
        %v904 = vcombine.high %v896, %v896
        %v905 = vcombine.high %v903, %v903
        %v907 = vunpack.c.l.s4 1966171168
        %v908 = vunpack.c.0.s8 %v907
        %v909 = vlaneseq
        %v910 = vshrl.u32 %v909, 7
        %v911 = vsub.s32 %v908, %v910
        %v912 = vrot.slane %v896, %v911
        %v914 = vunpack.c.l.s4 1966171168
        %v915 = vunpack.c.0.s8 %v914
        %v916 = vlaneseq
        %v917 = vshrl.u32 %v916, 7
        %v918 = vsub.s32 %v915, %v917
        %v919 = vrot.slane %v903, %v918
        %v921 = vunpack.c.l.s4 1966171168
        %v922 = vunpack.c.0.s8 %v921
        %v923 = vlaneseq
        %v924 = vshrl.u32 %v923, 7
        %v925 = vsub.s32 %v922, %v924
        %v926 = vrot.slane %v904, %v925
        %v928 = vunpack.c.l.s4 1966171168
        %v929 = vunpack.c.0.s8 %v928
        %v930 = vlaneseq
        %v931 = vshrl.u32 %v930, 7
        %v932 = vsub.s32 %v929, %v931
        %v933 = vrot.slane %v905, %v932
        %v934 = vcombine.high %v912, %v912
        %v935 = vcombine.high %v919, %v919
        %v936 = vcombine.high %v926, %v926
        %v937 = vcombine.high %v933, %v933
        %v938 = vcombine.high %v886, %v886
        %v940 = vunpack.c.l.s4 1966171168
        %v941 = vunpack.c.0.s8 %v940
        %v942 = vlaneseq
        %v943 = vshrl.u32 %v942, 7
        %v944 = vsub.s32 %v941, %v943
        %v945 = vrot.slane %v886, %v944
        %v947 = vunpack.c.l.s4 1966171168
        %v948 = vunpack.c.0.s8 %v947
        %v949 = vlaneseq
        %v950 = vshrl.u32 %v949, 7
        %v951 = vsub.s32 %v948, %v950
        %v952 = vrot.slane %v938, %v951
        %v953 = vcombine.high %v945, %v945
        %v954 = vcombine.high %v952, %v952
        %v956 = vunpack.c.l.s4 1966171168
        %v957 = vunpack.c.0.s8 %v956
        %v958 = vlaneseq
        %v959 = vshrl.u32 %v958, 7
        %v960 = vsub.s32 %v957, %v959
        %v961 = vrot.slane %v945, %v960
        %v963 = vunpack.c.l.s4 1966171168
        %v964 = vunpack.c.0.s8 %v963
        %v965 = vlaneseq
        %v966 = vshrl.u32 %v965, 7
        %v967 = vsub.s32 %v964, %v966
        %v968 = vrot.slane %v952, %v967
        %v970 = vunpack.c.l.s4 1966171168
        %v971 = vunpack.c.0.s8 %v970
        %v972 = vlaneseq
        %v973 = vshrl.u32 %v972, 7
        %v974 = vsub.s32 %v971, %v973
        %v975 = vrot.slane %v953, %v974
        %v977 = vunpack.c.l.s4 1966171168
        %v978 = vunpack.c.0.s8 %v977
        %v979 = vlaneseq
        %v980 = vshrl.u32 %v979, 7
        %v981 = vsub.s32 %v978, %v980
        %v982 = vrot.slane %v954, %v981
        %v983 = vcombine.high %v961, %v961
        %v984 = vcombine.high %v968, %v968
        %v985 = vcombine.high %v975, %v975
        %v986 = vcombine.high %v982, %v982
        %s987 = scalar_lea.vmem %s6, %s533
        %v988 = vld [vmem:[%s987] sm:$0xff]
        %v990 = vcombine.high %v988, %v988
        %v992 = vunpack.c.l.s4 1966171168
        %v993 = vunpack.c.0.s8 %v992
        %v994 = vlaneseq
        %v995 = vshrl.u32 %v994, 7
        %v996 = vsub.s32 %v993, %v995
        %v997 = vrot.slane %v988, %v996
        %v999 = vunpack.c.l.s4 1966171168
        %v1000 = vunpack.c.0.s8 %v999
        %v1001 = vlaneseq
        %v1002 = vshrl.u32 %v1001, 7
        %v1003 = vsub.s32 %v1000, %v1002
        %v1004 = vrot.slane %v990, %v1003
        %v1005 = vcombine.high %v997, %v997
        %v1006 = vcombine.high %v1004, %v1004
        %v1008 = vunpack.c.l.s4 1966171168
        %v1009 = vunpack.c.0.s8 %v1008
        %v1010 = vlaneseq
        %v1011 = vshrl.u32 %v1010, 7
        %v1012 = vsub.s32 %v1009, %v1011
        %v1013 = vrot.slane %v997, %v1012
        %v1015 = vunpack.c.l.s4 1966171168
        %v1016 = vunpack.c.0.s8 %v1015
        %v1017 = vlaneseq
        %v1018 = vshrl.u32 %v1017, 7
        %v1019 = vsub.s32 %v1016, %v1018
        %v1020 = vrot.slane %v1004, %v1019
        %v1022 = vunpack.c.l.s4 1966171168
        %v1023 = vunpack.c.0.s8 %v1022
        %v1024 = vlaneseq
        %v1025 = vshrl.u32 %v1024, 7
        %v1026 = vsub.s32 %v1023, %v1025
        %v1027 = vrot.slane %v1005, %v1026
        %v1029 = vunpack.c.l.s4 1966171168
        %v1030 = vunpack.c.0.s8 %v1029
        %v1031 = vlaneseq
        %v1032 = vshrl.u32 %v1031, 7
        %v1033 = vsub.s32 %v1030, %v1032
        %v1034 = vrot.slane %v1006, %v1033
        %v1035 = vcombine.high %v1013, %v1013
        %v1036 = vcombine.high %v1020, %v1020
        %v1037 = vcombine.high %v1027, %v1027
        %v1038 = vcombine.high %v1034, %v1034
        %s1039 = scalar_lea.vmem [#allocation8], %s533
        %v1040 = vld [vmem:[%s1039] sm:$0xff]
        %v1042 = vcombine.high %v1040, %v1040
        %v1044 = vunpack.c.l.s4 1966171168
        %v1045 = vunpack.c.0.s8 %v1044
        %v1046 = vlaneseq
        %v1047 = vshrl.u32 %v1046, 7
        %v1048 = vsub.s32 %v1045, %v1047
        %v1049 = vrot.slane %v1040, %v1048
        %v1051 = vunpack.c.l.s4 1966171168
        %v1052 = vunpack.c.0.s8 %v1051
        %v1053 = vlaneseq
        %v1054 = vshrl.u32 %v1053, 7
        %v1055 = vsub.s32 %v1052, %v1054
        %v1056 = vrot.slane %v1042, %v1055
        %v1057 = vcombine.high %v1049, %v1049
        %v1058 = vcombine.high %v1056, %v1056
        %v1060 = vunpack.c.l.s4 1966171168
        %v1061 = vunpack.c.0.s8 %v1060
        %v1062 = vlaneseq
        %v1063 = vshrl.u32 %v1062, 7
        %v1064 = vsub.s32 %v1061, %v1063
        %v1065 = vrot.slane %v1049, %v1064
        %v1067 = vunpack.c.l.s4 1966171168
        %v1068 = vunpack.c.0.s8 %v1067
        %v1069 = vlaneseq
        %v1070 = vshrl.u32 %v1069, 7
        %v1071 = vsub.s32 %v1068, %v1070
        %v1072 = vrot.slane %v1056, %v1071
        %v1074 = vunpack.c.l.s4 1966171168
        %v1075 = vunpack.c.0.s8 %v1074
        %v1076 = vlaneseq
        %v1077 = vshrl.u32 %v1076, 7
        %v1078 = vsub.s32 %v1075, %v1077
        %v1079 = vrot.slane %v1057, %v1078
        %v1081 = vunpack.c.l.s4 1966171168
        %v1082 = vunpack.c.0.s8 %v1081
        %v1083 = vlaneseq
        %v1084 = vshrl.u32 %v1083, 7
        %v1085 = vsub.s32 %v1082, %v1084
        %v1086 = vrot.slane %v1058, %v1085
        %v1087 = vcombine.high %v1065, %v1065
        %v1088 = vcombine.high %v1072, %v1072
        %v1089 = vcombine.high %v1079, %v1079
        %v1090 = vcombine.high %v1086, %v1086
        %1092 = vrot.lane.b32.xlu0 %v671, 96
        %v1093 = vpop.permute.xlu0 %1092
        %1095 = vrot.lane.b32.xlu0 %v671, 64
        %v1096 = vpop.permute.xlu0 %1095
        %1098 = vrot.lane.b32.xlu0 %v671, 32
        %v1099 = vpop.permute.xlu0 %1098
        %v1101 = vcombine.low %v671, %v1096
        %v1102 = vcombine.high %v671, %v1096
        %v1104 = vunpack.c.l.s4 1983009808
        %v1105 = vunpack.c.0.s8 %v1104
        %v1106 = vlaneseq
        %v1107 = vshrl.u32 %v1106, 7
        %v1108 = vsub.s32 %v1105, %v1107
        %v1109 = vrot.slane %v1101, %v1108
        %v1111 = vunpack.c.l.s4 1983009808
        %v1112 = vunpack.c.0.s8 %v1111
        %v1113 = vlaneseq
        %v1114 = vshrl.u32 %v1113, 7
        %v1115 = vsub.s32 %v1112, %v1114
        %v1116 = vrot.slane %v1102, %v1115
        %v1117 = vcombine.low %v1093, %v1099
        %v1118 = vcombine.high %v1093, %v1099
        %v1120 = vunpack.c.l.s4 1983009808
        %v1121 = vunpack.c.0.s8 %v1120
        %v1122 = vlaneseq
        %v1123 = vshrl.u32 %v1122, 7
        %v1124 = vsub.s32 %v1121, %v1123
        %v1125 = vrot.slane %v1117, %v1124
        %v1127 = vunpack.c.l.s4 1983009808
        %v1128 = vunpack.c.0.s8 %v1127
        %v1129 = vlaneseq
        %v1130 = vshrl.u32 %v1129, 7
        %v1131 = vsub.s32 %v1128, %v1130
        %v1132 = vrot.slane %v1118, %v1131
        %v1133 = vcombine.low %v1109, %v1125
        %v1134 = vcombine.high %v1109, %v1125
        %v1136 = vunpack.c.l.s4 1934713408
        %v1137 = vunpack.c.0.s8 %v1136
        %v1138 = vlaneseq
        %v1139 = vshrl.u32 %v1138, 7
        %v1140 = vsub.s32 %v1137, %v1139
        %v1141 = vrot.slane %v1133, %v1140
        %v1143 = vunpack.c.l.s4 1934713408
        %v1144 = vunpack.c.0.s8 %v1143
        %v1145 = vlaneseq
        %v1146 = vshrl.u32 %v1145, 7
        %v1147 = vsub.s32 %v1144, %v1146
        %v1148 = vrot.slane %v1134, %v1147
        %v1149 = vcombine.low %v1116, %v1132
        %v1150 = vcombine.high %v1116, %v1132
        %v1152 = vunpack.c.l.s4 1934713408
        %v1153 = vunpack.c.0.s8 %v1152
        %v1154 = vlaneseq
        %v1155 = vshrl.u32 %v1154, 7
        %v1156 = vsub.s32 %v1153, %v1155
        %v1157 = vrot.slane %v1149, %v1156
        %v1159 = vunpack.c.l.s4 1934713408
        %v1160 = vunpack.c.0.s8 %v1159
        %v1161 = vlaneseq
        %v1162 = vshrl.u32 %v1161, 7
        %v1163 = vsub.s32 %v1160, %v1162
        %v1164 = vrot.slane %v1150, %v1163
        %v1165 = vcombine.high %v1141, 0.0
        %v1166 = vcombine.high %v1148, 0.0
        %v1167 = vcombine.high %v1157, 0.0
        %v1168 = vcombine.high %v1164, 0.0
        %v1169 = vmul.f32 %v1141, %v1141
        %v1170 = vmul.f32 %v1165, %v1165
        %v1171 = vmul.f32 %v1148, %v1148
        %v1172 = vmul.f32 %v1166, %v1166
        %v1173 = vmul.f32 %v1157, %v1157
        %v1174 = vmul.f32 %v1167, %v1167
        %v1175 = vmul.f32 %v1164, %v1164
        %v1176 = vmul.f32 %v1168, %v1168
        %vm1177 = vcmask 257024
        %v1178 = vsel %vm1177, %v1169, 0.0
        %1179 = vadd.xlane.f32.xlu0 %v1178
        %v1180 = vpop.xlane.xlu0 %1179
        %v1181 = vsel %vm1177, %v1170, 0.0
        %1182 = vadd.xlane.f32.xlu0 %v1181
        %v1183 = vpop.xlane.xlu0 %1182
        %v1184 = vsel %vm1177, %v1171, 0.0
        %1185 = vadd.xlane.f32.xlu0 %v1184
        %v1186 = vpop.xlane.xlu0 %1185
        %v1187 = vsel %vm1177, %v1172, 0.0
        %1188 = vadd.xlane.f32.xlu0 %v1187
        %v1189 = vpop.xlane.xlu0 %1188
        %v1190 = vsel %vm1177, %v1173, 0.0
        %1191 = vadd.xlane.f32.xlu0 %v1190
        %v1192 = vpop.xlane.xlu0 %1191
        %v1193 = vsel %vm1177, %v1174, 0.0
        %1194 = vadd.xlane.f32.xlu0 %v1193
        %v1195 = vpop.xlane.xlu0 %1194
        %v1196 = vsel %vm1177, %v1175, 0.0
        %1197 = vadd.xlane.f32.xlu0 %v1196
        %v1198 = vpop.xlane.xlu0 %1197
        %v1199 = vsel %vm1177, %v1176, 0.0
        %1200 = vadd.xlane.f32.xlu0 %v1199
        %v1201 = vpop.xlane.xlu0 %1200
        %v1202 = vrcp.pop 32.0
        %v1203 = vmul.f32 %v1180, %v1202
        %v1204 = vmul.f32 %v1183, %v1202
        %v1205 = vmul.f32 %v1186, %v1202
        %v1206 = vmul.f32 %v1189, %v1202
        %v1207 = vmul.f32 %v1192, %v1202
        %v1208 = vmul.f32 %v1195, %v1202
        %v1209 = vmul.f32 %v1198, %v1202
        %v1210 = vmul.f32 %v1201, %v1202
        %v1211 = vadd.f32 %v1203, 1e-06
        %v1212 = vadd.f32 %v1204, 1e-06
        %v1213 = vadd.f32 %v1205, 1e-06
        %v1214 = vadd.f32 %v1206, 1e-06
        %v1215 = vadd.f32 %v1207, 1e-06
        %v1216 = vadd.f32 %v1208, 1e-06
        %v1217 = vadd.f32 %v1209, 1e-06
        %v1218 = vadd.f32 %v1210, 1e-06
        %v1219 = vrsqrt.pop %v1211
        %v1220 = vrsqrt.pop %v1212
        %v1221 = vrsqrt.pop %v1213
        %v1222 = vrsqrt.pop %v1214
        %v1223 = vrsqrt.pop %v1215
        %v1224 = vrsqrt.pop %v1216
        %v1225 = vrsqrt.pop %v1217
        %v1226 = vrsqrt.pop %v1218
        %v1227 = vmul.f32 %v1141, %v1219
        %v1228 = vmul.f32 %v1165, %v1220
        %v1229 = vmul.f32 %v1148, %v1221
        %v1230 = vmul.f32 %v1166, %v1222
        %v1231 = vmul.f32 %v1157, %v1223
        %v1232 = vmul.f32 %v1167, %v1224
        %v1233 = vmul.f32 %v1164, %v1225
        %v1234 = vmul.f32 %v1168, %v1226
        %v1236 = vlaneseq
        %v1237 = vshrl.u32 %v1236, 7
        %v1238 = vsub.s32 0, %v1237
        %v1239 = vrot.slane %v781, %v1238
        %v1241 = vmul.f32 %v1227, %v1239
        %v1242 = vmul.f32 %v1228, %v1239
        %v1243 = vmul.f32 %v1229, %v1239
        %v1244 = vmul.f32 %v1230, %v1239
        %v1245 = vmul.f32 %v1231, %v1239
        %v1246 = vmul.f32 %v1232, %v1239
        %v1247 = vmul.f32 %v1233, %v1239
        %v1248 = vmul.f32 %v1234, %v1239
        %v1249 = vlaneseq
        %v1250 = vshrl.u32 %v1249, 7
        %v1251 = vsub.s32 0, %v1250
        %v1252 = vrot.slane %v1013, %v1251
        %v1253 = vlaneseq
        %v1254 = vshrl.u32 %v1253, 7
        %v1255 = vsub.s32 0, %v1254
        %v1256 = vrot.slane %v1027, %v1255
        %v1257 = vlaneseq
        %v1258 = vshrl.u32 %v1257, 7
        %v1259 = vsub.s32 0, %v1258
        %v1260 = vrot.slane %v1035, %v1259
        %v1261 = vlaneseq
        %v1262 = vshrl.u32 %v1261, 7
        %v1263 = vsub.s32 0, %v1262
        %v1264 = vrot.slane %v1037, %v1263
        %v1265 = vlaneseq
        %v1266 = vshrl.u32 %v1265, 7
        %v1267 = vsub.s32 0, %v1266
        %v1268 = vrot.slane %v1020, %v1267
        %v1269 = vlaneseq
        %v1270 = vshrl.u32 %v1269, 7
        %v1271 = vsub.s32 0, %v1270
        %v1272 = vrot.slane %v1034, %v1271
        %v1273 = vlaneseq
        %v1274 = vshrl.u32 %v1273, 7
        %v1275 = vsub.s32 0, %v1274
        %v1276 = vrot.slane %v1036, %v1275
        %v1277 = vlaneseq
        %v1278 = vshrl.u32 %v1277, 7
        %v1279 = vsub.s32 0, %v1278
        %v1280 = vrot.slane %v1038, %v1279
        %v1289 = vmul.f32 %v1241, %v1252
        %v1290 = vmul.f32 %v1242, %v1256
        %v1291 = vmul.f32 %v1243, %v1260
        %v1292 = vmul.f32 %v1244, %v1264
        %v1293 = vmul.f32 %v1245, %v1268
        %v1294 = vmul.f32 %v1246, %v1272
        %v1295 = vmul.f32 %v1247, %v1276
        %v1296 = vmul.f32 %v1248, %v1280
        %1305 = vrot.lane.b32.xlu0 %v1241, 112
        %v1306 = vpop.permute.xlu0 %1305
        %1307 = vrot.lane.b32.xlu0 %v1242, 112
        %v1308 = vpop.permute.xlu0 %1307
        %1309 = vrot.lane.b32.xlu0 %v1243, 112
        %v1310 = vpop.permute.xlu0 %1309
        %1311 = vrot.lane.b32.xlu0 %v1244, 112
        %v1312 = vpop.permute.xlu0 %1311
        %1313 = vrot.lane.b32.xlu0 %v1245, 112
        %v1314 = vpop.permute.xlu0 %1313
        %1315 = vrot.lane.b32.xlu0 %v1246, 112
        %v1316 = vpop.permute.xlu0 %1315
        %1317 = vrot.lane.b32.xlu0 %v1247, 112
        %v1318 = vpop.permute.xlu0 %1317
        %1319 = vrot.lane.b32.xlu0 %v1248, 112
        %v1320 = vpop.permute.xlu0 %1319
        %1329 = vrot.lane.b32.xlu0 %v1241, 16
        %v1330 = vpop.permute.xlu0 %1329
        %1331 = vrot.lane.b32.xlu0 %v1242, 16
        %v1332 = vpop.permute.xlu0 %1331
        %1333 = vrot.lane.b32.xlu0 %v1243, 16
        %v1334 = vpop.permute.xlu0 %1333
        %1335 = vrot.lane.b32.xlu0 %v1244, 16
        %v1336 = vpop.permute.xlu0 %1335
        %1337 = vrot.lane.b32.xlu0 %v1245, 16
        %v1338 = vpop.permute.xlu0 %1337
        %1339 = vrot.lane.b32.xlu0 %v1246, 16
        %v1340 = vpop.permute.xlu0 %1339
        %1341 = vrot.lane.b32.xlu0 %v1247, 16
        %v1342 = vpop.permute.xlu0 %1341
        %1343 = vrot.lane.b32.xlu0 %v1248, 16
        %v1344 = vpop.permute.xlu0 %1343
        %vm1353 = vcmask 130048
        %v1354 = vsel %vm1353, %v1306, %v1330
        %v1355 = vsel %vm1353, %v1308, %v1332
        %v1356 = vsel %vm1353, %v1310, %v1334
        %v1357 = vsel %vm1353, %v1312, %v1336
        %v1358 = vsel %vm1353, %v1314, %v1338
        %v1359 = vsel %vm1353, %v1316, %v1340
        %v1360 = vsel %vm1353, %v1318, %v1342
        %v1361 = vsel %vm1353, %v1320, %v1344
        %v1362 = vlaneseq
        %v1363 = vshrl.u32 %v1362, 7
        %v1364 = vsub.s32 0, %v1363
        %v1365 = vrot.slane %v1065, %v1364
        %v1366 = vlaneseq
        %v1367 = vshrl.u32 %v1366, 7
        %v1368 = vsub.s32 0, %v1367
        %v1369 = vrot.slane %v1079, %v1368
        %v1370 = vlaneseq
        %v1371 = vshrl.u32 %v1370, 7
        %v1372 = vsub.s32 0, %v1371
        %v1373 = vrot.slane %v1087, %v1372
        %v1374 = vlaneseq
        %v1375 = vshrl.u32 %v1374, 7
        %v1376 = vsub.s32 0, %v1375
        %v1377 = vrot.slane %v1089, %v1376
        %v1378 = vlaneseq
        %v1379 = vshrl.u32 %v1378, 7
        %v1380 = vsub.s32 0, %v1379
        %v1381 = vrot.slane %v1072, %v1380
        %v1382 = vlaneseq
        %v1383 = vshrl.u32 %v1382, 7
        %v1384 = vsub.s32 0, %v1383
        %v1385 = vrot.slane %v1086, %v1384
        %v1386 = vlaneseq
        %v1387 = vshrl.u32 %v1386, 7
        %v1388 = vsub.s32 0, %v1387
        %v1389 = vrot.slane %v1088, %v1388
        %v1390 = vlaneseq
        %v1391 = vshrl.u32 %v1390, 7
        %v1392 = vsub.s32 0, %v1391
        %v1393 = vrot.slane %v1090, %v1392
        %v1402 = vmul.f32 %v1354, %v1365
        %v1403 = vmul.f32 %v1355, %v1369
        %v1404 = vmul.f32 %v1356, %v1373
        %v1405 = vmul.f32 %v1357, %v1377
        %v1406 = vmul.f32 %v1358, %v1381
        %v1407 = vmul.f32 %v1359, %v1385
        %v1408 = vmul.f32 %v1360, %v1389
        %v1409 = vmul.f32 %v1361, %v1393
        %v1410 = vadd.f32 %v1289, %v1402
        %v1411 = vadd.f32 %v1290, %v1403
        %v1412 = vadd.f32 %v1291, %v1404
        %v1413 = vadd.f32 %v1292, %v1405
        %v1414 = vadd.f32 %v1293, %v1406
        %v1415 = vadd.f32 %v1294, %v1407
        %v1416 = vadd.f32 %v1295, %v1408
        %v1417 = vadd.f32 %v1296, %v1409
        %1420 = vrot.lane.b32.xlu0 %v775, 96
        %v1421 = vpop.permute.xlu0 %1420
        %1422 = vrot.lane.b32.xlu0 %v778, 96
        %v1423 = vpop.permute.xlu0 %1422
        %v1426 = vcombine.high %v775, 0.0
        %v1428 = vunpack.c.l.s4 1983009808
        %v1429 = vunpack.c.0.s8 %v1428
        %v1430 = vlaneseq
        %v1431 = vshrl.u32 %v1430, 7
        %v1432 = vsub.s32 %v1429, %v1431
        %v1433 = vrot.slane %v775, %v1432
        %v1435 = vunpack.c.l.s4 1983009808
        %v1436 = vunpack.c.0.s8 %v1435
        %v1437 = vlaneseq
        %v1438 = vshrl.u32 %v1437, 7
        %v1439 = vsub.s32 %v1436, %v1438
        %v1440 = vrot.slane %v1426, %v1439
        %v1441 = vcombine.high %v1421, 0.0
        %v1443 = vunpack.c.l.s4 1983009808
        %v1444 = vunpack.c.0.s8 %v1443
        %v1445 = vlaneseq
        %v1446 = vshrl.u32 %v1445, 7
        %v1447 = vsub.s32 %v1444, %v1446
        %v1448 = vrot.slane %v1421, %v1447
        %v1450 = vunpack.c.l.s4 1983009808
        %v1451 = vunpack.c.0.s8 %v1450
        %v1452 = vlaneseq
        %v1453 = vshrl.u32 %v1452, 7
        %v1454 = vsub.s32 %v1451, %v1453
        %v1455 = vrot.slane %v1441, %v1454
        %v1456 = vcombine.low %v1433, %v1448
        %v1457 = vcombine.high %v1433, %v1448
        %v1459 = vunpack.c.l.s4 1934713408
        %v1460 = vunpack.c.0.s8 %v1459
        %v1461 = vlaneseq
        %v1462 = vshrl.u32 %v1461, 7
        %v1463 = vsub.s32 %v1460, %v1462
        %v1464 = vrot.slane %v1456, %v1463
        %v1466 = vunpack.c.l.s4 1934713408
        %v1467 = vunpack.c.0.s8 %v1466
        %v1468 = vlaneseq
        %v1469 = vshrl.u32 %v1468, 7
        %v1470 = vsub.s32 %v1467, %v1469
        %v1471 = vrot.slane %v1457, %v1470
        %v1472 = vcombine.low %v1440, %v1455
        %v1473 = vcombine.high %v1440, %v1455
        %v1475 = vunpack.c.l.s4 1934713408
        %v1476 = vunpack.c.0.s8 %v1475
        %v1477 = vlaneseq
        %v1478 = vshrl.u32 %v1477, 7
        %v1479 = vsub.s32 %v1476, %v1478
        %v1480 = vrot.slane %v1472, %v1479
        %v1482 = vunpack.c.l.s4 1934713408
        %v1483 = vunpack.c.0.s8 %v1482
        %v1484 = vlaneseq
        %v1485 = vshrl.u32 %v1484, 7
        %v1486 = vsub.s32 %v1483, %v1485
        %v1487 = vrot.slane %v1473, %v1486
        %v1488 = vcombine.high %v1464, 0.0
        %v1489 = vcombine.high %v1471, 0.0
        %v1490 = vcombine.high %v1480, 0.0
        %v1491 = vcombine.high %v1487, 0.0
        %v1492 = vcombine.high %v778, 0.0
        %v1494 = vunpack.c.l.s4 1983009808
        %v1495 = vunpack.c.0.s8 %v1494
        %v1496 = vlaneseq
        %v1497 = vshrl.u32 %v1496, 7
        %v1498 = vsub.s32 %v1495, %v1497
        %v1499 = vrot.slane %v778, %v1498
        %v1501 = vunpack.c.l.s4 1983009808
        %v1502 = vunpack.c.0.s8 %v1501
        %v1503 = vlaneseq
        %v1504 = vshrl.u32 %v1503, 7
        %v1505 = vsub.s32 %v1502, %v1504
        %v1506 = vrot.slane %v1492, %v1505
        %v1507 = vcombine.high %v1423, 0.0
        %v1509 = vunpack.c.l.s4 1983009808
        %v1510 = vunpack.c.0.s8 %v1509
        %v1511 = vlaneseq
        %v1512 = vshrl.u32 %v1511, 7
        %v1513 = vsub.s32 %v1510, %v1512
        %v1514 = vrot.slane %v1423, %v1513
        %v1516 = vunpack.c.l.s4 1983009808
        %v1517 = vunpack.c.0.s8 %v1516
        %v1518 = vlaneseq
        %v1519 = vshrl.u32 %v1518, 7
        %v1520 = vsub.s32 %v1517, %v1519
        %v1521 = vrot.slane %v1507, %v1520
        %v1522 = vcombine.low %v1499, %v1514
        %v1523 = vcombine.high %v1499, %v1514
        %v1525 = vunpack.c.l.s4 1934713408
        %v1526 = vunpack.c.0.s8 %v1525
        %v1527 = vlaneseq
        %v1528 = vshrl.u32 %v1527, 7
        %v1529 = vsub.s32 %v1526, %v1528
        %v1530 = vrot.slane %v1522, %v1529
        %v1532 = vunpack.c.l.s4 1934713408
        %v1533 = vunpack.c.0.s8 %v1532
        %v1534 = vlaneseq
        %v1535 = vshrl.u32 %v1534, 7
        %v1536 = vsub.s32 %v1533, %v1535
        %v1537 = vrot.slane %v1523, %v1536
        %v1538 = vcombine.low %v1506, %v1521
        %v1539 = vcombine.high %v1506, %v1521
        %v1541 = vunpack.c.l.s4 1934713408
        %v1542 = vunpack.c.0.s8 %v1541
        %v1543 = vlaneseq
        %v1544 = vshrl.u32 %v1543, 7
        %v1545 = vsub.s32 %v1542, %v1544
        %v1546 = vrot.slane %v1538, %v1545
        %v1548 = vunpack.c.l.s4 1934713408
        %v1549 = vunpack.c.0.s8 %v1548
        %v1550 = vlaneseq
        %v1551 = vshrl.u32 %v1550, 7
        %v1552 = vsub.s32 %v1549, %v1551
        %v1553 = vrot.slane %v1539, %v1552
        %v1554 = vcombine.high %v1530, 0.0
        %v1555 = vcombine.high %v1537, 0.0
        %v1556 = vcombine.high %v1546, 0.0
        %v1557 = vcombine.high %v1553, 0.0
        %1558 = vrot.lane.b32.xlu0 %v775, 64
        %v1559 = vpop.permute.xlu0 %1558
        %1560 = vrot.lane.b32.xlu0 %v778, 64
        %v1561 = vpop.permute.xlu0 %1560
        %1562 = vrot.lane.b32.xlu0 %v1421, 64
        %v1563 = vpop.permute.xlu0 %1562
        %1564 = vrot.lane.b32.xlu0 %v1423, 64
        %v1565 = vpop.permute.xlu0 %1564
        %v1570 = vcombine.high %v1559, 0.0
        %v1572 = vunpack.c.l.s4 1983009808
        %v1573 = vunpack.c.0.s8 %v1572
        %v1574 = vlaneseq
        %v1575 = vshrl.u32 %v1574, 7
        %v1576 = vsub.s32 %v1573, %v1575
        %v1577 = vrot.slane %v1559, %v1576
        %v1579 = vunpack.c.l.s4 1983009808
        %v1580 = vunpack.c.0.s8 %v1579
        %v1581 = vlaneseq
        %v1582 = vshrl.u32 %v1581, 7
        %v1583 = vsub.s32 %v1580, %v1582
        %v1584 = vrot.slane %v1570, %v1583
        %v1585 = vcombine.high %v1563, 0.0
        %v1587 = vunpack.c.l.s4 1983009808
        %v1588 = vunpack.c.0.s8 %v1587
        %v1589 = vlaneseq
        %v1590 = vshrl.u32 %v1589, 7
        %v1591 = vsub.s32 %v1588, %v1590
        %v1592 = vrot.slane %v1563, %v1591
        %v1594 = vunpack.c.l.s4 1983009808
        %v1595 = vunpack.c.0.s8 %v1594
        %v1596 = vlaneseq
        %v1597 = vshrl.u32 %v1596, 7
        %v1598 = vsub.s32 %v1595, %v1597
        %v1599 = vrot.slane %v1585, %v1598
        %v1600 = vcombine.low %v1577, %v1592
        %v1601 = vcombine.high %v1577, %v1592
        %v1603 = vunpack.c.l.s4 1934713408
        %v1604 = vunpack.c.0.s8 %v1603
        %v1605 = vlaneseq
        %v1606 = vshrl.u32 %v1605, 7
        %v1607 = vsub.s32 %v1604, %v1606
        %v1608 = vrot.slane %v1600, %v1607
        %v1610 = vunpack.c.l.s4 1934713408
        %v1611 = vunpack.c.0.s8 %v1610
        %v1612 = vlaneseq
        %v1613 = vshrl.u32 %v1612, 7
        %v1614 = vsub.s32 %v1611, %v1613
        %v1615 = vrot.slane %v1601, %v1614
        %v1616 = vcombine.low %v1584, %v1599
        %v1617 = vcombine.high %v1584, %v1599
        %v1619 = vunpack.c.l.s4 1934713408
        %v1620 = vunpack.c.0.s8 %v1619
        %v1621 = vlaneseq
        %v1622 = vshrl.u32 %v1621, 7
        %v1623 = vsub.s32 %v1620, %v1622
        %v1624 = vrot.slane %v1616, %v1623
        %v1626 = vunpack.c.l.s4 1934713408
        %v1627 = vunpack.c.0.s8 %v1626
        %v1628 = vlaneseq
        %v1629 = vshrl.u32 %v1628, 7
        %v1630 = vsub.s32 %v1627, %v1629
        %v1631 = vrot.slane %v1617, %v1630
        %v1632 = vcombine.high %v1608, 0.0
        %v1633 = vcombine.high %v1615, 0.0
        %v1634 = vcombine.high %v1624, 0.0
        %v1635 = vcombine.high %v1631, 0.0
        %v1636 = vcombine.high %v1561, 0.0
        %v1638 = vunpack.c.l.s4 1983009808
        %v1639 = vunpack.c.0.s8 %v1638
        %v1640 = vlaneseq
        %v1641 = vshrl.u32 %v1640, 7
        %v1642 = vsub.s32 %v1639, %v1641
        %v1643 = vrot.slane %v1561, %v1642
        %v1645 = vunpack.c.l.s4 1983009808
        %v1646 = vunpack.c.0.s8 %v1645
        %v1647 = vlaneseq
        %v1648 = vshrl.u32 %v1647, 7
        %v1649 = vsub.s32 %v1646, %v1648
        %v1650 = vrot.slane %v1636, %v1649
        %v1651 = vcombine.high %v1565, 0.0
        %v1653 = vunpack.c.l.s4 1983009808
        %v1654 = vunpack.c.0.s8 %v1653
        %v1655 = vlaneseq
        %v1656 = vshrl.u32 %v1655, 7
        %v1657 = vsub.s32 %v1654, %v1656
        %v1658 = vrot.slane %v1565, %v1657
        %v1660 = vunpack.c.l.s4 1983009808
        %v1661 = vunpack.c.0.s8 %v1660
        %v1662 = vlaneseq
        %v1663 = vshrl.u32 %v1662, 7
        %v1664 = vsub.s32 %v1661, %v1663
        %v1665 = vrot.slane %v1651, %v1664
        %v1666 = vcombine.low %v1643, %v1658
        %v1667 = vcombine.high %v1643, %v1658
        %v1669 = vunpack.c.l.s4 1934713408
        %v1670 = vunpack.c.0.s8 %v1669
        %v1671 = vlaneseq
        %v1672 = vshrl.u32 %v1671, 7
        %v1673 = vsub.s32 %v1670, %v1672
        %v1674 = vrot.slane %v1666, %v1673
        %v1676 = vunpack.c.l.s4 1934713408
        %v1677 = vunpack.c.0.s8 %v1676
        %v1678 = vlaneseq
        %v1679 = vshrl.u32 %v1678, 7
        %v1680 = vsub.s32 %v1677, %v1679
        %v1681 = vrot.slane %v1667, %v1680
        %v1682 = vcombine.low %v1650, %v1665
        %v1683 = vcombine.high %v1650, %v1665
        %v1685 = vunpack.c.l.s4 1934713408
        %v1686 = vunpack.c.0.s8 %v1685
        %v1687 = vlaneseq
        %v1688 = vshrl.u32 %v1687, 7
        %v1689 = vsub.s32 %v1686, %v1688
        %v1690 = vrot.slane %v1682, %v1689
        %v1692 = vunpack.c.l.s4 1934713408
        %v1693 = vunpack.c.0.s8 %v1692
        %v1694 = vlaneseq
        %v1695 = vshrl.u32 %v1694, 7
        %v1696 = vsub.s32 %v1693, %v1695
        %v1697 = vrot.slane %v1683, %v1696
        %v1698 = vcombine.high %v1674, 0.0
        %v1699 = vcombine.high %v1681, 0.0
        %v1700 = vcombine.high %v1690, 0.0
        %v1701 = vcombine.high %v1697, 0.0
        %v1702 = vmul.f32 %v1464, %v1464
        %v1703 = vmul.f32 %v1488, %v1488
        %v1704 = vmul.f32 %v1471, %v1471
        %v1705 = vmul.f32 %v1489, %v1489
        %v1706 = vmul.f32 %v1480, %v1480
        %v1707 = vmul.f32 %v1490, %v1490
        %v1708 = vmul.f32 %v1487, %v1487
        %v1709 = vmul.f32 %v1491, %v1491
        %v1710 = vmul.f32 %v1530, %v1530
        %v1711 = vmul.f32 %v1554, %v1554
        %v1712 = vmul.f32 %v1537, %v1537
        %v1713 = vmul.f32 %v1555, %v1555
        %v1714 = vmul.f32 %v1546, %v1546
        %v1715 = vmul.f32 %v1556, %v1556
        %v1716 = vmul.f32 %v1553, %v1553
        %v1717 = vmul.f32 %v1557, %v1557
        %vm1718 = vcmask 254976
        %v1719 = vsel %vm1718, %v1702, 0.0
        %1720 = vadd.xlane.f32.xlu0 %v1719
        %v1721 = vpop.xlane.xlu0 %1720
        %v1722 = vsel %vm1718, %v1703, 0.0
        %1723 = vadd.xlane.f32.xlu0 %v1722
        %v1724 = vpop.xlane.xlu0 %1723
        %v1725 = vsel %vm1718, %v1704, 0.0
        %1726 = vadd.xlane.f32.xlu0 %v1725
        %v1727 = vpop.xlane.xlu0 %1726
        %v1728 = vsel %vm1718, %v1705, 0.0
        %1729 = vadd.xlane.f32.xlu0 %v1728
        %v1730 = vpop.xlane.xlu0 %1729
        %v1731 = vsel %vm1718, %v1706, 0.0
        %1732 = vadd.xlane.f32.xlu0 %v1731
        %v1733 = vpop.xlane.xlu0 %1732
        %v1734 = vsel %vm1718, %v1707, 0.0
        %1735 = vadd.xlane.f32.xlu0 %v1734
        %v1736 = vpop.xlane.xlu0 %1735
        %v1737 = vsel %vm1718, %v1708, 0.0
        %1738 = vadd.xlane.f32.xlu0 %v1737
        %v1739 = vpop.xlane.xlu0 %1738
        %v1740 = vsel %vm1718, %v1709, 0.0
        %1741 = vadd.xlane.f32.xlu0 %v1740
        %v1742 = vpop.xlane.xlu0 %1741
        %v1743 = vsel %vm1718, %v1710, 0.0
        %1744 = vadd.xlane.f32.xlu0 %v1743
        %v1745 = vpop.xlane.xlu0 %1744
        %v1746 = vsel %vm1718, %v1711, 0.0
        %1747 = vadd.xlane.f32.xlu0 %v1746
        %v1748 = vpop.xlane.xlu0 %1747
        %v1749 = vsel %vm1718, %v1712, 0.0
        %1750 = vadd.xlane.f32.xlu0 %v1749
        %v1751 = vpop.xlane.xlu0 %1750
        %v1752 = vsel %vm1718, %v1713, 0.0
        %1753 = vadd.xlane.f32.xlu0 %v1752
        %v1754 = vpop.xlane.xlu0 %1753
        %v1755 = vsel %vm1718, %v1714, 0.0
        %1756 = vadd.xlane.f32.xlu0 %v1755
        %v1757 = vpop.xlane.xlu0 %1756
        %v1758 = vsel %vm1718, %v1715, 0.0
        %1759 = vadd.xlane.f32.xlu0 %v1758
        %v1760 = vpop.xlane.xlu0 %1759
        %v1761 = vsel %vm1718, %v1716, 0.0
        %1762 = vadd.xlane.f32.xlu0 %v1761
        %v1763 = vpop.xlane.xlu0 %1762
        %v1764 = vsel %vm1718, %v1717, 0.0
        %1765 = vadd.xlane.f32.xlu0 %v1764
        %v1766 = vpop.xlane.xlu0 %1765
        %v1767 = vmul.f32 %v1721, %v1202
        %v1768 = vmul.f32 %v1724, %v1202
        %v1769 = vmul.f32 %v1727, %v1202
        %v1770 = vmul.f32 %v1730, %v1202
        %v1771 = vmul.f32 %v1733, %v1202
        %v1772 = vmul.f32 %v1736, %v1202
        %v1773 = vmul.f32 %v1739, %v1202
        %v1774 = vmul.f32 %v1742, %v1202
        %v1775 = vmul.f32 %v1745, %v1202
        %v1776 = vmul.f32 %v1748, %v1202
        %v1777 = vmul.f32 %v1751, %v1202
        %v1778 = vmul.f32 %v1754, %v1202
        %v1779 = vmul.f32 %v1757, %v1202
        %v1780 = vmul.f32 %v1760, %v1202
        %v1781 = vmul.f32 %v1763, %v1202
        %v1782 = vmul.f32 %v1766, %v1202
        %v1783 = vadd.f32 %v1767, 1e-06
        %v1784 = vadd.f32 %v1768, 1e-06
        %v1785 = vadd.f32 %v1769, 1e-06
        %v1786 = vadd.f32 %v1770, 1e-06
        %v1787 = vadd.f32 %v1771, 1e-06
        %v1788 = vadd.f32 %v1772, 1e-06
        %v1789 = vadd.f32 %v1773, 1e-06
        %v1790 = vadd.f32 %v1774, 1e-06
        %v1791 = vadd.f32 %v1775, 1e-06
        %v1792 = vadd.f32 %v1776, 1e-06
        %v1793 = vadd.f32 %v1777, 1e-06
        %v1794 = vadd.f32 %v1778, 1e-06
        %v1795 = vadd.f32 %v1779, 1e-06
        %v1796 = vadd.f32 %v1780, 1e-06
        %v1797 = vadd.f32 %v1781, 1e-06
        %v1798 = vadd.f32 %v1782, 1e-06
        %v1799 = vrsqrt.pop %v1783
        %v1800 = vrsqrt.pop %v1784
        %v1801 = vrsqrt.pop %v1785
        %v1802 = vrsqrt.pop %v1786
        %v1803 = vrsqrt.pop %v1787
        %v1804 = vrsqrt.pop %v1788
        %v1805 = vrsqrt.pop %v1789
        %v1806 = vrsqrt.pop %v1790
        %v1807 = vrsqrt.pop %v1791
        %v1808 = vrsqrt.pop %v1792
        %v1809 = vrsqrt.pop %v1793
        %v1810 = vrsqrt.pop %v1794
        %v1811 = vrsqrt.pop %v1795
        %v1812 = vrsqrt.pop %v1796
        %v1813 = vrsqrt.pop %v1797
        %v1814 = vrsqrt.pop %v1798
        %v1815 = vmul.f32 %v1464, %v1799
        %v1816 = vmul.f32 %v1488, %v1800
        %v1817 = vmul.f32 %v1471, %v1801
        %v1818 = vmul.f32 %v1489, %v1802
        %v1819 = vmul.f32 %v1480, %v1803
        %v1820 = vmul.f32 %v1490, %v1804
        %v1821 = vmul.f32 %v1487, %v1805
        %v1822 = vmul.f32 %v1491, %v1806
        %v1823 = vmul.f32 %v1530, %v1807
        %v1824 = vmul.f32 %v1554, %v1808
        %v1825 = vmul.f32 %v1537, %v1809
        %v1826 = vmul.f32 %v1555, %v1810
        %v1827 = vmul.f32 %v1546, %v1811
        %v1828 = vmul.f32 %v1556, %v1812
        %v1829 = vmul.f32 %v1553, %v1813
        %v1830 = vmul.f32 %v1557, %v1814
        %v1832 = vlaneseq
        %v1833 = vshrl.u32 %v1832, 7
        %v1834 = vsub.s32 0, %v1833
        %v1835 = vrot.slane %v782, %v1834
        %v1837 = vmul.f32 %v1815, %v1835
        %v1838 = vmul.f32 %v1816, %v1835
        %v1839 = vmul.f32 %v1817, %v1835
        %v1840 = vmul.f32 %v1818, %v1835
        %v1841 = vmul.f32 %v1819, %v1835
        %v1842 = vmul.f32 %v1820, %v1835
        %v1843 = vmul.f32 %v1821, %v1835
        %v1844 = vmul.f32 %v1822, %v1835
        %v1845 = vmul.f32 %v1823, %v1835
        %v1846 = vmul.f32 %v1824, %v1835
        %v1847 = vmul.f32 %v1825, %v1835
        %v1848 = vmul.f32 %v1826, %v1835
        %v1849 = vmul.f32 %v1827, %v1835
        %v1850 = vmul.f32 %v1828, %v1835
        %v1851 = vmul.f32 %v1829, %v1835
        %v1852 = vmul.f32 %v1830, %v1835
        %v1853 = vlaneseq
        %v1854 = vshrl.u32 %v1853, 7
        %v1855 = vsub.s32 0, %v1854
        %v1856 = vrot.slane %v810, %v1855
        %v1857 = vlaneseq
        %v1858 = vshrl.u32 %v1857, 7
        %v1859 = vsub.s32 0, %v1858
        %v1860 = vrot.slane %v824, %v1859
        %v1861 = vlaneseq
        %v1862 = vshrl.u32 %v1861, 7
        %v1863 = vsub.s32 0, %v1862
        %v1864 = vrot.slane %v832, %v1863
        %v1865 = vlaneseq
        %v1866 = vshrl.u32 %v1865, 7
        %v1867 = vsub.s32 0, %v1866
        %v1868 = vrot.slane %v834, %v1867
        %v1869 = vlaneseq
        %v1870 = vshrl.u32 %v1869, 7
        %v1871 = vsub.s32 0, %v1870
        %v1872 = vrot.slane %v817, %v1871
        %v1873 = vlaneseq
        %v1874 = vshrl.u32 %v1873, 7
        %v1875 = vsub.s32 0, %v1874
        %v1876 = vrot.slane %v831, %v1875
        %v1877 = vlaneseq
        %v1878 = vshrl.u32 %v1877, 7
        %v1879 = vsub.s32 0, %v1878
        %v1880 = vrot.slane %v833, %v1879
        %v1881 = vlaneseq
        %v1882 = vshrl.u32 %v1881, 7
        %v1883 = vsub.s32 0, %v1882
        %v1884 = vrot.slane %v835, %v1883
        %v1885 = vlaneseq
        %v1886 = vshrl.u32 %v1885, 7
        %v1887 = vsub.s32 0, %v1886
        %v1888 = vrot.slane %v859, %v1887
        %v1889 = vlaneseq
        %v1890 = vshrl.u32 %v1889, 7
        %v1891 = vsub.s32 0, %v1890
        %v1892 = vrot.slane %v873, %v1891
        %v1893 = vlaneseq
        %v1894 = vshrl.u32 %v1893, 7
        %v1895 = vsub.s32 0, %v1894
        %v1896 = vrot.slane %v881, %v1895
        %v1897 = vlaneseq
        %v1898 = vshrl.u32 %v1897, 7
        %v1899 = vsub.s32 0, %v1898
        %v1900 = vrot.slane %v883, %v1899
        %v1901 = vlaneseq
        %v1902 = vshrl.u32 %v1901, 7
        %v1903 = vsub.s32 0, %v1902
        %v1904 = vrot.slane %v866, %v1903
        %v1905 = vlaneseq
        %v1906 = vshrl.u32 %v1905, 7
        %v1907 = vsub.s32 0, %v1906
        %v1908 = vrot.slane %v880, %v1907
        %v1909 = vlaneseq
        %v1910 = vshrl.u32 %v1909, 7
        %v1911 = vsub.s32 0, %v1910
        %v1912 = vrot.slane %v882, %v1911
        %v1913 = vlaneseq
        %v1914 = vshrl.u32 %v1913, 7
        %v1915 = vsub.s32 0, %v1914
        %v1916 = vrot.slane %v884, %v1915
        %v1933 = vmul.f32 %v1837, %v1856
        %v1934 = vmul.f32 %v1838, %v1860
        %v1935 = vmul.f32 %v1839, %v1864
        %v1936 = vmul.f32 %v1840, %v1868
        %v1937 = vmul.f32 %v1841, %v1872
        %v1938 = vmul.f32 %v1842, %v1876
        %v1939 = vmul.f32 %v1843, %v1880
        %v1940 = vmul.f32 %v1844, %v1884
        %v1941 = vmul.f32 %v1845, %v1888
        %v1942 = vmul.f32 %v1846, %v1892
        %v1943 = vmul.f32 %v1847, %v1896
        %v1944 = vmul.f32 %v1848, %v1900
        %v1945 = vmul.f32 %v1849, %v1904
        %v1946 = vmul.f32 %v1850, %v1908
        %v1947 = vmul.f32 %v1851, %v1912
        %v1948 = vmul.f32 %v1852, %v1916
        %1965 = vrot.lane.b32.xlu0 %v1837, 112
        %v1966 = vpop.permute.xlu0 %1965
        %1967 = vrot.lane.b32.xlu0 %v1838, 112
        %v1968 = vpop.permute.xlu0 %1967
        %1969 = vrot.lane.b32.xlu0 %v1839, 112
        %v1970 = vpop.permute.xlu0 %1969
        %1971 = vrot.lane.b32.xlu0 %v1840, 112
        %v1972 = vpop.permute.xlu0 %1971
        %1973 = vrot.lane.b32.xlu0 %v1841, 112
        %v1974 = vpop.permute.xlu0 %1973
        %1975 = vrot.lane.b32.xlu0 %v1842, 112
        %v1976 = vpop.permute.xlu0 %1975
        %1977 = vrot.lane.b32.xlu0 %v1843, 112
        %v1978 = vpop.permute.xlu0 %1977
        %1979 = vrot.lane.b32.xlu0 %v1844, 112
        %v1980 = vpop.permute.xlu0 %1979
        %1981 = vrot.lane.b32.xlu0 %v1845, 112
        %v1982 = vpop.permute.xlu0 %1981
        %1983 = vrot.lane.b32.xlu0 %v1846, 112
        %v1984 = vpop.permute.xlu0 %1983
        %1985 = vrot.lane.b32.xlu0 %v1847, 112
        %v1986 = vpop.permute.xlu0 %1985
        %1987 = vrot.lane.b32.xlu0 %v1848, 112
        %v1988 = vpop.permute.xlu0 %1987
        %1989 = vrot.lane.b32.xlu0 %v1849, 112
        %v1990 = vpop.permute.xlu0 %1989
        %1991 = vrot.lane.b32.xlu0 %v1850, 112
        %v1992 = vpop.permute.xlu0 %1991
        %1993 = vrot.lane.b32.xlu0 %v1851, 112
        %v1994 = vpop.permute.xlu0 %1993
        %1995 = vrot.lane.b32.xlu0 %v1852, 112
        %v1996 = vpop.permute.xlu0 %1995
        %2013 = vrot.lane.b32.xlu0 %v1837, 16
        %v2014 = vpop.permute.xlu0 %2013
        %2015 = vrot.lane.b32.xlu0 %v1838, 16
        %v2016 = vpop.permute.xlu0 %2015
        %2017 = vrot.lane.b32.xlu0 %v1839, 16
        %v2018 = vpop.permute.xlu0 %2017
        %2019 = vrot.lane.b32.xlu0 %v1840, 16
        %v2020 = vpop.permute.xlu0 %2019
        %2021 = vrot.lane.b32.xlu0 %v1841, 16
        %v2022 = vpop.permute.xlu0 %2021
        %2023 = vrot.lane.b32.xlu0 %v1842, 16
        %v2024 = vpop.permute.xlu0 %2023
        %2025 = vrot.lane.b32.xlu0 %v1843, 16
        %v2026 = vpop.permute.xlu0 %2025
        %2027 = vrot.lane.b32.xlu0 %v1844, 16
        %v2028 = vpop.permute.xlu0 %2027
        %2029 = vrot.lane.b32.xlu0 %v1845, 16
        %v2030 = vpop.permute.xlu0 %2029
        %2031 = vrot.lane.b32.xlu0 %v1846, 16
        %v2032 = vpop.permute.xlu0 %2031
        %2033 = vrot.lane.b32.xlu0 %v1847, 16
        %v2034 = vpop.permute.xlu0 %2033
        %2035 = vrot.lane.b32.xlu0 %v1848, 16
        %v2036 = vpop.permute.xlu0 %2035
        %2037 = vrot.lane.b32.xlu0 %v1849, 16
        %v2038 = vpop.permute.xlu0 %2037
        %2039 = vrot.lane.b32.xlu0 %v1850, 16
        %v2040 = vpop.permute.xlu0 %2039
        %2041 = vrot.lane.b32.xlu0 %v1851, 16
        %v2042 = vpop.permute.xlu0 %2041
        %2043 = vrot.lane.b32.xlu0 %v1852, 16
        %v2044 = vpop.permute.xlu0 %2043
        %v2061 = vsel %vm1353, %v1966, %v2014
        %v2062 = vsel %vm1353, %v1968, %v2016
        %v2063 = vsel %vm1353, %v1970, %v2018
        %v2064 = vsel %vm1353, %v1972, %v2020
        %v2065 = vsel %vm1353, %v1974, %v2022
        %v2066 = vsel %vm1353, %v1976, %v2024
        %v2067 = vsel %vm1353, %v1978, %v2026
        %v2068 = vsel %vm1353, %v1980, %v2028
        %v2069 = vsel %vm1353, %v1982, %v2030
        %v2070 = vsel %vm1353, %v1984, %v2032
        %v2071 = vsel %vm1353, %v1986, %v2034
        %v2072 = vsel %vm1353, %v1988, %v2036
        %v2073 = vsel %vm1353, %v1990, %v2038
        %v2074 = vsel %vm1353, %v1992, %v2040
        %v2075 = vsel %vm1353, %v1994, %v2042
        %v2076 = vsel %vm1353, %v1996, %v2044
        %v2077 = vlaneseq
        %v2078 = vshrl.u32 %v2077, 7
        %v2079 = vsub.s32 0, %v2078
        %v2080 = vrot.slane %v912, %v2079
        %v2081 = vlaneseq
        %v2082 = vshrl.u32 %v2081, 7
        %v2083 = vsub.s32 0, %v2082
        %v2084 = vrot.slane %v926, %v2083
        %v2085 = vlaneseq
        %v2086 = vshrl.u32 %v2085, 7
        %v2087 = vsub.s32 0, %v2086
        %v2088 = vrot.slane %v934, %v2087
        %v2089 = vlaneseq
        %v2090 = vshrl.u32 %v2089, 7
        %v2091 = vsub.s32 0, %v2090
        %v2092 = vrot.slane %v936, %v2091
        %v2093 = vlaneseq
        %v2094 = vshrl.u32 %v2093, 7
        %v2095 = vsub.s32 0, %v2094
        %v2096 = vrot.slane %v919, %v2095
        %v2097 = vlaneseq
        %v2098 = vshrl.u32 %v2097, 7
        %v2099 = vsub.s32 0, %v2098
        %v2100 = vrot.slane %v933, %v2099
        %v2101 = vlaneseq
        %v2102 = vshrl.u32 %v2101, 7
        %v2103 = vsub.s32 0, %v2102
        %v2104 = vrot.slane %v935, %v2103
        %v2105 = vlaneseq
        %v2106 = vshrl.u32 %v2105, 7
        %v2107 = vsub.s32 0, %v2106
        %v2108 = vrot.slane %v937, %v2107
        %v2109 = vlaneseq
        %v2110 = vshrl.u32 %v2109, 7
        %v2111 = vsub.s32 0, %v2110
        %v2112 = vrot.slane %v961, %v2111
        %v2113 = vlaneseq
        %v2114 = vshrl.u32 %v2113, 7
        %v2115 = vsub.s32 0, %v2114
        %v2116 = vrot.slane %v975, %v2115
        %v2117 = vlaneseq
        %v2118 = vshrl.u32 %v2117, 7
        %v2119 = vsub.s32 0, %v2118
        %v2120 = vrot.slane %v983, %v2119
        %v2121 = vlaneseq
        %v2122 = vshrl.u32 %v2121, 7
        %v2123 = vsub.s32 0, %v2122
        %v2124 = vrot.slane %v985, %v2123
        %v2125 = vlaneseq
        %v2126 = vshrl.u32 %v2125, 7
        %v2127 = vsub.s32 0, %v2126
        %v2128 = vrot.slane %v968, %v2127
        %v2129 = vlaneseq
        %v2130 = vshrl.u32 %v2129, 7
        %v2131 = vsub.s32 0, %v2130
        %v2132 = vrot.slane %v982, %v2131
        %v2133 = vlaneseq
        %v2134 = vshrl.u32 %v2133, 7
        %v2135 = vsub.s32 0, %v2134
        %v2136 = vrot.slane %v984, %v2135
        %v2137 = vlaneseq
        %v2138 = vshrl.u32 %v2137, 7
        %v2139 = vsub.s32 0, %v2138
        %v2140 = vrot.slane %v986, %v2139
        %v2157 = vmul.f32 %v2061, %v2080
        %v2158 = vmul.f32 %v2062, %v2084
        %v2159 = vmul.f32 %v2063, %v2088
        %v2160 = vmul.f32 %v2064, %v2092
        %v2161 = vmul.f32 %v2065, %v2096
        %v2162 = vmul.f32 %v2066, %v2100
        %v2163 = vmul.f32 %v2067, %v2104
        %v2164 = vmul.f32 %v2068, %v2108
        %v2165 = vmul.f32 %v2069, %v2112
        %v2166 = vmul.f32 %v2070, %v2116
        %v2167 = vmul.f32 %v2071, %v2120
        %v2168 = vmul.f32 %v2072, %v2124
        %v2169 = vmul.f32 %v2073, %v2128
        %v2170 = vmul.f32 %v2074, %v2132
        %v2171 = vmul.f32 %v2075, %v2136
        %v2172 = vmul.f32 %v2076, %v2140
        %v2173 = vadd.f32 %v1933, %v2157
        %v2174 = vadd.f32 %v1934, %v2158
        %v2175 = vadd.f32 %v1935, %v2159
        %v2176 = vadd.f32 %v1936, %v2160
        %v2177 = vadd.f32 %v1937, %v2161
        %v2178 = vadd.f32 %v1938, %v2162
        %v2179 = vadd.f32 %v1939, %v2163
        %v2180 = vadd.f32 %v1940, %v2164
        %v2181 = vadd.f32 %v1941, %v2165
        %v2182 = vadd.f32 %v1942, %v2166
        %v2183 = vadd.f32 %v1943, %v2167
        %v2184 = vadd.f32 %v1944, %v2168
        %v2185 = vadd.f32 %v1945, %v2169
        %v2186 = vadd.f32 %v1946, %v2170
        %v2187 = vadd.f32 %v1947, %v2171
        %v2188 = vadd.f32 %v1948, %v2172
        %v2189 = vcombine.low %v1410, %v1412
        %v2191 = vunpack.c.l.s4 1983009808
        %v2192 = vunpack.c.0.s8 %v2191
        %v2193 = vlaneseq
        %v2194 = vshrl.u32 %v2193, 7
        %v2195 = vsub.s32 %v2192, %v2194
        %v2196 = vrot.slane %v2189, %v2195
        %v2197 = vcombine.low %v1411, %v1413
        %v2199 = vunpack.c.l.s4 1983009808
        %v2200 = vunpack.c.0.s8 %v2199
        %v2201 = vlaneseq
        %v2202 = vshrl.u32 %v2201, 7
        %v2203 = vsub.s32 %v2200, %v2202
        %v2204 = vrot.slane %v2197, %v2203
        %v2205 = vcombine.low %v1414, %v1416
        %v2207 = vunpack.c.l.s4 1983009808
        %v2208 = vunpack.c.0.s8 %v2207
        %v2209 = vlaneseq
        %v2210 = vshrl.u32 %v2209, 7
        %v2211 = vsub.s32 %v2208, %v2210
        %v2212 = vrot.slane %v2205, %v2211
        %v2213 = vcombine.low %v1415, %v1417
        %v2215 = vunpack.c.l.s4 1983009808
        %v2216 = vunpack.c.0.s8 %v2215
        %v2217 = vlaneseq
        %v2218 = vshrl.u32 %v2217, 7
        %v2219 = vsub.s32 %v2216, %v2218
        %v2220 = vrot.slane %v2213, %v2219
        %v2221 = vcombine.low %v2196, %v2204
        %v2222 = vcombine.high %v2196, %v2204
        %v2224 = vunpack.c.l.s4 1934713408
        %v2225 = vunpack.c.0.s8 %v2224
        %v2226 = vlaneseq
        %v2227 = vshrl.u32 %v2226, 7
        %v2228 = vsub.s32 %v2225, %v2227
        %v2229 = vrot.slane %v2221, %v2228
        %v2231 = vunpack.c.l.s4 1934713408
        %v2232 = vunpack.c.0.s8 %v2231
        %v2233 = vlaneseq
        %v2234 = vshrl.u32 %v2233, 7
        %v2235 = vsub.s32 %v2232, %v2234
        %v2236 = vrot.slane %v2222, %v2235
        %v2237 = vcombine.low %v2212, %v2220
        %v2238 = vcombine.high %v2212, %v2220
        %v2240 = vunpack.c.l.s4 1934713408
        %v2241 = vunpack.c.0.s8 %v2240
        %v2242 = vlaneseq
        %v2243 = vshrl.u32 %v2242, 7
        %v2244 = vsub.s32 %v2241, %v2243
        %v2245 = vrot.slane %v2237, %v2244
        %v2247 = vunpack.c.l.s4 1934713408
        %v2248 = vunpack.c.0.s8 %v2247
        %v2249 = vlaneseq
        %v2250 = vshrl.u32 %v2249, 7
        %v2251 = vsub.s32 %v2248, %v2250
        %v2252 = vrot.slane %v2238, %v2251
        %v2253 = vcombine.low %v2229, %v2245
        %v2254 = vcombine.high %v2229, %v2245
        %v2255 = vcombine.low %v2236, %v2252
        %v2256 = vcombine.high %v2236, %v2252
        %v2257 = vcombine.low %v2173, %v2175
        %v2259 = vunpack.c.l.s4 1983009808
        %v2260 = vunpack.c.0.s8 %v2259
        %v2261 = vlaneseq
        %v2262 = vshrl.u32 %v2261, 7
        %v2263 = vsub.s32 %v2260, %v2262
        %v2264 = vrot.slane %v2257, %v2263
        %v2265 = vcombine.low %v2174, %v2176
        %v2267 = vunpack.c.l.s4 1983009808
        %v2268 = vunpack.c.0.s8 %v2267
        %v2269 = vlaneseq
        %v2270 = vshrl.u32 %v2269, 7
        %v2271 = vsub.s32 %v2268, %v2270
        %v2272 = vrot.slane %v2265, %v2271
        %v2273 = vcombine.low %v2177, %v2179
        %v2275 = vunpack.c.l.s4 1983009808
        %v2276 = vunpack.c.0.s8 %v2275
        %v2277 = vlaneseq
        %v2278 = vshrl.u32 %v2277, 7
        %v2279 = vsub.s32 %v2276, %v2278
        %v2280 = vrot.slane %v2273, %v2279
        %v2281 = vcombine.low %v2178, %v2180
        %v2283 = vunpack.c.l.s4 1983009808
        %v2284 = vunpack.c.0.s8 %v2283
        %v2285 = vlaneseq
        %v2286 = vshrl.u32 %v2285, 7
        %v2287 = vsub.s32 %v2284, %v2286
        %v2288 = vrot.slane %v2281, %v2287
        %v2289 = vcombine.low %v2264, %v2272
        %v2291 = vunpack.c.l.s4 1934713408
        %v2292 = vunpack.c.0.s8 %v2291
        %v2293 = vlaneseq
        %v2294 = vshrl.u32 %v2293, 7
        %v2295 = vsub.s32 %v2292, %v2294
        %v2296 = vrot.slane %v2289, %v2295
        %v2297 = vcombine.low %v2280, %v2288
        %v2299 = vunpack.c.l.s4 1934713408
        %v2300 = vunpack.c.0.s8 %v2299
        %v2301 = vlaneseq
        %v2302 = vshrl.u32 %v2301, 7
        %v2303 = vsub.s32 %v2300, %v2302
        %v2304 = vrot.slane %v2297, %v2303
        %v2305 = vcombine.low %v2296, %v2304
        %v2306 = vcombine.high %v2296, %v2304
        %v2307 = vcombine.low %v2181, %v2183
        %v2309 = vunpack.c.l.s4 1983009808
        %v2310 = vunpack.c.0.s8 %v2309
        %v2311 = vlaneseq
        %v2312 = vshrl.u32 %v2311, 7
        %v2313 = vsub.s32 %v2310, %v2312
        %v2314 = vrot.slane %v2307, %v2313
        %v2315 = vcombine.low %v2182, %v2184
        %v2317 = vunpack.c.l.s4 1983009808
        %v2318 = vunpack.c.0.s8 %v2317
        %v2319 = vlaneseq
        %v2320 = vshrl.u32 %v2319, 7
        %v2321 = vsub.s32 %v2318, %v2320
        %v2322 = vrot.slane %v2315, %v2321
        %v2323 = vcombine.low %v2185, %v2187
        %v2325 = vunpack.c.l.s4 1983009808
        %v2326 = vunpack.c.0.s8 %v2325
        %v2327 = vlaneseq
        %v2328 = vshrl.u32 %v2327, 7
        %v2329 = vsub.s32 %v2326, %v2328
        %v2330 = vrot.slane %v2323, %v2329
        %v2331 = vcombine.low %v2186, %v2188
        %v2333 = vunpack.c.l.s4 1983009808
        %v2334 = vunpack.c.0.s8 %v2333
        %v2335 = vlaneseq
        %v2336 = vshrl.u32 %v2335, 7
        %v2337 = vsub.s32 %v2334, %v2336
        %v2338 = vrot.slane %v2331, %v2337
        %v2339 = vcombine.low %v2314, %v2322
        %v2341 = vunpack.c.l.s4 1934713408
        %v2342 = vunpack.c.0.s8 %v2341
        %v2343 = vlaneseq
        %v2344 = vshrl.u32 %v2343, 7
        %v2345 = vsub.s32 %v2342, %v2344
        %v2346 = vrot.slane %v2339, %v2345
        %v2347 = vcombine.low %v2330, %v2338
        %v2349 = vunpack.c.l.s4 1934713408
        %v2350 = vunpack.c.0.s8 %v2349
        %v2351 = vlaneseq
        %v2352 = vshrl.u32 %v2351, 7
        %v2353 = vsub.s32 %v2350, %v2352
        %v2354 = vrot.slane %v2347, %v2353
        %v2355 = vcombine.low %v2346, %v2354
        %v2356 = vcombine.high %v2346, %v2354
        %v2357 = vcombine.low %v1608, %v1615
        %v2359 = vunpack.c.l.s4 1983009808
        %v2360 = vunpack.c.0.s8 %v2359
        %v2361 = vlaneseq
        %v2362 = vshrl.u32 %v2361, 7
        %v2363 = vsub.s32 %v2360, %v2362
        %v2364 = vrot.slane %v2357, %v2363
        %v2365 = vcombine.low %v1632, %v1633
        %v2367 = vunpack.c.l.s4 1983009808
        %v2368 = vunpack.c.0.s8 %v2367
        %v2369 = vlaneseq
        %v2370 = vshrl.u32 %v2369, 7
        %v2371 = vsub.s32 %v2368, %v2370
        %v2372 = vrot.slane %v2365, %v2371
        %v2373 = vcombine.low %v1624, %v1631
        %v2375 = vunpack.c.l.s4 1983009808
        %v2376 = vunpack.c.0.s8 %v2375
        %v2377 = vlaneseq
        %v2378 = vshrl.u32 %v2377, 7
        %v2379 = vsub.s32 %v2376, %v2378
        %v2380 = vrot.slane %v2373, %v2379
        %v2381 = vcombine.low %v1634, %v1635
        %v2383 = vunpack.c.l.s4 1983009808
        %v2384 = vunpack.c.0.s8 %v2383
        %v2385 = vlaneseq
        %v2386 = vshrl.u32 %v2385, 7
        %v2387 = vsub.s32 %v2384, %v2386
        %v2388 = vrot.slane %v2381, %v2387
        %v2389 = vcombine.low %v2364, %v2372
        %v2391 = vunpack.c.l.s4 1934713408
        %v2392 = vunpack.c.0.s8 %v2391
        %v2393 = vlaneseq
        %v2394 = vshrl.u32 %v2393, 7
        %v2395 = vsub.s32 %v2392, %v2394
        %v2396 = vrot.slane %v2389, %v2395
        %v2397 = vcombine.low %v2380, %v2388
        %v2399 = vunpack.c.l.s4 1934713408
        %v2400 = vunpack.c.0.s8 %v2399
        %v2401 = vlaneseq
        %v2402 = vshrl.u32 %v2401, 7
        %v2403 = vsub.s32 %v2400, %v2402
        %v2404 = vrot.slane %v2397, %v2403
        %v2405 = vcombine.low %v2396, %v2404
        %v2406 = vcombine.high %v2396, %v2404
        %v2407 = vcombine.low %v1674, %v1681
        %v2409 = vunpack.c.l.s4 1983009808
        %v2410 = vunpack.c.0.s8 %v2409
        %v2411 = vlaneseq
        %v2412 = vshrl.u32 %v2411, 7
        %v2413 = vsub.s32 %v2410, %v2412
        %v2414 = vrot.slane %v2407, %v2413
        %v2415 = vcombine.low %v1698, %v1699
        %v2417 = vunpack.c.l.s4 1983009808
        %v2418 = vunpack.c.0.s8 %v2417
        %v2419 = vlaneseq
        %v2420 = vshrl.u32 %v2419, 7
        %v2421 = vsub.s32 %v2418, %v2420
        %v2422 = vrot.slane %v2415, %v2421
        %v2423 = vcombine.low %v1690, %v1697
        %v2425 = vunpack.c.l.s4 1983009808
        %v2426 = vunpack.c.0.s8 %v2425
        %v2427 = vlaneseq
        %v2428 = vshrl.u32 %v2427, 7
        %v2429 = vsub.s32 %v2426, %v2428
        %v2430 = vrot.slane %v2423, %v2429
        %v2431 = vcombine.low %v1700, %v1701
        %v2433 = vunpack.c.l.s4 1983009808
        %v2434 = vunpack.c.0.s8 %v2433
        %v2435 = vlaneseq
        %v2436 = vshrl.u32 %v2435, 7
        %v2437 = vsub.s32 %v2434, %v2436
        %v2438 = vrot.slane %v2431, %v2437
        %v2439 = vcombine.low %v2414, %v2422
        %v2441 = vunpack.c.l.s4 1934713408
        %v2442 = vunpack.c.0.s8 %v2441
        %v2443 = vlaneseq
        %v2444 = vshrl.u32 %v2443, 7
        %v2445 = vsub.s32 %v2442, %v2444
        %v2446 = vrot.slane %v2439, %v2445
        %v2447 = vcombine.low %v2430, %v2438
        %v2449 = vunpack.c.l.s4 1934713408
        %v2450 = vunpack.c.0.s8 %v2449
        %v2451 = vlaneseq
        %v2452 = vshrl.u32 %v2451, 7
        %v2453 = vsub.s32 %v2450, %v2452
        %v2454 = vrot.slane %v2447, %v2453
        %v2455 = vcombine.low %v2446, %v2454
        %v2456 = vcombine.high %v2446, %v2454
        %v2457 = vpack.c.bf16 %v2254, %v2253
        %v2458 = vpack.c.bf16 %v2256, %v2255
        %v2459 = vpack.c.bf16 %v2355, %v2305
        %v2460 = vpack.c.bf16 %v2356, %v2306
        %vm2461 = vcmask 261120
        %v2463 = vsel %vm2461, %v2457, 0
        %v2466 = vsel %vm2461, %v2459, 0
        %2468 = vmatprep.subr.bf16.mxu0 0
        %2469 = vmatpush1.bf16.xpose.msra.mxu0 %v2466
        %2470 = vmatprep.subr.bf16.mxu0 0
        %2471 = vmatpush1.bf16.xpose.msra.mxu0 0
        %2472 = vmatprep.subr.bf16.mxu0 0
        %2473 = vmatpush1.bf16.xpose.msra.mxu0 0
        %2474 = vmatprep.subr.bf16.mxu0 0
        %2475 = vmatpush1.bf16.xpose.msra.mxu0 0
        %2476 = vmatprep.subr.bf16.mxu0 0
        %2477 = vmatpush1.bf16.xpose.msra.mxu0 0
        %2478 = vmatprep.subr.bf16.mxu0 0
        %2479 = vmatpush1.bf16.xpose.msra.mxu0 0
        %2480 = vmatprep.subr.bf16.mxu0 0
        %2481 = vmatpush1.bf16.xpose.msra.mxu0 0
        %2482 = vmatprep.subr.bf16.mxu0 0
        %2483 = vmatpush1.bf16.xpose.msra.mxu0 0
        %2484 = vmatprep.subr.bf16.mxu0 0
        %2485 = vmatpush1.bf16.xpose.msra.mxu0 0
        %2486 = vmatprep.subr.bf16.mxu0 0
        %2487 = vmatpush1.bf16.xpose.msra.mxu0 0
        %2488 = vmatprep.subr.bf16.mxu0 0
        %2489 = vmatpush1.bf16.xpose.msra.mxu0 0
        %2490 = vmatprep.subr.bf16.mxu0 0
        %2491 = vmatpush1.bf16.xpose.msra.mxu0 0
        %2492 = vmatprep.subr.bf16.mxu0 0
        %2493 = vmatpush1.bf16.xpose.msra.mxu0 0
        %2494 = vmatprep.subr.bf16.mxu0 0
        %2495 = vmatpush1.bf16.xpose.msra.mxu0 0
        %2496 = vmatprep.subr.bf16.mxu0 0
        %2497 = vmatpush1.bf16.xpose.msra.mxu0 0
        %2498 = vmatprep.subr.bf16.mxu0 0
        %2499 = vmatpush1.bf16.xpose.msra.mxu0 0
        %2500 = vmatprep.mubr.bf16.mxu0 0
        %2501 = vmatmul.mubr.bf16.gmra.mrb[0].mxu0 %v2463
        %v2502 = vpop.f32.mrb[0].mxu0
        %v2503 = vadd.f32 0.0, %v2502
        %v2504 = vpop.f32.mrb[0].mxu0
        %v2505 = vpop.f32.mrb[0].mxu0
        %v2506 = vadd.f32 0.0, %v2505
        %v2507 = vpop.f32.mrb[0].mxu0
        %2508 = vdwg.mxu0
        %v2510 = vsel %vm2461, %v2458, 0
        %v2513 = vsel %vm2461, %v2460, 0
        %2515 = vmatprep.subr.bf16.mxu0 0
        %2516 = vmatpush1.bf16.xpose.msra.mxu0 %v2513
        %2517 = vmatprep.subr.bf16.mxu0 0
        %2518 = vmatpush1.bf16.xpose.msra.mxu0 0
        %2519 = vmatprep.subr.bf16.mxu0 0
        %2520 = vmatpush1.bf16.xpose.msra.mxu0 0
        %2521 = vmatprep.subr.bf16.mxu0 0
        %2522 = vmatpush1.bf16.xpose.msra.mxu0 0
        %2523 = vmatprep.subr.bf16.mxu0 0
        %2524 = vmatpush1.bf16.xpose.msra.mxu0 0
        %2525 = vmatprep.subr.bf16.mxu0 0
        %2526 = vmatpush1.bf16.xpose.msra.mxu0 0
        %2527 = vmatprep.subr.bf16.mxu0 0
        %2528 = vmatpush1.bf16.xpose.msra.mxu0 0
        %2529 = vmatprep.subr.bf16.mxu0 0
        %2530 = vmatpush1.bf16.xpose.msra.mxu0 0
        %2531 = vmatprep.subr.bf16.mxu0 0
        %2532 = vmatpush1.bf16.xpose.msra.mxu0 0
        %2533 = vmatprep.subr.bf16.mxu0 0
        %2534 = vmatpush1.bf16.xpose.msra.mxu0 0
        %2535 = vmatprep.subr.bf16.mxu0 0
        %2536 = vmatpush1.bf16.xpose.msra.mxu0 0
        %2537 = vmatprep.subr.bf16.mxu0 0
        %2538 = vmatpush1.bf16.xpose.msra.mxu0 0
        %2539 = vmatprep.subr.bf16.mxu0 0
        %2540 = vmatpush1.bf16.xpose.msra.mxu0 0
        %2541 = vmatprep.subr.bf16.mxu0 0
        %2542 = vmatpush1.bf16.xpose.msra.mxu0 0
        %2543 = vmatprep.subr.bf16.mxu0 0
        %2544 = vmatpush1.bf16.xpose.msra.mxu0 0
        %2545 = vmatprep.subr.bf16.mxu0 0
        %2546 = vmatpush1.bf16.xpose.msra.mxu0 0
        %2547 = vmatprep.mubr.bf16.mxu0 0
        %2548 = vmatmul.mubr.bf16.gmra.mrb[0].mxu0 %v2510
        %v2549 = vpop.f32.mrb[0].mxu0
        %v2550 = vadd.f32 0.0, %v2549
        %v2551 = vpop.f32.mrb[0].mxu0
        %v2552 = vpop.f32.mrb[0].mxu0
        %v2553 = vadd.f32 0.0, %v2552
        %v2554 = vpop.f32.mrb[0].mxu0
        %2555 = vdwg.mxu0
        %v2556 = vlaneseq
        %v2557 = vshrl.u32 %v2556, 7
        %v2558 = vadd.s32 %v2557, 8
        %v2559 = vlaneseq
        %v2560 = vand.u32 %v2559, 127
        %vm2561 = vcmp.lt.s32.totalorder %v2557, 0
        %v2562 = vsub.s32 0, %v2557
        %v2563 = vsel %vm2561, %v2562, %v2557
        %v2564 = vshrl.u32 %v2563, 3
        %v2565 = vand.u32 %v2563, 7
        %v2566 = vsub.s32 0, %v2565
        %v2567 = vsel %vm2561, %v2566, %v2565
        %vm2568 = vcmp.lt.s32.totalorder %v2558, 0
        %v2569 = vsub.s32 0, %v2558
        %v2570 = vsel %vm2568, %v2569, %v2558
        %v2571 = vshrl.u32 %v2570, 3
        %v2572 = vand.u32 %v2570, 7
        %v2573 = vsub.s32 0, %v2572
        %v2574 = vsel %vm2568, %v2573, %v2572
        %vm2575 = vcmp.ne.s32.totalorder %v2567, 0
        %vm2576 = vcmp.ne.s32.totalorder %v2574, 0
        %vm2577 = vcmp.lt.s32.totalorder %v2567, 0
        %vm2578 = vcmp.lt.s32.totalorder %v2574, 0
        %vm2579 = vmand %vm2577, %vm2575
        %vm2580 = vmand %vm2578, %vm2576
        %v2581 = vadd.s32 %v2567, 8
        %v2582 = vadd.s32 %v2574, 8
        %v2583 = vsel %vm2579, %v2581, %v2567
        %v2584 = vsel %vm2580, %v2582, %v2574
        %v2585 = vstv %s533
        %v2586 = vadd.s32 %v2585, %v2583
        %v2587 = vadd.s32 %v2585, %v2584
        %vm2588 = vcmp.le.s32.totalorder %v2560, %v2586
        %vm2589 = vcmp.le.s32.totalorder %v2560, %v2587
        %v2590 = vsel %vm2588, 1, 0
        %v2591 = vsel %vm2589, 1, 0
        %vm2592 = vcmp.eq.s32.totalorder %v2590, 1
        %vm2593 = vcmp.eq.s32.totalorder %v2591, 1
        %v2594 = vsel %vm2592, %v2503, -1e+30
        %v2595 = vsel %vm2593, %v2506, -1e+30
        %v2596 = vsel %vm2592, %v2550, -1e+30
        %v2597 = vsel %vm2593, %v2553, -1e+30
        %v2598 = vsel %vm1353, %v2594, -inf
        %2599 = vmax.xlane.f32.xlu0 %v2598
        %v2600 = vpop.xlane.xlu0 %2599
        %v2601 = vsel %vm1353, %v2595, -inf
        %2602 = vmax.xlane.f32.xlu0 %v2601
        %v2603 = vpop.xlane.xlu0 %2602
        %v2604 = vsel %vm1353, %v2596, -inf
        %2605 = vmax.xlane.f32.xlu0 %v2604
        %v2606 = vpop.xlane.xlu0 %2605
        %v2607 = vsel %vm1353, %v2597, -inf
        %2608 = vmax.xlane.f32.xlu0 %v2607
        %v2609 = vpop.xlane.xlu0 %2608
        %v2610 = vsub.f32 %v2594, %v2600
        %v2611 = vsub.f32 %v2595, %v2603
        %v2612 = vsub.f32 %v2596, %v2606
        %v2613 = vsub.f32 %v2597, %v2609
        %v2614 = vmul.f32 %v2610, 1.442695
        %v2615 = vpow.pop %v2614
        %v2616 = vmul.f32 %v2611, 1.442695
        %v2617 = vpow.pop %v2616
        %v2618 = vmul.f32 %v2612, 1.442695
        %v2619 = vpow.pop %v2618
        %v2620 = vmul.f32 %v2613, 1.442695
        %v2621 = vpow.pop %v2620
        %v2622 = vsel %vm1353, %v2615, 0.0
        %2623 = vadd.xlane.f32.xlu0 %v2622
        %v2624 = vpop.xlane.xlu0 %2623
        %v2625 = vsel %vm1353, %v2617, 0.0
        %2626 = vadd.xlane.f32.xlu0 %v2625
        %v2627 = vpop.xlane.xlu0 %2626
        %v2628 = vsel %vm1353, %v2619, 0.0
        %2629 = vadd.xlane.f32.xlu0 %v2628
        %v2630 = vpop.xlane.xlu0 %2629
        %v2631 = vsel %vm1353, %v2621, 0.0
        %2632 = vadd.xlane.f32.xlu0 %v2631
        %v2633 = vpop.xlane.xlu0 %2632
        %v2634 = vrcp.pop %v2624
        %v2635 = vmul.f32 %v2615, %v2634
        %v2636 = vrcp.pop %v2627
        %v2637 = vmul.f32 %v2617, %v2636
        %v2638 = vrcp.pop %v2630
        %v2639 = vmul.f32 %v2619, %v2638
        %v2640 = vrcp.pop %v2633
        %v2641 = vmul.f32 %v2621, %v2640
        %v2642 = vpack.c.bf16 %v2637, %v2635
        %v2643 = vpack.c.bf16 %v2641, %v2639
        %v2644 = vpack.c.bf16 %v2455, %v2405
        %v2645 = vpack.c.bf16 %v2456, %v2406
        %v2647 = vsel %vm1353, %v2642, 0
        %2649 = vmatprep.subr.bf16.mxu0 0
        %2650 = vmatpush1.bf16.msra.mxu0 %v2644
        %2651 = vmatprep.subr.bf16.mxu0 0
        %2652 = vmatpush1.bf16.msra.mxu0 0
        %2653 = vmatprep.subr.bf16.mxu0 0
        %2654 = vmatpush1.bf16.msra.mxu0 0
        %2655 = vmatprep.subr.bf16.mxu0 0
        %2656 = vmatpush1.bf16.msra.mxu0 0
        %2657 = vmatprep.subr.bf16.mxu0 0
        %2658 = vmatpush1.bf16.msra.mxu0 0
        %2659 = vmatprep.subr.bf16.mxu0 0
        %2660 = vmatpush1.bf16.msra.mxu0 0
        %2661 = vmatprep.subr.bf16.mxu0 0
        %2662 = vmatpush1.bf16.msra.mxu0 0
        %2663 = vmatprep.subr.bf16.mxu0 0
        %2664 = vmatpush1.bf16.msra.mxu0 0
        %2665 = vmatprep.subr.bf16.mxu0 0
        %2666 = vmatpush1.bf16.msra.mxu0 0
        %2667 = vmatprep.subr.bf16.mxu0 0
        %2668 = vmatpush1.bf16.msra.mxu0 0
        %2669 = vmatprep.subr.bf16.mxu0 0
        %2670 = vmatpush1.bf16.msra.mxu0 0
        %2671 = vmatprep.subr.bf16.mxu0 0
        %2672 = vmatpush1.bf16.msra.mxu0 0
        %2673 = vmatprep.subr.bf16.mxu0 0
        %2674 = vmatpush1.bf16.msra.mxu0 0
        %2675 = vmatprep.subr.bf16.mxu0 0
        %2676 = vmatpush1.bf16.msra.mxu0 0
        %2677 = vmatprep.subr.bf16.mxu0 0
        %2678 = vmatpush1.bf16.msra.mxu0 0
        %2679 = vmatprep.subr.bf16.mxu0 0
        %2680 = vmatpush1.bf16.msra.mxu0 0
        %2681 = vmatprep.mubr.bf16.mxu0 0
        %2682 = vmatmul.mubr.bf16.gmra.mrb[0].mxu0 %v2647
        %v2683 = vpop.f32.mrb[0].mxu0
        %v2684 = vadd.f32 0.0, %v2683
        %v2685 = vpop.f32.mrb[0].mxu0
        %v2686 = vpop.f32.mrb[0].mxu0
        %v2687 = vadd.f32 0.0, %v2686
        %v2688 = vpop.f32.mrb[0].mxu0
        %2689 = vdwg.mxu0
        %v2691 = vsel %vm1353, %v2643, 0
        %2693 = vmatprep.subr.bf16.mxu0 0
        %2694 = vmatpush1.bf16.msra.mxu0 %v2645
        %2695 = vmatprep.subr.bf16.mxu0 0
        %2696 = vmatpush1.bf16.msra.mxu0 0
        %2697 = vmatprep.subr.bf16.mxu0 0
        %2698 = vmatpush1.bf16.msra.mxu0 0
        %2699 = vmatprep.subr.bf16.mxu0 0
        %2700 = vmatpush1.bf16.msra.mxu0 0
        %2701 = vmatprep.subr.bf16.mxu0 0
        %2702 = vmatpush1.bf16.msra.mxu0 0
        %2703 = vmatprep.subr.bf16.mxu0 0
        %2704 = vmatpush1.bf16.msra.mxu0 0
        %2705 = vmatprep.subr.bf16.mxu0 0
        %2706 = vmatpush1.bf16.msra.mxu0 0
        %2707 = vmatprep.subr.bf16.mxu0 0
        %2708 = vmatpush1.bf16.msra.mxu0 0
        %2709 = vmatprep.subr.bf16.mxu0 0
        %2710 = vmatpush1.bf16.msra.mxu0 0
        %2711 = vmatprep.subr.bf16.mxu0 0
        %2712 = vmatpush1.bf16.msra.mxu0 0
        %2713 = vmatprep.subr.bf16.mxu0 0
        %2714 = vmatpush1.bf16.msra.mxu0 0
        %2715 = vmatprep.subr.bf16.mxu0 0
        %2716 = vmatpush1.bf16.msra.mxu0 0
        %2717 = vmatprep.subr.bf16.mxu0 0
        %2718 = vmatpush1.bf16.msra.mxu0 0
        %2719 = vmatprep.subr.bf16.mxu0 0
        %2720 = vmatpush1.bf16.msra.mxu0 0
        %2721 = vmatprep.subr.bf16.mxu0 0
        %2722 = vmatpush1.bf16.msra.mxu0 0
        %2723 = vmatprep.subr.bf16.mxu0 0
        %2724 = vmatpush1.bf16.msra.mxu0 0
        %2725 = vmatprep.mubr.bf16.mxu0 0
        %2726 = vmatmul.mubr.bf16.gmra.mrb[0].mxu0 %v2691
        %v2727 = vpop.f32.mrb[0].mxu0
        %v2728 = vadd.f32 0.0, %v2727
        %v2729 = vpop.f32.mrb[0].mxu0
        %v2730 = vpop.f32.mrb[0].mxu0
        %v2731 = vadd.f32 0.0, %v2730
        %v2732 = vpop.f32.mrb[0].mxu0
        %2733 = vdwg.mxu0
        %v2734 = vcombine.low %v2684, %v2728
        %v2735 = vcombine.high %v2684, %v2728
        %v2737 = vunpack.c.l.s4 1983009808
        %v2738 = vunpack.c.0.s8 %v2737
        %v2739 = vlaneseq
        %v2740 = vshrl.u32 %v2739, 7
        %v2741 = vsub.s32 %v2738, %v2740
        %v2742 = vrot.slane %v2734, %v2741
        %v2744 = vunpack.c.l.s4 1983009808
        %v2745 = vunpack.c.0.s8 %v2744
        %v2746 = vlaneseq
        %v2747 = vshrl.u32 %v2746, 7
        %v2748 = vsub.s32 %v2745, %v2747
        %v2749 = vrot.slane %v2735, %v2748
        %v2750 = vcombine.low %v2687, %v2731
        %v2751 = vcombine.high %v2687, %v2731
        %v2753 = vunpack.c.l.s4 1983009808
        %v2754 = vunpack.c.0.s8 %v2753
        %v2755 = vlaneseq
        %v2756 = vshrl.u32 %v2755, 7
        %v2757 = vsub.s32 %v2754, %v2756
        %v2758 = vrot.slane %v2750, %v2757
        %v2760 = vunpack.c.l.s4 1983009808
        %v2761 = vunpack.c.0.s8 %v2760
        %v2762 = vlaneseq
        %v2763 = vshrl.u32 %v2762, 7
        %v2764 = vsub.s32 %v2761, %v2763
        %v2765 = vrot.slane %v2751, %v2764
        %v2766 = vcombine.low %v2742, %v2758
        %v2767 = vcombine.high %v2742, %v2758
        %v2769 = vunpack.c.l.s4 1934713408
        %v2770 = vunpack.c.0.s8 %v2769
        %v2771 = vlaneseq
        %v2772 = vshrl.u32 %v2771, 7
        %v2773 = vsub.s32 %v2770, %v2772
        %v2774 = vrot.slane %v2766, %v2773
        %v2776 = vunpack.c.l.s4 1934713408
        %v2777 = vunpack.c.0.s8 %v2776
        %v2778 = vlaneseq
        %v2779 = vshrl.u32 %v2778, 7
        %v2780 = vsub.s32 %v2777, %v2779
        %v2781 = vrot.slane %v2767, %v2780
        %v2782 = vcombine.low %v2749, %v2765
        %v2783 = vcombine.high %v2749, %v2765
        %v2785 = vunpack.c.l.s4 1934713408
        %v2786 = vunpack.c.0.s8 %v2785
        %v2787 = vlaneseq
        %v2788 = vshrl.u32 %v2787, 7
        %v2789 = vsub.s32 %v2786, %v2788
        %v2790 = vrot.slane %v2782, %v2789
        %v2792 = vunpack.c.l.s4 1934713408
        %v2793 = vunpack.c.0.s8 %v2792
        %v2794 = vlaneseq
        %v2795 = vshrl.u32 %v2794, 7
        %v2796 = vsub.s32 %v2793, %v2795
        %v2797 = vrot.slane %v2783, %v2796
        %v2798 = vcombine.high %v2774, 0.0
        %v2799 = vcombine.high %v2781, 0.0
        %v2800 = vcombine.high %v2790, 0.0
        %v2801 = vcombine.high %v2797, 0.0
        %v2802 = vcombine.low %v2774, %v2781
        %v2804 = vunpack.c.l.s4 1983009808
        %v2805 = vunpack.c.0.s8 %v2804
        %v2806 = vlaneseq
        %v2807 = vshrl.u32 %v2806, 7
        %v2808 = vsub.s32 %v2805, %v2807
        %v2809 = vrot.slane %v2802, %v2808
        %v2810 = vcombine.low %v2798, %v2799
        %v2812 = vunpack.c.l.s4 1983009808
        %v2813 = vunpack.c.0.s8 %v2812
        %v2814 = vlaneseq
        %v2815 = vshrl.u32 %v2814, 7
        %v2816 = vsub.s32 %v2813, %v2815
        %v2817 = vrot.slane %v2810, %v2816
        %v2818 = vcombine.low %v2790, %v2797
        %v2820 = vunpack.c.l.s4 1983009808
        %v2821 = vunpack.c.0.s8 %v2820
        %v2822 = vlaneseq
        %v2823 = vshrl.u32 %v2822, 7
        %v2824 = vsub.s32 %v2821, %v2823
        %v2825 = vrot.slane %v2818, %v2824
        %v2826 = vcombine.low %v2800, %v2801
        %v2828 = vunpack.c.l.s4 1983009808
        %v2829 = vunpack.c.0.s8 %v2828
        %v2830 = vlaneseq
        %v2831 = vshrl.u32 %v2830, 7
        %v2832 = vsub.s32 %v2829, %v2831
        %v2833 = vrot.slane %v2826, %v2832
        %v2834 = vcombine.low %v2809, %v2817
        %v2835 = vcombine.high %v2809, %v2817
        %v2837 = vunpack.c.l.s4 1934713408
        %v2838 = vunpack.c.0.s8 %v2837
        %v2839 = vlaneseq
        %v2840 = vshrl.u32 %v2839, 7
        %v2841 = vsub.s32 %v2838, %v2840
        %v2842 = vrot.slane %v2834, %v2841
        %v2844 = vunpack.c.l.s4 1934713408
        %v2845 = vunpack.c.0.s8 %v2844
        %v2846 = vlaneseq
        %v2847 = vshrl.u32 %v2846, 7
        %v2848 = vsub.s32 %v2845, %v2847
        %v2849 = vrot.slane %v2835, %v2848
        %v2850 = vcombine.low %v2825, %v2833
        %v2851 = vcombine.high %v2825, %v2833
        %v2853 = vunpack.c.l.s4 1934713408
        %v2854 = vunpack.c.0.s8 %v2853
        %v2855 = vlaneseq
        %v2856 = vshrl.u32 %v2855, 7
        %v2857 = vsub.s32 %v2854, %v2856
        %v2858 = vrot.slane %v2850, %v2857
        %v2860 = vunpack.c.l.s4 1934713408
        %v2861 = vunpack.c.0.s8 %v2860
        %v2862 = vlaneseq
        %v2863 = vshrl.u32 %v2862, 7
        %v2864 = vsub.s32 %v2861, %v2863
        %v2865 = vrot.slane %v2851, %v2864
        %v2866 = vcombine.low %v2842, %v2858
        %v2867 = vcombine.high %v2842, %v2858
        %v2868 = vcombine.low %v2849, %v2865
        %v2869 = vcombine.high %v2849, %v2865
        %2871 = vrot.lane.b32.xlu0 %v2867, 32
        %v2872 = vpop.permute.xlu0 %2871
        %2875 = vrot.lane.b32.xlu0 %v2868, 64
        %v2876 = vpop.permute.xlu0 %2875
        %2879 = vrot.lane.b32.xlu0 %v2869, 96
        %v2880 = vpop.permute.xlu0 %2879
        %v2882 = vsel %vm2461, %v2866, %v2872
        %vm2883 = vcmask 523264
        %v2884 = vsel %vm2883, %v2882, %v2876
        %vm2885 = vcmask 785408
        %v2886 = vsel %vm2885, %v2884, %v2880
        %v2887 = vpack.c.bf16 %v2886, %v2886
        %v2888 = vld [vmem:[#allocation10] sm:$0xf]
        %v2889 = vld [vmem:[#allocation10 + $0x4] sm:$0xf]
        %v2890 = vld [vmem:[#allocation10 + $0x8] sm:$0xf]
        %v2891 = vld [vmem:[#allocation10 + $0xc] sm:$0xf]
        %v2892 = vld [vmem:[#allocation10 + $0x10] sm:$0xf]
        %v2893 = vld [vmem:[#allocation10 + $0x14] sm:$0xf]
        %v2894 = vld [vmem:[#allocation10 + $0x18] sm:$0xf]
        %v2895 = vld [vmem:[#allocation10 + $0x1c] sm:$0xf]
        %v2896 = vld [vmem:[#allocation10 + $0x20] sm:$0xf]
        %v2897 = vld [vmem:[#allocation10 + $0x24] sm:$0xf]
        %v2898 = vld [vmem:[#allocation10 + $0x28] sm:$0xf]
        %v2899 = vld [vmem:[#allocation10 + $0x2c] sm:$0xf]
        %v2900 = vld [vmem:[#allocation10 + $0x30] sm:$0xf]
        %v2901 = vld [vmem:[#allocation10 + $0x34] sm:$0xf]
        %v2902 = vld [vmem:[#allocation10 + $0x38] sm:$0xf]
        %v2903 = vld [vmem:[#allocation10 + $0x3c] sm:$0xf]
        %v2920 = vunpack.c.l.b16 %v2888
        %v2921 = vunpack.c.l.b16 %v2889
        %v2922 = vunpack.c.l.b16 %v2890
        %v2923 = vunpack.c.l.b16 %v2891
        %v2924 = vunpack.c.l.b16 %v2892
        %v2925 = vunpack.c.l.b16 %v2893
        %v2926 = vunpack.c.l.b16 %v2894
        %v2927 = vunpack.c.l.b16 %v2895
        %v2928 = vunpack.c.l.b16 %v2896
        %v2929 = vunpack.c.l.b16 %v2897
        %v2930 = vunpack.c.l.b16 %v2898
        %v2931 = vunpack.c.l.b16 %v2899
        %v2932 = vunpack.c.l.b16 %v2900
        %v2933 = vunpack.c.l.b16 %v2901
        %v2934 = vunpack.c.l.b16 %v2902
        %v2935 = vunpack.c.l.b16 %v2903
        %v2936 = vpack.c.b16 %v2921, %v2920
        %v2937 = vpack.c.b16 %v2923, %v2922
        %v2938 = vpack.c.b16 %v2925, %v2924
        %v2939 = vpack.c.b16 %v2927, %v2926
        %v2940 = vpack.c.b16 %v2929, %v2928
        %v2941 = vpack.c.b16 %v2931, %v2930
        %v2942 = vpack.c.b16 %v2933, %v2932
        %v2943 = vpack.c.b16 %v2935, %v2934
        %2952 = vmatprep.subr.bf16.mxu0 0
        %2953 = vmatpush1.bf16.msra.mxu0 %v2936
        %2954 = vmatprep.subr.bf16.mxu0 0
        %2955 = vmatpush1.bf16.msra.mxu0 %v2937
        %2956 = vmatprep.subr.bf16.mxu0 0
        %2957 = vmatpush1.bf16.msra.mxu0 %v2938
        %2958 = vmatprep.subr.bf16.mxu0 0
        %2959 = vmatpush1.bf16.msra.mxu0 %v2939
        %2960 = vmatprep.subr.bf16.mxu0 0
        %2961 = vmatpush1.bf16.msra.mxu0 %v2940
        %2962 = vmatprep.subr.bf16.mxu0 0
        %2963 = vmatpush1.bf16.msra.mxu0 %v2941
        %2964 = vmatprep.subr.bf16.mxu0 0
        %2965 = vmatpush1.bf16.msra.mxu0 %v2942
        %2966 = vmatprep.subr.bf16.mxu0 0
        %2967 = vmatpush1.bf16.msra.mxu0 %v2943
        %2968 = vmatprep.subr.bf16.mxu0 0
        %2969 = vmatpush1.bf16.msra.mxu0 0
        %2970 = vmatprep.subr.bf16.mxu0 0
        %2971 = vmatpush1.bf16.msra.mxu0 0
        %2972 = vmatprep.subr.bf16.mxu0 0
        %2973 = vmatpush1.bf16.msra.mxu0 0
        %2974 = vmatprep.subr.bf16.mxu0 0
        %2975 = vmatpush1.bf16.msra.mxu0 0
        %2976 = vmatprep.subr.bf16.mxu0 0
        %2977 = vmatpush1.bf16.msra.mxu0 0
        %2978 = vmatprep.subr.bf16.mxu0 0
        %2979 = vmatpush1.bf16.msra.mxu0 0
        %2980 = vmatprep.subr.bf16.mxu0 0
        %2981 = vmatpush1.bf16.msra.mxu0 0
        %2982 = vmatprep.subr.bf16.mxu0 0
        %2983 = vmatpush1.bf16.msra.mxu0 0
        %2984 = vmatprep.mubr.bf16.mxu0 0
        %2985 = vmatmul.mubr.bf16.gmra.mrb[0].mxu0 %v2887
        %v2986 = vpop.f32.mrb[0].mxu0
        %v2987 = vadd.f32 %v562, %v2986
        %v2988 = vpop.f32.mrb[0].mxu0
        %v2989 = vpop.f32.mrb[0].mxu0
        %v2990 = vpop.f32.mrb[0].mxu0
        %2991 = vdwg.mxu0
        %2992 = vst [vmem:[%s531] sm:$0xff] %v2987
        %v2993 = vld [vmem:[%s9] sm:$0x1]
        %v2994 = vmul.f32 %v2987, %v2987
        %2995 = vadd.xlane.f32.xlu0 %v2994
        %v2996 = vpop.xlane.xlu0 %2995
        %v2997 = vmul.f32 %v2996, %v543
        %v2998 = vadd.f32 %v2997, 1e-06
        %v2999 = vrsqrt.pop %v2998
        %v3000 = vmul.f32 %v2987, %v2999
        %v3002 = vlaneseq
        %v3003 = vshrl.u32 %v3002, 7
        %v3004 = vsub.s32 0, %v3003
        %v3005 = vrot.slane %v2993, %v3004
        %v3007 = vmul.f32 %v3000, %v3005
        %v3008 = vpack.c.bf16 %v3007, %v3007
        %v3009 = vld [vmem:[#allocation11] sm:$0xff]
        %v3010 = vld [vmem:[#allocation11 + $0x8] sm:$0xff]
        %v3011 = vld [vmem:[#allocation11 + $0x10] sm:$0xff]
        %v3012 = vld [vmem:[#allocation11 + $0x18] sm:$0xff]
        %v3013 = vld [vmem:[#allocation11 + $0x20] sm:$0xff]
        %v3014 = vld [vmem:[#allocation11 + $0x28] sm:$0xff]
        %v3015 = vld [vmem:[#allocation11 + $0x30] sm:$0xff]
        %v3016 = vld [vmem:[#allocation11 + $0x38] sm:$0xff]
        %v3017 = vld [vmem:[#allocation11 + $0x40] sm:$0xff]
        %v3018 = vld [vmem:[#allocation11 + $0x48] sm:$0xff]
        %v3019 = vld [vmem:[#allocation11 + $0x50] sm:$0xff]
        %v3020 = vld [vmem:[#allocation11 + $0x58] sm:$0xff]
        %v3021 = vld [vmem:[#allocation11 + $0x60] sm:$0xff]
        %v3022 = vld [vmem:[#allocation11 + $0x68] sm:$0xff]
        %v3023 = vld [vmem:[#allocation11 + $0x70] sm:$0xff]
        %v3024 = vld [vmem:[#allocation11 + $0x78] sm:$0xff]
        %v3025 = vld [vmem:[#allocation11 + $0x80] sm:$0xff]
        %v3026 = vld [vmem:[#allocation11 + $0x88] sm:$0xff]
        %v3027 = vld [vmem:[#allocation11 + $0x90] sm:$0xff]
        %v3028 = vld [vmem:[#allocation11 + $0x98] sm:$0xff]
        %v3029 = vld [vmem:[#allocation11 + $0xa0] sm:$0xff]
        %v3030 = vld [vmem:[#allocation11 + $0xa8] sm:$0xff]
        %v3031 = vld [vmem:[#allocation11 + $0xb0] sm:$0xff]
        %v3032 = vld [vmem:[#allocation11 + $0xb8] sm:$0xff]
        %v3033 = vld [vmem:[#allocation11 + $0xc0] sm:$0xff]
        %v3034 = vld [vmem:[#allocation11 + $0xc8] sm:$0xff]
        %v3035 = vld [vmem:[#allocation11 + $0xd0] sm:$0xff]
        %v3036 = vld [vmem:[#allocation11 + $0xd8] sm:$0xff]
        %v3037 = vld [vmem:[#allocation11 + $0xe0] sm:$0xff]
        %v3038 = vld [vmem:[#allocation11 + $0xe8] sm:$0xff]
        %v3039 = vld [vmem:[#allocation11 + $0xf0] sm:$0xff]
        %v3040 = vld [vmem:[#allocation11 + $0xf8] sm:$0xff]
        %v3073 = vunpack.c.l.b16 %v3009
        %v3074 = vunpack.c.h.b16 %v3009
        %v3075 = vunpack.c.l.b16 %v3010
        %v3076 = vunpack.c.h.b16 %v3010
        %v3077 = vunpack.c.l.b16 %v3011
        %v3078 = vunpack.c.h.b16 %v3011
        %v3079 = vunpack.c.l.b16 %v3012
        %v3080 = vunpack.c.h.b16 %v3012
        %v3081 = vunpack.c.l.b16 %v3013
        %v3082 = vunpack.c.h.b16 %v3013
        %v3083 = vunpack.c.l.b16 %v3014
        %v3084 = vunpack.c.h.b16 %v3014
        %v3085 = vunpack.c.l.b16 %v3015
        %v3086 = vunpack.c.h.b16 %v3015
        %v3087 = vunpack.c.l.b16 %v3016
        %v3088 = vunpack.c.h.b16 %v3016
        %v3089 = vunpack.c.l.b16 %v3017
        %v3090 = vunpack.c.h.b16 %v3017
        %v3091 = vunpack.c.l.b16 %v3018
        %v3092 = vunpack.c.h.b16 %v3018
        %v3093 = vunpack.c.l.b16 %v3019
        %v3094 = vunpack.c.h.b16 %v3019
        %v3095 = vunpack.c.l.b16 %v3020
        %v3096 = vunpack.c.h.b16 %v3020
        %v3097 = vunpack.c.l.b16 %v3021
        %v3098 = vunpack.c.h.b16 %v3021
        %v3099 = vunpack.c.l.b16 %v3022
        %v3100 = vunpack.c.h.b16 %v3022
        %v3101 = vunpack.c.l.b16 %v3023
        %v3102 = vunpack.c.h.b16 %v3023
        %v3103 = vunpack.c.l.b16 %v3024
        %v3104 = vunpack.c.h.b16 %v3024
        %v3105 = vunpack.c.l.b16 %v3025
        %v3106 = vunpack.c.h.b16 %v3025
        %v3107 = vunpack.c.l.b16 %v3026
        %v3108 = vunpack.c.h.b16 %v3026
        %v3109 = vunpack.c.l.b16 %v3027
        %v3110 = vunpack.c.h.b16 %v3027
        %v3111 = vunpack.c.l.b16 %v3028
        %v3112 = vunpack.c.h.b16 %v3028
        %v3113 = vunpack.c.l.b16 %v3029
        %v3114 = vunpack.c.h.b16 %v3029
        %v3115 = vunpack.c.l.b16 %v3030
        %v3116 = vunpack.c.h.b16 %v3030
        %v3117 = vunpack.c.l.b16 %v3031
        %v3118 = vunpack.c.h.b16 %v3031
        %v3119 = vunpack.c.l.b16 %v3032
        %v3120 = vunpack.c.h.b16 %v3032
        %v3121 = vunpack.c.l.b16 %v3033
        %v3122 = vunpack.c.h.b16 %v3033
        %v3123 = vunpack.c.l.b16 %v3034
        %v3124 = vunpack.c.h.b16 %v3034
        %v3125 = vunpack.c.l.b16 %v3035
        %v3126 = vunpack.c.h.b16 %v3035
        %v3127 = vunpack.c.l.b16 %v3036
        %v3128 = vunpack.c.h.b16 %v3036
        %v3129 = vunpack.c.l.b16 %v3037
        %v3130 = vunpack.c.h.b16 %v3037
        %v3131 = vunpack.c.l.b16 %v3038
        %v3132 = vunpack.c.h.b16 %v3038
        %v3133 = vunpack.c.l.b16 %v3039
        %v3134 = vunpack.c.h.b16 %v3039
        %v3135 = vunpack.c.l.b16 %v3040
        %v3136 = vunpack.c.h.b16 %v3040
        %v3137 = vpack.c.b16 %v3077, %v3073
        %v3138 = vpack.c.b16 %v3078, %v3074
        %v3139 = vpack.c.b16 %v3079, %v3075
        %v3140 = vpack.c.b16 %v3080, %v3076
        %v3141 = vpack.c.b16 %v3085, %v3081
        %v3142 = vpack.c.b16 %v3086, %v3082
        %v3143 = vpack.c.b16 %v3087, %v3083
        %v3144 = vpack.c.b16 %v3088, %v3084
        %v3145 = vpack.c.b16 %v3093, %v3089
        %v3146 = vpack.c.b16 %v3094, %v3090
        %v3147 = vpack.c.b16 %v3095, %v3091
        %v3148 = vpack.c.b16 %v3096, %v3092
        %v3149 = vpack.c.b16 %v3101, %v3097
        %v3150 = vpack.c.b16 %v3102, %v3098
        %v3151 = vpack.c.b16 %v3103, %v3099
        %v3152 = vpack.c.b16 %v3104, %v3100
        %v3153 = vpack.c.b16 %v3109, %v3105
        %v3154 = vpack.c.b16 %v3110, %v3106
        %v3155 = vpack.c.b16 %v3111, %v3107
        %v3156 = vpack.c.b16 %v3112, %v3108
        %v3157 = vpack.c.b16 %v3117, %v3113
        %v3158 = vpack.c.b16 %v3118, %v3114
        %v3159 = vpack.c.b16 %v3119, %v3115
        %v3160 = vpack.c.b16 %v3120, %v3116
        %v3161 = vpack.c.b16 %v3125, %v3121
        %v3162 = vpack.c.b16 %v3126, %v3122
        %v3163 = vpack.c.b16 %v3127, %v3123
        %v3164 = vpack.c.b16 %v3128, %v3124
        %v3165 = vpack.c.b16 %v3133, %v3129
        %v3166 = vpack.c.b16 %v3134, %v3130
        %v3167 = vpack.c.b16 %v3135, %v3131
        %v3168 = vpack.c.b16 %v3136, %v3132
        %3201 = vmatprep.subr.bf16.mxu0 %v3138
        %3202 = vmatpush1.bf16.msra.mxu0 %v3137
        %3203 = vmatprep.subr.bf16.mxu0 %v3142
        %3204 = vmatpush1.bf16.msra.mxu0 %v3141
        %3205 = vmatprep.subr.bf16.mxu0 %v3146
        %3206 = vmatpush1.bf16.msra.mxu0 %v3145
        %3207 = vmatprep.subr.bf16.mxu0 %v3150
        %3208 = vmatpush1.bf16.msra.mxu0 %v3149
        %3209 = vmatprep.subr.bf16.mxu0 %v3154
        %3210 = vmatpush1.bf16.msra.mxu0 %v3153
        %3211 = vmatprep.subr.bf16.mxu0 %v3158
        %3212 = vmatpush1.bf16.msra.mxu0 %v3157
        %3213 = vmatprep.subr.bf16.mxu0 %v3162
        %3214 = vmatpush1.bf16.msra.mxu0 %v3161
        %3215 = vmatprep.subr.bf16.mxu0 %v3166
        %3216 = vmatpush1.bf16.msra.mxu0 %v3165
        %3217 = vmatprep.subr.bf16.mxu0 0
        %3218 = vmatpush1.bf16.msra.mxu0 0
        %3219 = vmatprep.subr.bf16.mxu0 0
        %3220 = vmatpush1.bf16.msra.mxu0 0
        %3221 = vmatprep.subr.bf16.mxu0 0
        %3222 = vmatpush1.bf16.msra.mxu0 0
        %3223 = vmatprep.subr.bf16.mxu0 0
        %3224 = vmatpush1.bf16.msra.mxu0 0
        %3225 = vmatprep.subr.bf16.mxu0 0
        %3226 = vmatpush1.bf16.msra.mxu0 0
        %3227 = vmatprep.subr.bf16.mxu0 0
        %3228 = vmatpush1.bf16.msra.mxu0 0
        %3229 = vmatprep.subr.bf16.mxu0 0
        %3230 = vmatpush1.bf16.msra.mxu0 0
        %3231 = vmatprep.subr.bf16.mxu0 0
        %3232 = vmatpush1.bf16.msra.mxu0 0
        %3233 = vmatprep.mubr.bf16.mxu0 0
        %3234 = vmatmul.mubr.bf16.gmra.mrb[0].mxu0 %v3008
        %v3235 = vpop.f32.mrb[0].mxu0
        %v3236 = vadd.f32 0.0, %v3235
        %v3237 = vpop.f32.mrb[0].mxu0
        %v3238 = vadd.f32 0.0, %v3237
        %v3239 = vpop.f32.mrb[0].mxu0
        %v3240 = vpop.f32.mrb[0].mxu0
        %3241 = vdwg.mxu0
        %3242 = vmatprep.subr.bf16.mxu0 %v3140
        %3243 = vmatpush1.bf16.msra.mxu0 %v3139
        %3244 = vmatprep.subr.bf16.mxu0 %v3144
        %3245 = vmatpush1.bf16.msra.mxu0 %v3143
        %3246 = vmatprep.subr.bf16.mxu0 %v3148
        %3247 = vmatpush1.bf16.msra.mxu0 %v3147
        %3248 = vmatprep.subr.bf16.mxu0 %v3152
        %3249 = vmatpush1.bf16.msra.mxu0 %v3151
        %3250 = vmatprep.subr.bf16.mxu0 %v3156
        %3251 = vmatpush1.bf16.msra.mxu0 %v3155
        %3252 = vmatprep.subr.bf16.mxu0 %v3160
        %3253 = vmatpush1.bf16.msra.mxu0 %v3159
        %3254 = vmatprep.subr.bf16.mxu0 %v3164
        %3255 = vmatpush1.bf16.msra.mxu0 %v3163
        %3256 = vmatprep.subr.bf16.mxu0 %v3168
        %3257 = vmatpush1.bf16.msra.mxu0 %v3167
        %3258 = vmatprep.subr.bf16.mxu0 0
        %3259 = vmatpush1.bf16.msra.mxu0 0
        %3260 = vmatprep.subr.bf16.mxu0 0
        %3261 = vmatpush1.bf16.msra.mxu0 0
        %3262 = vmatprep.subr.bf16.mxu0 0
        %3263 = vmatpush1.bf16.msra.mxu0 0
        %3264 = vmatprep.subr.bf16.mxu0 0
        %3265 = vmatpush1.bf16.msra.mxu0 0
        %3266 = vmatprep.subr.bf16.mxu0 0
        %3267 = vmatpush1.bf16.msra.mxu0 0
        %3268 = vmatprep.subr.bf16.mxu0 0
        %3269 = vmatpush1.bf16.msra.mxu0 0
        %3270 = vmatprep.subr.bf16.mxu0 0
        %3271 = vmatpush1.bf16.msra.mxu0 0
        %3272 = vmatprep.subr.bf16.mxu0 0
        %3273 = vmatpush1.bf16.msra.mxu0 0
        %3274 = vmatprep.mubr.bf16.mxu0 0
        %3275 = vmatmul.mubr.bf16.gmra.mrb[0].mxu0 %v3008
        %v3276 = vpop.f32.mrb[0].mxu0
        %v3277 = vadd.f32 0.0, %v3276
        %v3278 = vpop.f32.mrb[0].mxu0
        %v3279 = vadd.f32 0.0, %v3278
        %v3280 = vpop.f32.mrb[0].mxu0
        %v3281 = vpop.f32.mrb[0].mxu0
        %3282 = vdwg.mxu0
        %v3283 = vxor.u32 %v3236, 2147483648
        %v3284 = vxor.u32 %v3238, 2147483648
        %v3285 = vmul.f32 %v3283, 1.442695
        %v3286 = vpow.pop %v3285
        %v3287 = vmul.f32 %v3284, 1.442695
        %v3288 = vpow.pop %v3287
        %v3289 = vadd.f32 %v3286, 1.0
        %v3290 = vadd.f32 %v3288, 1.0
        %v3291 = vrcp.pop %v3289
        %v3292 = vmul.f32 1.0, %v3291
        %v3293 = vrcp.pop %v3290
        %v3294 = vmul.f32 1.0, %v3293
        %v3295 = vmul.f32 %v3236, %v3292
        %v3296 = vmul.f32 %v3238, %v3294
        %v3297 = vmul.f32 %v3295, %v3277
        %v3298 = vmul.f32 %v3296, %v3279
        %v3299 = vpack.c.bf16 %v3297, %v3297
        %v3300 = vpack.c.bf16 %v3298, %v3298
        %v3301 = vld [vmem:[#allocation13] sm:$0xf]
        %v3302 = vld [vmem:[#allocation13 + $0x4] sm:$0xf]
        %v3303 = vld [vmem:[#allocation13 + $0x8] sm:$0xf]
        %v3304 = vld [vmem:[#allocation13 + $0xc] sm:$0xf]
        %v3305 = vld [vmem:[#allocation13 + $0x10] sm:$0xf]
        %v3306 = vld [vmem:[#allocation13 + $0x14] sm:$0xf]
        %v3307 = vld [vmem:[#allocation13 + $0x18] sm:$0xf]
        %v3308 = vld [vmem:[#allocation13 + $0x1c] sm:$0xf]
        %v3309 = vld [vmem:[#allocation13 + $0x20] sm:$0xf]
        %v3310 = vld [vmem:[#allocation13 + $0x24] sm:$0xf]
        %v3311 = vld [vmem:[#allocation13 + $0x28] sm:$0xf]
        %v3312 = vld [vmem:[#allocation13 + $0x2c] sm:$0xf]
        %v3313 = vld [vmem:[#allocation13 + $0x30] sm:$0xf]
        %v3314 = vld [vmem:[#allocation13 + $0x34] sm:$0xf]
        %v3315 = vld [vmem:[#allocation13 + $0x38] sm:$0xf]
        %v3316 = vld [vmem:[#allocation13 + $0x3c] sm:$0xf]
        %v3317 = vld [vmem:[#allocation13 + $0x40] sm:$0xf]
        %v3318 = vld [vmem:[#allocation13 + $0x44] sm:$0xf]
        %v3319 = vld [vmem:[#allocation13 + $0x48] sm:$0xf]
        %v3320 = vld [vmem:[#allocation13 + $0x4c] sm:$0xf]
        %v3321 = vld [vmem:[#allocation13 + $0x50] sm:$0xf]
        %v3322 = vld [vmem:[#allocation13 + $0x54] sm:$0xf]
        %v3323 = vld [vmem:[#allocation13 + $0x58] sm:$0xf]
        %v3324 = vld [vmem:[#allocation13 + $0x5c] sm:$0xf]
        %v3325 = vld [vmem:[#allocation13 + $0x60] sm:$0xf]
        %v3326 = vld [vmem:[#allocation13 + $0x64] sm:$0xf]
        %v3327 = vld [vmem:[#allocation13 + $0x68] sm:$0xf]
        %v3328 = vld [vmem:[#allocation13 + $0x6c] sm:$0xf]
        %v3329 = vld [vmem:[#allocation13 + $0x70] sm:$0xf]
        %v3330 = vld [vmem:[#allocation13 + $0x74] sm:$0xf]
        %v3331 = vld [vmem:[#allocation13 + $0x78] sm:$0xf]
        %v3332 = vld [vmem:[#allocation13 + $0x7c] sm:$0xf]
        %v3365 = vunpack.c.l.b16 %v3301
        %v3366 = vunpack.c.l.b16 %v3302
        %v3367 = vunpack.c.l.b16 %v3303
        %v3368 = vunpack.c.l.b16 %v3304
        %v3369 = vunpack.c.l.b16 %v3305
        %v3370 = vunpack.c.l.b16 %v3306
        %v3371 = vunpack.c.l.b16 %v3307
        %v3372 = vunpack.c.l.b16 %v3308
        %v3373 = vunpack.c.l.b16 %v3309
        %v3374 = vunpack.c.l.b16 %v3310
        %v3375 = vunpack.c.l.b16 %v3311
        %v3376 = vunpack.c.l.b16 %v3312
        %v3377 = vunpack.c.l.b16 %v3313
        %v3378 = vunpack.c.l.b16 %v3314
        %v3379 = vunpack.c.l.b16 %v3315
        %v3380 = vunpack.c.l.b16 %v3316
        %v3381 = vunpack.c.l.b16 %v3317
        %v3382 = vunpack.c.l.b16 %v3318
        %v3383 = vunpack.c.l.b16 %v3319
        %v3384 = vunpack.c.l.b16 %v3320
        %v3385 = vunpack.c.l.b16 %v3321
        %v3386 = vunpack.c.l.b16 %v3322
        %v3387 = vunpack.c.l.b16 %v3323
        %v3388 = vunpack.c.l.b16 %v3324
        %v3389 = vunpack.c.l.b16 %v3325
        %v3390 = vunpack.c.l.b16 %v3326
        %v3391 = vunpack.c.l.b16 %v3327
        %v3392 = vunpack.c.l.b16 %v3328
        %v3393 = vunpack.c.l.b16 %v3329
        %v3394 = vunpack.c.l.b16 %v3330
        %v3395 = vunpack.c.l.b16 %v3331
        %v3396 = vunpack.c.l.b16 %v3332
        %v3397 = vpack.c.b16 %v3366, %v3365
        %v3398 = vpack.c.b16 %v3368, %v3367
        %v3399 = vpack.c.b16 %v3370, %v3369
        %v3400 = vpack.c.b16 %v3372, %v3371
        %v3401 = vpack.c.b16 %v3374, %v3373
        %v3402 = vpack.c.b16 %v3376, %v3375
        %v3403 = vpack.c.b16 %v3378, %v3377
        %v3404 = vpack.c.b16 %v3380, %v3379
        %v3405 = vpack.c.b16 %v3382, %v3381
        %v3406 = vpack.c.b16 %v3384, %v3383
        %v3407 = vpack.c.b16 %v3386, %v3385
        %v3408 = vpack.c.b16 %v3388, %v3387
        %v3409 = vpack.c.b16 %v3390, %v3389
        %v3410 = vpack.c.b16 %v3392, %v3391
        %v3411 = vpack.c.b16 %v3394, %v3393
        %v3412 = vpack.c.b16 %v3396, %v3395
        %3429 = vmatprep.subr.bf16.mxu0 0
        %3430 = vmatpush1.bf16.msra.mxu0 %v3397
        %3431 = vmatprep.subr.bf16.mxu0 0
        %3432 = vmatpush1.bf16.msra.mxu0 %v3398
        %3433 = vmatprep.subr.bf16.mxu0 0
        %3434 = vmatpush1.bf16.msra.mxu0 %v3399
        %3435 = vmatprep.subr.bf16.mxu0 0
        %3436 = vmatpush1.bf16.msra.mxu0 %v3400
        %3437 = vmatprep.subr.bf16.mxu0 0
        %3438 = vmatpush1.bf16.msra.mxu0 %v3401
        %3439 = vmatprep.subr.bf16.mxu0 0
        %3440 = vmatpush1.bf16.msra.mxu0 %v3402
        %3441 = vmatprep.subr.bf16.mxu0 0
        %3442 = vmatpush1.bf16.msra.mxu0 %v3403
        %3443 = vmatprep.subr.bf16.mxu0 0
        %3444 = vmatpush1.bf16.msra.mxu0 %v3404
        %3445 = vmatprep.subr.bf16.mxu0 0
        %3446 = vmatpush1.bf16.msra.mxu0 %v3405
        %3447 = vmatprep.subr.bf16.mxu0 0
        %3448 = vmatpush1.bf16.msra.mxu0 %v3406
        %3449 = vmatprep.subr.bf16.mxu0 0
        %3450 = vmatpush1.bf16.msra.mxu0 %v3407
        %3451 = vmatprep.subr.bf16.mxu0 0
        %3452 = vmatpush1.bf16.msra.mxu0 %v3408
        %3453 = vmatprep.subr.bf16.mxu0 0
        %3454 = vmatpush1.bf16.msra.mxu0 %v3409
        %3455 = vmatprep.subr.bf16.mxu0 0
        %3456 = vmatpush1.bf16.msra.mxu0 %v3410
        %3457 = vmatprep.subr.bf16.mxu0 0
        %3458 = vmatpush1.bf16.msra.mxu0 %v3411
        %3459 = vmatprep.subr.bf16.mxu0 0
        %3460 = vmatpush1.bf16.msra.mxu0 %v3412
        %3461 = vmatprep.mubr.bf16.mxu0 %v3300
        %3462 = vmatmul.mubr.bf16.gmra.mrb[0].mxu0 %v3299
        %v3463 = vpop.f32.mrb[0].mxu0
        %v3464 = vadd.f32 0.0, %v3463
        %v3465 = vpop.f32.mrb[0].mxu0
        %v3466 = vpop.f32.mrb[0].mxu0
        %v3467 = vpop.f32.mrb[0].mxu0
        %3468 = vdwg.mxu0
        %3469 = vst [vmem:[%s524] sm:$0xff] %v3464
        %s3470 = sand.u32 %s295, 1
        %s3471 = scalar_lea.sflag [#allocation4], %s3470
        %s3472 = sand.u32 %s295, 1
        %s3473 = smul.addr %s3472, 8
        %s3474 = scalar_lea.vmem [#allocation14], %s3473
        %s3475 = sand.u32 %s321, 1
        %s3476 = scalar_lea.sflag [#allocation16], %s3475
        %s3477 = sand.u32 %s321, 1
        %s3478 = smul.addr %s3477, 8
        %s3479 = scalar_lea.vmem [#allocation15], %s3478
        // Predicated region
        $region97: #{tpu_custom_call.1} parent=67 // pred_check
          %p3480 = pneg %p305
        $region98: #{tpu_custom_call.1} parent=67 // pred_check_branch
          %3482 = sbr.rel (%p3480) target = $region100
        $region99: #{tpu_custom_call.1} parent=67 // pred_region
          %s3484 = ssub.s32 128, 128
          %3485 = vsyncadd %s3471, %s3484
          %s3486 = smul.addr %s35, 128
          %s3487 = scalar_lea.hbm %s12, %s3486
          %s3489 = sshll.u32 %s3474, 4
          %s3490 = int_to_ptr.vmem [resolvable:$true] %s3489
          %3492 = dma.vmem_to_hbm [thread:$0]  %s3490, 128, %s3487, %s3471
        $region100: #{tpu_custom_call.1} parent=67 // pred_fallthru
          _
        // Predicated region
        $region101: #{tpu_custom_call.1} parent=67 // pred_check
          %p3493 = pneg %p331
        $region102: #{tpu_custom_call.1} parent=67 // pred_check_branch
          %3495 = sbr.rel (%p3493) target = $region104
        $region103: #{tpu_custom_call.1} parent=67 // pred_region
          %s3497 = ssub.s32 128, 128
          %3498 = vsyncadd %s3476, %s3497
          %s3499 = smul.addr %s35, 128
          %s3500 = scalar_lea.hbm %s13, %s3499
          %s3502 = sshll.u32 %s3479, 4
          %s3503 = int_to_ptr.vmem [resolvable:$true] %s3502
          %3505 = dma.vmem_to_hbm [thread:$0]  %s3503, 128, %s3500, %s3476
        $region104: #{tpu_custom_call.1} parent=67 // pred_fallthru
          _
      $region68: #{tpu_custom_call.1} parent=5 // pred_fallthru
        _
      %p3506 = scmp.le.s32.totalorder 2, %s30
      // Predicated region
      $region105: #{tpu_custom_call.1} parent=5 // pred_check
        %p3507 = pneg %p3506
      $region106: #{tpu_custom_call.1} parent=5 // pred_check_branch
        %3509 = sbr.rel (%p3507) target = $region108
      $region107: #{tpu_custom_call.1} parent=5 // pred_region
        %s3510 = ssub.s32 %s30, 2
        // Predicated region
        $region109: #{tpu_custom_call.1} parent=107 // pred_check
          %p3511 = pneg %p311
        $region110: #{tpu_custom_call.1} parent=107 // pred_check_branch
          %3513 = sbr.rel (%p3511) target = $region112
        $region111: #{tpu_custom_call.1} parent=107 // pred_region
          %s3514 = sand.u32 %s296, 1
          %s3515 = scalar_lea.sflag [#allocation4], %s3514
          %s3516 = sand.u32 %s296, 1
          %s3517 = smul.addr %s3516, 8
          %s3518 = scalar_lea.vmem [#allocation14], %s3517
          %3519 = dma.done %s3515, 128
        $region112: #{tpu_custom_call.1} parent=107 // pred_fallthru
          _
        // Predicated region
        $region113: #{tpu_custom_call.1} parent=107 // pred_check
          %p3520 = pneg %p337
        $region114: #{tpu_custom_call.1} parent=107 // pred_check_branch
          %3522 = sbr.rel (%p3520) target = $region116
        $region115: #{tpu_custom_call.1} parent=107 // pred_region
          %s3523 = sand.u32 %s322, 1
          %s3524 = scalar_lea.sflag [#allocation16], %s3523
          %s3525 = sand.u32 %s322, 1
          %s3526 = smul.addr %s3525, 8
          %s3527 = scalar_lea.vmem [#allocation15], %s3526
          %3528 = dma.done %s3524, 128
        $region116: #{tpu_custom_call.1} parent=107 // pred_fallthru
          _
      $region108: #{tpu_custom_call.1} parent=5 // pred_fallthru
        _
    $region6: #{tpu_custom_call.1} parent=1 // loop_footer
      %s34 = sadd.s32 1, %s30
    $region7: #{tpu_custom_call.1} parent=1 // loop_footer_branch
      %29 = sbr.rel target = $region3
    $region8: #{tpu_custom_call.1} parent=1 // loop_exit
      _
    %3529 = vsyncpa [#allocation3], 1
    %s3530 = scalar_lea.sflag [#allocation3], 1
    %3531 = vsyncpa %s3530, 1
    %3532 = vsyncpa [#allocation6], 1
    %3533 = vsyncpa [#allocation9], 1
    %3534 = vsyncpa [#allocation12], 1
    %3535 = vsyncpa [#allocation4], 1
    %s3536 = scalar_lea.sflag [#allocation4], 1
    %3537 = vsyncpa %s3536, 1
    %3538 = vsyncpa [#allocation16], 1
    %s3539 = scalar_lea.sflag [#allocation16], 1
    %3540 = vsyncpa %s3539, 1

</llo_original>
